<compile_context>
chip_gen: v7x
topology: tpu7x:2x2x1
jax: 0.10.0
libtpu: 0.0.40
codegen_flags: <defaults>
</compile_context>

<pallas_src>
import math

import jax
import jax.numpy as jnp
from jax.experimental import pallas as pl
from jax.experimental.pallas import tpu as pltpu


def _erf_f32(x):
    # Abramowitz & Stegun 7.1.26 rational approximation, |err| <= 1.5e-7,
    # built only from exp/mul/add so it lowers cleanly on the VPU/EUP.
    # TODO(synk): switch to lax.erf if/when Mosaic guarantees an erf lowering.
    p = 0.3275911
    a1, a2, a3, a4, a5 = (0.254829592, -0.284496736, 1.421413741,
                          -1.453152027, 1.061405429)
    ax = jnp.abs(x)
    t = 1.0 / (1.0 + p * ax)
    poly = ((((a5 * t + a4) * t + a3) * t + a2) * t + a1) * t
    y = 1.0 - poly * jnp.exp(-(ax * ax))
    return jnp.where(x < 0.0, -y, y)


def _gelu_exact(x):
    # Matches PyTorch nn.GELU() (erf-based), computed in float32.
    return 0.5 * x * (1.0 + _erf_f32(x * 0.7071067811865476))


def _dwconv_gelu_kernel(xp_ref, w_ref, b_ref, o_ref):
    # xp_ref: (1, H+4, W+4, TC)  zero-padded input (one image, TC channels)
    # w_ref : (25, TC)           depthwise taps, row = kh*5 + kw
    # b_ref : (1, TC)            bias
    # o_ref : (1, H, W, TC)
    h = o_ref.shape[1]
    w = o_ref.shape[2]
    c = o_ref.shape[3]

    x = xp_ref[0].astype(jnp.float32)        # (H+4, W+4, TC)
    taps = w_ref[...].astype(jnp.float32)    # (25, TC)

    acc = jnp.zeros((h, w, c), jnp.float32)
    for kh in range(5):
        for kw in range(5):
            idx = kh * 5 + kw
            tap = taps[idx:idx + 1, :].reshape(1, 1, c)
            acc = acc + x[kh:kh + h, kw:kw + w, :] * tap
    acc = acc + b_ref[...].astype(jnp.float32).reshape(1, 1, c)

    o_ref[0] = _gelu_exact(acc).astype(o_ref.dtype)


def dwconv_gelu_pallas(x, x_size, weight, bias):
    """Depthwise 5x5 conv (stride 1, pad 2, groups=C) + exact GELU.

    Args:
      x:      (B, N, C) tokens with N == H * W.
      x_size: (H, W).
      weight: (C, 1, 5, 5) or (C, 5, 5) depthwise filters (PyTorch layout).
      bias:   (C,).
    Returns:
      (B, N, C) tokens.
    """
    B, N, C = x.shape
    H, W = int(x_size[0]), int(x_size[1])
    assert N == H * W, "x_size inconsistent with token count"

    w = jnp.asarray(weight)
    if w.ndim == 4:
        w = w[:, 0]                                        # (C, 5, 5)
    w_taps = jnp.transpose(w, (1, 2, 0)).reshape(25, C)    # (25, C)
    b2 = jnp.asarray(bias).reshape(1, C)

    x_img = x.reshape(B, H, W, C)
    xp = jnp.pad(x_img, ((0, 0), (2, 2), (2, 2), (0, 0)))  # spatial halo once
    Hp, Wp = H + 4, W + 4

    # Channels on lanes. Tile channels by 128 when divisible (lane-dense
    # 128-wide blocks); otherwise use full C (legal: block dim == array dim).
    tile_c = 128 if (C % 128 == 0) else C
    n_ct = C // tile_c

    out = pl.pallas_call(
        _dwconv_gelu_kernel,
        out_shape=jax.ShapeDtypeStruct((B, H, W, C), x.dtype),
        grid=(B, n_ct),
        in_specs=[
            pl.BlockSpec((1, Hp, Wp, tile_c), lambda b, c: (b, 0, 0, c)),
            pl.BlockSpec((25, tile_c), lambda b, c: (0, c)),
            pl.BlockSpec((1, tile_c), lambda b, c: (0, c)),
        ],
        out_specs=pl.BlockSpec((1, H, W, tile_c), lambda b, c: (b, 0, 0, c)),
        compiler_params=pltpu.CompilerParams(
            dimension_semantics=("parallel", "parallel"),
        ),
    )(xp, w_taps, b2)

    return out.reshape(B, N, C)


class DWConv:
    """JAX/Pallas port of the PyTorch `dwconv` module (depthwise 5x5 + GELU)."""

    def __init__(self, hidden_features, *, key=None, dtype=jnp.float32):
        if key is None:
            key = jax.random.PRNGKey(0)
        k_w, k_b = jax.random.split(key)
        fan_in = 25  # in_channels/groups * kh * kw for the depthwise conv
        bound = 1.0 / math.sqrt(fan_in)
        self.weight = jax.random.uniform(
            k_w, (hidden_features, 1, 5, 5), dtype, -bound, bound)
        self.bias = jax.random.uniform(
            k_b, (hidden_features,), dtype, -bound, bound)
        self.hidden_features = hidden_features

    def __call__(self, x, x_size):
        return dwconv_gelu_pallas(x, x_size, self.weight, self.bias)


if __name__ == "__main__":
    root = jax.random.PRNGKey(0)
    k_x, k_mod = jax.random.split(root)

    B, C, H, W = 2, 32, 16, 16   # batch=2, hidden_features=32, 16x16 spatial
    N = H * W
    x = jax.random.normal(k_x, (B, N, C), dtype=jnp.float32)

    module = DWConv(C, key=k_mod)
    out = jax.block_until_ready(module(x, (H, W)))
    assert out.shape == (B, N, C) and out.dtype == x.dtype

    # Pure-JAX reference mirroring the PyTorch forward.
    x_nhwc = x.reshape(B, H, W, C)
    w_hwio = jnp.transpose(module.weight[:, 0], (1, 2, 0))[:, :, None, :]  # (5,5,1,C)
    conv = jax.lax.conv_general_dilated(
        x_nhwc, w_hwio, window_strides=(1, 1), padding="SAME",
        dimension_numbers=("NHWC", "HWIO", "NHWC"),
        feature_group_count=C, precision=jax.lax.Precision.HIGHEST)
    ref = jax.nn.gelu(conv + module.bias.reshape(1, 1, 1, C), approximate=False)
    ref = ref.reshape(B, N, C)

    err = float(jnp.max(jnp.abs(out - ref)))
    assert jnp.allclose(out, ref, atol=1e-4, rtol=1e-4), f"max abs err {err}"

    print("KERNEL_OK")
</pallas_src>

<mosaic_0001>
module attributes {stable_mosaic.version = 11 : i64} {
  func.func @_dwconv_gelu_kernel(%arg0: i32, %arg1: i32, %arg2: memref<1x20x20x32xf32, #tpu.memory_space<vmem>>, %arg3: memref<25x32xf32, #tpu.memory_space<vmem>>, %arg4: memref<1x32xf32, #tpu.memory_space<vmem>>, %arg5: memref<1x16x16x32xf32, #tpu.memory_space<vmem>>) attributes {dimension_semantics = [#tpu.dimension_semantics<parallel>, #tpu.dimension_semantics<parallel>], iteration_bounds = array<i64: 2, 1>, scalar_prefetch = 0 : i64, scratch_operands = 0 : i64, tpu.core_type = #tpu.core_type<tc>, window_params = [{transform_indices = @transform_0, window_bounds = array<i64: 1, 20, 20, 32>}, {transform_indices = @transform_1, window_bounds = array<i64: 25, 32>}, {transform_indices = @transform_2, window_bounds = array<i64: 1, 32>}, {transform_indices = @transform_3, window_bounds = array<i64: 1, 16, 16, 32>}]} {
    %c0 = arith.constant 0 : index
    %c0_0 = arith.constant 0 : index
    %c0_1 = arith.constant 0 : index
    %c0_2 = arith.constant 0 : index
    %0 = vector.load %arg2[%c0, %c0_0, %c0_1, %c0_2] : memref<1x20x20x32xf32, #tpu.memory_space<vmem>>, vector<1x20x20x32xf32>
    %1 = vector.shape_cast %0 : vector<1x20x20x32xf32> to vector<20x20x32xf32>
    %c0_3 = arith.constant 0 : index
    %c0_4 = arith.constant 0 : index
    %2 = vector.load %arg3[%c0_3, %c0_4] : memref<25x32xf32, #tpu.memory_space<vmem>>, vector<25x32xf32>
    %cst = arith.constant 0.000000e+00 : f32
    %3 = vector.broadcast %cst : f32 to vector<16x16x32xf32>
    %4 = vector.extract_strided_slice %2 {offsets = [0, 0], sizes = [1, 32], strides = [1, 1]} : vector<25x32xf32> to vector<1x32xf32>
    %5 = vector.shape_cast %4 : vector<1x32xf32> to vector<1x1x32xf32>
    %6 = vector.extract_strided_slice %1 {offsets = [0, 0, 0], sizes = [16, 16, 32], strides = [1, 1, 1]} : vector<20x20x32xf32> to vector<16x16x32xf32>
    %7 = vector.broadcast %5 : vector<1x1x32xf32> to vector<16x16x32xf32>
    %8 = arith.mulf %6, %7 : vector<16x16x32xf32>
    %9 = arith.addf %3, %8 : vector<16x16x32xf32>
    %10 = vector.extract_strided_slice %2 {offsets = [1, 0], sizes = [1, 32], strides = [1, 1]} : vector<25x32xf32> to vector<1x32xf32>
    %11 = vector.shape_cast %10 : vector<1x32xf32> to vector<1x1x32xf32>
    %12 = vector.extract_strided_slice %1 {offsets = [0, 1, 0], sizes = [16, 16, 32], strides = [1, 1, 1]} : vector<20x20x32xf32> to vector<16x16x32xf32>
    %13 = vector.broadcast %11 : vector<1x1x32xf32> to vector<16x16x32xf32>
    %14 = arith.mulf %12, %13 : vector<16x16x32xf32>
    %15 = arith.addf %9, %14 : vector<16x16x32xf32>
    %16 = vector.extract_strided_slice %2 {offsets = [2, 0], sizes = [1, 32], strides = [1, 1]} : vector<25x32xf32> to vector<1x32xf32>
    %17 = vector.shape_cast %16 : vector<1x32xf32> to vector<1x1x32xf32>
    %18 = vector.extract_strided_slice %1 {offsets = [0, 2, 0], sizes = [16, 16, 32], strides = [1, 1, 1]} : vector<20x20x32xf32> to vector<16x16x32xf32>
    %19 = vector.broadcast %17 : vector<1x1x32xf32> to vector<16x16x32xf32>
    %20 = arith.mulf %18, %19 : vector<16x16x32xf32>
    %21 = arith.addf %15, %20 : vector<16x16x32xf32>
    %22 = vector.extract_strided_slice %2 {offsets = [3, 0], sizes = [1, 32], strides = [1, 1]} : vector<25x32xf32> to vector<1x32xf32>
    %23 = vector.shape_cast %22 : vector<1x32xf32> to vector<1x1x32xf32>
    %24 = vector.extract_strided_slice %1 {offsets = [0, 3, 0], sizes = [16, 16, 32], strides = [1, 1, 1]} : vector<20x20x32xf32> to vector<16x16x32xf32>
    %25 = vector.broadcast %23 : vector<1x1x32xf32> to vector<16x16x32xf32>
    %26 = arith.mulf %24, %25 : vector<16x16x32xf32>
    %27 = arith.addf %21, %26 : vector<16x16x32xf32>
    %28 = vector.extract_strided_slice %2 {offsets = [4, 0], sizes = [1, 32], strides = [1, 1]} : vector<25x32xf32> to vector<1x32xf32>
    %29 = vector.shape_cast %28 : vector<1x32xf32> to vector<1x1x32xf32>
    %30 = vector.extract_strided_slice %1 {offsets = [0, 4, 0], sizes = [16, 16, 32], strides = [1, 1, 1]} : vector<20x20x32xf32> to vector<16x16x32xf32>
    %31 = vector.broadcast %29 : vector<1x1x32xf32> to vector<16x16x32xf32>
    %32 = arith.mulf %30, %31 : vector<16x16x32xf32>
    %33 = arith.addf %27, %32 : vector<16x16x32xf32>
    %34 = vector.extract_strided_slice %2 {offsets = [5, 0], sizes = [1, 32], strides = [1, 1]} : vector<25x32xf32> to vector<1x32xf32>
    %35 = vector.shape_cast %34 : vector<1x32xf32> to vector<1x1x32xf32>
    %36 = vector.extract_strided_slice %1 {offsets = [1, 0, 0], sizes = [16, 16, 32], strides = [1, 1, 1]} : vector<20x20x32xf32> to vector<16x16x32xf32>
    %37 = vector.broadcast %35 : vector<1x1x32xf32> to vector<16x16x32xf32>
    %38 = arith.mulf %36, %37 : vector<16x16x32xf32>
    %39 = arith.addf %33, %38 : vector<16x16x32xf32>
    %40 = vector.extract_strided_slice %2 {offsets = [6, 0], sizes = [1, 32], strides = [1, 1]} : vector<25x32xf32> to vector<1x32xf32>
    %41 = vector.shape_cast %40 : vector<1x32xf32> to vector<1x1x32xf32>
    %42 = vector.extract_strided_slice %1 {offsets = [1, 1, 0], sizes = [16, 16, 32], strides = [1, 1, 1]} : vector<20x20x32xf32> to vector<16x16x32xf32>
    %43 = vector.broadcast %41 : vector<1x1x32xf32> to vector<16x16x32xf32>
    %44 = arith.mulf %42, %43 : vector<16x16x32xf32>
    %45 = arith.addf %39, %44 : vector<16x16x32xf32>
    %46 = vector.extract_strided_slice %2 {offsets = [7, 0], sizes = [1, 32], strides = [1, 1]} : vector<25x32xf32> to vector<1x32xf32>
    %47 = vector.shape_cast %46 : vector<1x32xf32> to vector<1x1x32xf32>
    %48 = vector.extract_strided_slice %1 {offsets = [1, 2, 0], sizes = [16, 16, 32], strides = [1, 1, 1]} : vector<20x20x32xf32> to vector<16x16x32xf32>
    %49 = vector.broadcast %47 : vector<1x1x32xf32> to vector<16x16x32xf32>
    %50 = arith.mulf %48, %49 : vector<16x16x32xf32>
    %51 = arith.addf %45, %50 : vector<16x16x32xf32>
    %52 = vector.extract_strided_slice %2 {offsets = [8, 0], sizes = [1, 32], strides = [1, 1]} : vector<25x32xf32> to vector<1x32xf32>
    %53 = vector.shape_cast %52 : vector<1x32xf32> to vector<1x1x32xf32>
    %54 = vector.extract_strided_slice %1 {offsets = [1, 3, 0], sizes = [16, 16, 32], strides = [1, 1, 1]} : vector<20x20x32xf32> to vector<16x16x32xf32>
    %55 = vector.broadcast %53 : vector<1x1x32xf32> to vector<16x16x32xf32>
    %56 = arith.mulf %54, %55 : vector<16x16x32xf32>
    %57 = arith.addf %51, %56 : vector<16x16x32xf32>
    %58 = vector.extract_strided_slice %2 {offsets = [9, 0], sizes = [1, 32], strides = [1, 1]} : vector<25x32xf32> to vector<1x32xf32>
    %59 = vector.shape_cast %58 : vector<1x32xf32> to vector<1x1x32xf32>
    %60 = vector.extract_strided_slice %1 {offsets = [1, 4, 0], sizes = [16, 16, 32], strides = [1, 1, 1]} : vector<20x20x32xf32> to vector<16x16x32xf32>
    %61 = vector.broadcast %59 : vector<1x1x32xf32> to vector<16x16x32xf32>
    %62 = arith.mulf %60, %61 : vector<16x16x32xf32>
    %63 = arith.addf %57, %62 : vector<16x16x32xf32>
    %64 = vector.extract_strided_slice %2 {offsets = [10, 0], sizes = [1, 32], strides = [1, 1]} : vector<25x32xf32> to vector<1x32xf32>
    %65 = vector.shape_cast %64 : vector<1x32xf32> to vector<1x1x32xf32>
    %66 = vector.extract_strided_slice %1 {offsets = [2, 0, 0], sizes = [16, 16, 32], strides = [1, 1, 1]} : vector<20x20x32xf32> to vector<16x16x32xf32>
    %67 = vector.broadcast %65 : vector<1x1x32xf32> to vector<16x16x32xf32>
    %68 = arith.mulf %66, %67 : vector<16x16x32xf32>
    %69 = arith.addf %63, %68 : vector<16x16x32xf32>
    %70 = vector.extract_strided_slice %2 {offsets = [11, 0], sizes = [1, 32], strides = [1, 1]} : vector<25x32xf32> to vector<1x32xf32>
    %71 = vector.shape_cast %70 : vector<1x32xf32> to vector<1x1x32xf32>
    %72 = vector.extract_strided_slice %1 {offsets = [2, 1, 0], sizes = [16, 16, 32], strides = [1, 1, 1]} : vector<20x20x32xf32> to vector<16x16x32xf32>
    %73 = vector.broadcast %71 : vector<1x1x32xf32> to vector<16x16x32xf32>
    %74 = arith.mulf %72, %73 : vector<16x16x32xf32>
    %75 = arith.addf %69, %74 : vector<16x16x32xf32>
    %76 = vector.extract_strided_slice %2 {offsets = [12, 0], sizes = [1, 32], strides = [1, 1]} : vector<25x32xf32> to vector<1x32xf32>
    %77 = vector.shape_cast %76 : vector<1x32xf32> to vector<1x1x32xf32>
    %78 = vector.extract_strided_slice %1 {offsets = [2, 2, 0], sizes = [16, 16, 32], strides = [1, 1, 1]} : vector<20x20x32xf32> to vector<16x16x32xf32>
    %79 = vector.broadcast %77 : vector<1x1x32xf32> to vector<16x16x32xf32>
    %80 = arith.mulf %78, %79 : vector<16x16x32xf32>
    %81 = arith.addf %75, %80 : vector<16x16x32xf32>
    %82 = vector.extract_strided_slice %2 {offsets = [13, 0], sizes = [1, 32], strides = [1, 1]} : vector<25x32xf32> to vector<1x32xf32>
    %83 = vector.shape_cast %82 : vector<1x32xf32> to vector<1x1x32xf32>
    %84 = vector.extract_strided_slice %1 {offsets = [2, 3, 0], sizes = [16, 16, 32], strides = [1, 1, 1]} : vector<20x20x32xf32> to vector<16x16x32xf32>
    %85 = vector.broadcast %83 : vector<1x1x32xf32> to vector<16x16x32xf32>
    %86 = arith.mulf %84, %85 : vector<16x16x32xf32>
    %87 = arith.addf %81, %86 : vector<16x16x32xf32>
    %88 = vector.extract_strided_slice %2 {offsets = [14, 0], sizes = [1, 32], strides = [1, 1]} : vector<25x32xf32> to vector<1x32xf32>
    %89 = vector.shape_cast %88 : vector<1x32xf32> to vector<1x1x32xf32>
    %90 = vector.extract_strided_slice %1 {offsets = [2, 4, 0], sizes = [16, 16, 32], strides = [1, 1, 1]} : vector<20x20x32xf32> to vector<16x16x32xf32>
    %91 = vector.broadcast %89 : vector<1x1x32xf32> to vector<16x16x32xf32>
    %92 = arith.mulf %90, %91 : vector<16x16x32xf32>
    %93 = arith.addf %87, %92 : vector<16x16x32xf32>
    %94 = vector.extract_strided_slice %2 {offsets = [15, 0], sizes = [1, 32], strides = [1, 1]} : vector<25x32xf32> to vector<1x32xf32>
    %95 = vector.shape_cast %94 : vector<1x32xf32> to vector<1x1x32xf32>
    %96 = vector.extract_strided_slice %1 {offsets = [3, 0, 0], sizes = [16, 16, 32], strides = [1, 1, 1]} : vector<20x20x32xf32> to vector<16x16x32xf32>
    %97 = vector.broadcast %95 : vector<1x1x32xf32> to vector<16x16x32xf32>
    %98 = arith.mulf %96, %97 : vector<16x16x32xf32>
    %99 = arith.addf %93, %98 : vector<16x16x32xf32>
    %100 = vector.extract_strided_slice %2 {offsets = [16, 0], sizes = [1, 32], strides = [1, 1]} : vector<25x32xf32> to vector<1x32xf32>
    %101 = vector.shape_cast %100 : vector<1x32xf32> to vector<1x1x32xf32>
    %102 = vector.extract_strided_slice %1 {offsets = [3, 1, 0], sizes = [16, 16, 32], strides = [1, 1, 1]} : vector<20x20x32xf32> to vector<16x16x32xf32>
    %103 = vector.broadcast %101 : vector<1x1x32xf32> to vector<16x16x32xf32>
    %104 = arith.mulf %102, %103 : vector<16x16x32xf32>
    %105 = arith.addf %99, %104 : vector<16x16x32xf32>
    %106 = vector.extract_strided_slice %2 {offsets = [17, 0], sizes = [1, 32], strides = [1, 1]} : vector<25x32xf32> to vector<1x32xf32>
    %107 = vector.shape_cast %106 : vector<1x32xf32> to vector<1x1x32xf32>
    %108 = vector.extract_strided_slice %1 {offsets = [3, 2, 0], sizes = [16, 16, 32], strides = [1, 1, 1]} : vector<20x20x32xf32> to vector<16x16x32xf32>
    %109 = vector.broadcast %107 : vector<1x1x32xf32> to vector<16x16x32xf32>
    %110 = arith.mulf %108, %109 : vector<16x16x32xf32>
    %111 = arith.addf %105, %110 : vector<16x16x32xf32>
    %112 = vector.extract_strided_slice %2 {offsets = [18, 0], sizes = [1, 32], strides = [1, 1]} : vector<25x32xf32> to vector<1x32xf32>
    %113 = vector.shape_cast %112 : vector<1x32xf32> to vector<1x1x32xf32>
    %114 = vector.extract_strided_slice %1 {offsets = [3, 3, 0], sizes = [16, 16, 32], strides = [1, 1, 1]} : vector<20x20x32xf32> to vector<16x16x32xf32>
    %115 = vector.broadcast %113 : vector<1x1x32xf32> to vector<16x16x32xf32>
    %116 = arith.mulf %114, %115 : vector<16x16x32xf32>
    %117 = arith.addf %111, %116 : vector<16x16x32xf32>
    %118 = vector.extract_strided_slice %2 {offsets = [19, 0], sizes = [1, 32], strides = [1, 1]} : vector<25x32xf32> to vector<1x32xf32>
    %119 = vector.shape_cast %118 : vector<1x32xf32> to vector<1x1x32xf32>
    %120 = vector.extract_strided_slice %1 {offsets = [3, 4, 0], sizes = [16, 16, 32], strides = [1, 1, 1]} : vector<20x20x32xf32> to vector<16x16x32xf32>
    %121 = vector.broadcast %119 : vector<1x1x32xf32> to vector<16x16x32xf32>
    %122 = arith.mulf %120, %121 : vector<16x16x32xf32>
    %123 = arith.addf %117, %122 : vector<16x16x32xf32>
    %124 = vector.extract_strided_slice %2 {offsets = [20, 0], sizes = [1, 32], strides = [1, 1]} : vector<25x32xf32> to vector<1x32xf32>
    %125 = vector.shape_cast %124 : vector<1x32xf32> to vector<1x1x32xf32>
    %126 = vector.extract_strided_slice %1 {offsets = [4, 0, 0], sizes = [16, 16, 32], strides = [1, 1, 1]} : vector<20x20x32xf32> to vector<16x16x32xf32>
    %127 = vector.broadcast %125 : vector<1x1x32xf32> to vector<16x16x32xf32>
    %128 = arith.mulf %126, %127 : vector<16x16x32xf32>
    %129 = arith.addf %123, %128 : vector<16x16x32xf32>
    %130 = vector.extract_strided_slice %2 {offsets = [21, 0], sizes = [1, 32], strides = [1, 1]} : vector<25x32xf32> to vector<1x32xf32>
    %131 = vector.shape_cast %130 : vector<1x32xf32> to vector<1x1x32xf32>
    %132 = vector.extract_strided_slice %1 {offsets = [4, 1, 0], sizes = [16, 16, 32], strides = [1, 1, 1]} : vector<20x20x32xf32> to vector<16x16x32xf32>
    %133 = vector.broadcast %131 : vector<1x1x32xf32> to vector<16x16x32xf32>
    %134 = arith.mulf %132, %133 : vector<16x16x32xf32>
    %135 = arith.addf %129, %134 : vector<16x16x32xf32>
    %136 = vector.extract_strided_slice %2 {offsets = [22, 0], sizes = [1, 32], strides = [1, 1]} : vector<25x32xf32> to vector<1x32xf32>
    %137 = vector.shape_cast %136 : vector<1x32xf32> to vector<1x1x32xf32>
    %138 = vector.extract_strided_slice %1 {offsets = [4, 2, 0], sizes = [16, 16, 32], strides = [1, 1, 1]} : vector<20x20x32xf32> to vector<16x16x32xf32>
    %139 = vector.broadcast %137 : vector<1x1x32xf32> to vector<16x16x32xf32>
    %140 = arith.mulf %138, %139 : vector<16x16x32xf32>
    %141 = arith.addf %135, %140 : vector<16x16x32xf32>
    %142 = vector.extract_strided_slice %2 {offsets = [23, 0], sizes = [1, 32], strides = [1, 1]} : vector<25x32xf32> to vector<1x32xf32>
    %143 = vector.shape_cast %142 : vector<1x32xf32> to vector<1x1x32xf32>
    %144 = vector.extract_strided_slice %1 {offsets = [4, 3, 0], sizes = [16, 16, 32], strides = [1, 1, 1]} : vector<20x20x32xf32> to vector<16x16x32xf32>
    %145 = vector.broadcast %143 : vector<1x1x32xf32> to vector<16x16x32xf32>
    %146 = arith.mulf %144, %145 : vector<16x16x32xf32>
    %147 = arith.addf %141, %146 : vector<16x16x32xf32>
    %148 = vector.extract_strided_slice %2 {offsets = [24, 0], sizes = [1, 32], strides = [1, 1]} : vector<25x32xf32> to vector<1x32xf32>
    %149 = vector.shape_cast %148 : vector<1x32xf32> to vector<1x1x32xf32>
    %150 = vector.extract_strided_slice %1 {offsets = [4, 4, 0], sizes = [16, 16, 32], strides = [1, 1, 1]} : vector<20x20x32xf32> to vector<16x16x32xf32>
    %151 = vector.broadcast %149 : vector<1x1x32xf32> to vector<16x16x32xf32>
    %152 = arith.mulf %150, %151 : vector<16x16x32xf32>
    %153 = arith.addf %147, %152 : vector<16x16x32xf32>
    %c0_5 = arith.constant 0 : index
    %c0_6 = arith.constant 0 : index
    %154 = vector.load %arg4[%c0_5, %c0_6] : memref<1x32xf32, #tpu.memory_space<vmem>>, vector<1x32xf32>
    %155 = vector.shape_cast %154 : vector<1x32xf32> to vector<1x1x32xf32>
    %156 = vector.broadcast %155 : vector<1x1x32xf32> to vector<16x16x32xf32>
    %157 = arith.addf %153, %156 : vector<16x16x32xf32>
    %cst_7 = arith.constant 5.000000e-01 : f32
    %158 = vector.broadcast %cst_7 : f32 to vector<16x16x32xf32>
    %159 = arith.mulf %158, %157 : vector<16x16x32xf32>
    %cst_8 = arith.constant 0.707106769 : f32
    %160 = vector.broadcast %cst_8 : f32 to vector<16x16x32xf32>
    %161 = arith.mulf %157, %160 : vector<16x16x32xf32>
    %162 = math.absf %161 : vector<16x16x32xf32>
    %cst_9 = arith.constant 0.327591091 : f32
    %163 = vector.broadcast %cst_9 : f32 to vector<16x16x32xf32>
    %164 = arith.mulf %163, %162 : vector<16x16x32xf32>
    %cst_10 = arith.constant 1.000000e+00 : f32
    %165 = vector.broadcast %cst_10 : f32 to vector<16x16x32xf32>
    %166 = arith.addf %165, %164 : vector<16x16x32xf32>
    %cst_11 = arith.constant 1.000000e+00 : f32
    %167 = vector.broadcast %cst_11 : f32 to vector<16x16x32xf32>
    %168 = arith.divf %167, %166 : vector<16x16x32xf32>
    %cst_12 = arith.constant 1.06140542 : f32
    %169 = vector.broadcast %cst_12 : f32 to vector<16x16x32xf32>
    %170 = arith.mulf %169, %168 : vector<16x16x32xf32>
    %cst_13 = arith.constant -1.45315206 : f32
    %171 = vector.broadcast %cst_13 : f32 to vector<16x16x32xf32>
    %172 = arith.addf %170, %171 : vector<16x16x32xf32>
    %173 = arith.mulf %172, %168 : vector<16x16x32xf32>
    %cst_14 = arith.constant 1.42141378 : f32
    %174 = vector.broadcast %cst_14 : f32 to vector<16x16x32xf32>
    %175 = arith.addf %173, %174 : vector<16x16x32xf32>
    %176 = arith.mulf %175, %168 : vector<16x16x32xf32>
    %cst_15 = arith.constant -0.284496725 : f32
    %177 = vector.broadcast %cst_15 : f32 to vector<16x16x32xf32>
    %178 = arith.addf %176, %177 : vector<16x16x32xf32>
    %179 = arith.mulf %178, %168 : vector<16x16x32xf32>
    %cst_16 = arith.constant 0.254829586 : f32
    %180 = vector.broadcast %cst_16 : f32 to vector<16x16x32xf32>
    %181 = arith.addf %179, %180 : vector<16x16x32xf32>
    %182 = arith.mulf %181, %168 : vector<16x16x32xf32>
    %183 = arith.mulf %162, %162 : vector<16x16x32xf32>
    %cst_17 = arith.constant 0.000000e+00 : f32
    %184 = vector.broadcast %cst_17 : f32 to vector<16x16x32xf32>
    %185 = arith.subf %184, %183 : vector<16x16x32xf32>
    %186 = math.exp %185 : vector<16x16x32xf32>
    %187 = arith.mulf %182, %186 : vector<16x16x32xf32>
    %cst_18 = arith.constant 1.000000e+00 : f32
    %188 = vector.broadcast %cst_18 : f32 to vector<16x16x32xf32>
    %189 = arith.subf %188, %187 : vector<16x16x32xf32>
    %cst_19 = arith.constant 0.000000e+00 : f32
    %190 = vector.broadcast %cst_19 : f32 to vector<16x16x32xf32>
    %191 = arith.cmpf olt, %161, %190 : vector<16x16x32xf32>
    %cst_20 = arith.constant 0.000000e+00 : f32
    %192 = vector.broadcast %cst_20 : f32 to vector<16x16x32xf32>
    %193 = arith.subf %192, %189 : vector<16x16x32xf32>
    %194 = arith.select %191, %193, %189 : vector<16x16x32xi1>, vector<16x16x32xf32>
    %cst_21 = arith.constant 1.000000e+00 : f32
    %195 = vector.broadcast %cst_21 : f32 to vector<16x16x32xf32>
    %196 = arith.addf %195, %194 : vector<16x16x32xf32>
    %197 = arith.mulf %159, %196 : vector<16x16x32xf32>
    %c0_22 = arith.constant 0 : index
    %c0_23 = arith.constant 0 : index
    %c0_24 = arith.constant 0 : index
    %c0_25 = arith.constant 0 : index
    %198 = vector.load %arg5[%c0_22, %c0_23, %c0_24, %c0_25] : memref<1x16x16x32xf32, #tpu.memory_space<vmem>>, vector<1x16x16x32xf32>
    %199 = vector.shape_cast %198 : vector<1x16x16x32xf32> to vector<16x16x32xf32>
    %200 = vector.shape_cast %197 : vector<16x16x32xf32> to vector<1x16x16x32xf32>
    tpu.vector_store %arg5[%c0_22, %c0_23, %c0_24, %c0_25], %200 {strides = array<i32>} : memref<1x16x16x32xf32, #tpu.memory_space<vmem>>, vector<1x16x16x32xf32>,
    return
  }
  func.func @transform_0(%arg0: i32, %arg1: i32) -> (i32, i32, i32, i32) {
    %c0_i32 = arith.constant 0 : i32
    %c0_i32_0 = arith.constant 0 : i32
    %c0_i32_1 = arith.constant 0 : i32
    return %arg0, %c0_i32, %c0_i32_0, %arg1 : i32, i32, i32, i32
  }
  func.func @transform_1(%arg0: i32, %arg1: i32) -> (i32, i32) {
    %c0_i32 = arith.constant 0 : i32
    %c0_i32_0 = arith.constant 0 : i32
    return %c0_i32, %arg1 : i32, i32
  }
  func.func @transform_2(%arg0: i32, %arg1: i32) -> (i32, i32) {
    %c0_i32 = arith.constant 0 : i32
    %c0_i32_0 = arith.constant 0 : i32
    return %c0_i32, %arg1 : i32, i32
  }
  func.func @transform_3(%arg0: i32, %arg1: i32) -> (i32, i32, i32, i32) {
    %c0_i32 = arith.constant 0 : i32
    %c0_i32_0 = arith.constant 0 : i32
    %c0_i32_1 = arith.constant 0 : i32
    return %arg0, %c0_i32, %c0_i32_0, %arg1 : i32, i32, i32, i32
  }
}

</mosaic_0001>

<llo_original>
// kernel: tpu_custom_call.1
$region0: #{tpu_custom_call.1}
  #allocation0 [shape = 'u32[]', space=smem, size = 0x4, offset = 0x4, fixed_abs, tag = 'smem constant byte address 0x4 - core index']
  #allocation1 [shape = 'u32[144,128]{1,0:T(1,128)}', space=vmem, size = 0x12000, scoped, tag = 'internal scratch']
  %s0 = inlined_call_operand.vmem [shape: f32[2,20,20,32], index: 0, kind: input, shape index: {}]
  %s1 = inlined_call_operand.vmem [shape: f32[25,32], index: 1, kind: input, shape index: {}]
  %s2 = inlined_call_operand.vmem [shape: f32[1,32], index: 2, kind: input, shape index: {}]
  %s3 = inlined_call_operand.hbm [shape: f32[2,16,16,32], index: 3, kind: output, shape index: {}]
  %s4 = sld [smem:[#allocation0]]
  $region45: #{tpu_custom_call.1} parent=0
    _
  %s6 = ssub.s32 1, %s4
  %s7 = scalar_select 0, %s6, %s4
  $region1: #{tpu_custom_call.1} parent=0
    #allocation2 [shape = 'u8[262144]{0}', space=vmem, size = 0x40000, scoped, tag = 'output window, operand 0']
    #allocation3 [shape = 's32[2]{0}', space=sflag, size = 0x8, scoped, tag = 'scoped memory for tpu_custom_call.1']
    %8 = vsyncpa [#allocation3], 0
    %s9 = scalar_lea.sflag [#allocation3], 1
    %10 = vsyncpa %s9, 0
    loop: start=0, step=1, limit=4
    $region2: #{tpu_custom_call.1} parent=1 // loop_pre_header
      _
    $region3: #{tpu_custom_call.1} parent=1 // loop_header
      %s12 = sphi 0, %s16
      %p13 = scmp.ge.s32.totalorder %s12, 4
      %s19 = sphi 0, %s31
      %s20 = sphi 0, %s27
      %s21 = sphi 0, %s19
      %s22 = sphi 0, %s20
      %s23 = sphi 0, %s21
      %s24 = sphi 0, %s22
      %s36 = sphi 0, %s38
      %s39 = sphi 0, %s36
      %s40 = sphi 0, %s39
      %s56 = sphi 0, %s40
      %s62 = sphi 0, %s64
      %s65 = sphi 0, %s62
      %s66 = sphi 0, %s65
      %s82 = sphi 0, %s66
      %s88 = sphi 0, %s90
      %s91 = sphi 0, %s88
      %s92 = sphi 0, %s91
      %s108 = sphi 0, %s92
      %s116 = sphi 0, %s118
      %s119 = sphi 0, %s116
      %s120 = sphi 0, %s119
      %s136 = sphi 0, %s120
    $region4: #{tpu_custom_call.1} parent=1 // loop_header_branch
      %15 = sbr.rel (%p13) target = $region8
    $region5: #{tpu_custom_call.1} parent=1 // loop_body
      %s17 = ssub.s32 %s12, 1
      %s18 = ssub.s32 %s12, 2
      %s25 = sadd.s32 1, %s20
      %p26 = scmp.ge.s32.totalorder %s25, 1
      %s27 = scalar_select %p26, 0, %s25
      %s28 = sadd.s32 1, %s19
      %s29 = scalar_select %p26, %s28, %s19
      %p30 = scmp.ge.s32.totalorder %s29, 2
      %s31 = scalar_select %p30, 0, %s29
      %s32 = ssub.s32 %s19, %s31
      %s33 = ssub.s32 %s20, %s27
      %s34 = sor.u32 %s32, %s33
      %p35 = scmp.eq.s32.totalorder %s34, 0
      %s37 = sadd.s32 %s36, 1
      %s38 = scalar_select %p35, %s36, %s37
      %p41 = pneg %p35
      %p42 = scmp.eq.s32.totalorder %s12, 1
      %p43 = por %p41, %p42
      %p44 = scmp.ne.s32.totalorder %s36, %s39
      %p45 = scmp.eq.s32.totalorder %s12, 0
      %p46 = por %p44, %p45
      %p47 = scmp.ne.s32.totalorder %s36, %s39
      %p48 = scmp.eq.s32.totalorder %s17, 1
      %p49 = por %p47, %p48
      %p50 = scmp.ne.s32.totalorder %s39, %s40
      %p51 = scmp.eq.s32.totalorder %s17, 0
      %p52 = por %p50, %p51
      %p53 = scmp.ne.s32.totalorder %s39, %s40
      %p54 = scmp.eq.s32.totalorder %s18, 1
      %p55 = por %p53, %p54
      %p57 = scmp.ne.s32.totalorder %s40, %s56
      %p58 = scmp.eq.s32.totalorder %s18, 0
      %p59 = por %p57, %p58
      %s60 = ssub.s32 %s20, %s27
      %p61 = scmp.eq.s32.totalorder %s60, 0
      %s63 = sadd.s32 %s62, 1
      %s64 = scalar_select %p61, %s62, %s63
      %p67 = pneg %p61
      %p68 = scmp.eq.s32.totalorder %s12, 1
      %p69 = por %p67, %p68
      %p70 = scmp.ne.s32.totalorder %s62, %s65
      %p71 = scmp.eq.s32.totalorder %s12, 0
      %p72 = por %p70, %p71
      %p73 = scmp.ne.s32.totalorder %s62, %s65
      %p74 = scmp.eq.s32.totalorder %s17, 1
      %p75 = por %p73, %p74
      %p76 = scmp.ne.s32.totalorder %s65, %s66
      %p77 = scmp.eq.s32.totalorder %s17, 0
      %p78 = por %p76, %p77
      %p79 = scmp.ne.s32.totalorder %s65, %s66
      %p80 = scmp.eq.s32.totalorder %s18, 1
      %p81 = por %p79, %p80
      %p83 = scmp.ne.s32.totalorder %s66, %s82
      %p84 = scmp.eq.s32.totalorder %s18, 0
      %p85 = por %p83, %p84
      %s86 = ssub.s32 %s20, %s27
      %p87 = scmp.eq.s32.totalorder %s86, 0
      %s89 = sadd.s32 %s88, 1
      %s90 = scalar_select %p87, %s88, %s89
      %p93 = pneg %p87
      %p94 = scmp.eq.s32.totalorder %s12, 1
      %p95 = por %p93, %p94
      %p96 = scmp.ne.s32.totalorder %s88, %s91
      %p97 = scmp.eq.s32.totalorder %s12, 0
      %p98 = por %p96, %p97
      %p99 = scmp.ne.s32.totalorder %s88, %s91
      %p100 = scmp.eq.s32.totalorder %s17, 1
      %p101 = por %p99, %p100
      %p102 = scmp.ne.s32.totalorder %s91, %s92
      %p103 = scmp.eq.s32.totalorder %s17, 0
      %p104 = por %p102, %p103
      %p105 = scmp.ne.s32.totalorder %s91, %s92
      %p106 = scmp.eq.s32.totalorder %s18, 1
      %p107 = por %p105, %p106
      %p109 = scmp.ne.s32.totalorder %s92, %s108
      %p110 = scmp.eq.s32.totalorder %s18, 0
      %p111 = por %p109, %p110
      %s112 = ssub.s32 %s19, %s31
      %s113 = ssub.s32 %s20, %s27
      %s114 = sor.u32 %s112, %s113
      %p115 = scmp.eq.s32.totalorder %s114, 0
      %s117 = sadd.s32 %s116, 1
      %s118 = scalar_select %p115, %s116, %s117
      %p121 = pneg %p115
      %p122 = scmp.eq.s32.totalorder %s12, 1
      %p123 = por %p121, %p122
      %p124 = scmp.ne.s32.totalorder %s116, %s119
      %p125 = scmp.eq.s32.totalorder %s12, 0
      %p126 = por %p124, %p125
      %p127 = scmp.ne.s32.totalorder %s116, %s119
      %p128 = scmp.eq.s32.totalorder %s17, 1
      %p129 = por %p127, %p128
      %p130 = scmp.ne.s32.totalorder %s119, %s120
      %p131 = scmp.eq.s32.totalorder %s17, 0
      %p132 = por %p130, %p131
      %p133 = scmp.ne.s32.totalorder %s119, %s120
      %p134 = scmp.eq.s32.totalorder %s18, 1
      %p135 = por %p133, %p134
      %p137 = scmp.ne.s32.totalorder %s120, %s136
      %p138 = scmp.eq.s32.totalorder %s18, 0
      %p139 = por %p137, %p138
      %p140 = scmp.le.s32.totalorder 1, %s12
      %p141 = scmp.lt.s32.totalorder %s12, 3
      %p142 = pnand %p140, %p141
      %p143 = pneg %p142
      // Predicated region
      $region9: #{tpu_custom_call.1} parent=5 // pred_check
        _
      $region10: #{tpu_custom_call.1} parent=5 // pred_check_branch
        %145 = sbr.rel (%p142) target = $region12
      $region11: #{tpu_custom_call.1} parent=5 // pred_region
        %s146 = ssub.s32 %s12, 1
        // Predicated region
        $region13: #{tpu_custom_call.1} parent=11 // pred_check
          %p147 = pneg %p78
        $region14: #{tpu_custom_call.1} parent=11 // pred_check_branch
          %149 = sbr.rel (%p147) target = $region16
        $region15: #{tpu_custom_call.1} parent=11 // pred_region
          %p150 = scmp.lt.s32.totalorder %s22, 0
          %s151 = scalar_select %p150, %s22, 0
          %s152 = smul.addr %s151, 8
          %s153 = scalar_lea.vmem %s1, %s152
        $region16: #{tpu_custom_call.1} parent=11 // pred_fallthru
          _
        // Predicated region
        $region17: #{tpu_custom_call.1} parent=11 // pred_check
          %p154 = pneg %p104
        $region18: #{tpu_custom_call.1} parent=11 // pred_check_branch
          %156 = sbr.rel (%p154) target = $region20
        $region19: #{tpu_custom_call.1} parent=11 // pred_region
          %p157 = scmp.lt.s32.totalorder %s22, 0
          %s158 = scalar_select %p157, %s22, 0
          %s159 = scalar_lea.vmem %s2, %s158
        $region20: #{tpu_custom_call.1} parent=11 // pred_fallthru
          _
      $region12: #{tpu_custom_call.1} parent=5 // pred_fallthru
        _
      %p160 = scmp.lt.s32.totalorder %s12, 2
      // Predicated region
      $region21: #{tpu_custom_call.1} parent=5 // pred_check
        %p161 = pneg %p160
      $region22: #{tpu_custom_call.1} parent=5 // pred_check_branch
        %163 = sbr.rel (%p161) target = $region24
      $region23: #{tpu_custom_call.1} parent=5 // pred_region
        // Predicated region
        $region25: #{tpu_custom_call.1} parent=23 // pred_check
          %p164 = pneg %p46
        $region26: #{tpu_custom_call.1} parent=23 // pred_check_branch
          %166 = sbr.rel (%p164) target = $region28
        $region27: #{tpu_custom_call.1} parent=23 // pred_region
          %p167 = scmp.lt.s32.totalorder %s19, 1
          %s168 = scalar_select %p167, %s19, 1
          %p169 = scmp.lt.s32.totalorder %s20, 0
          %s170 = scalar_select %p169, %s20, 0
          %s171 = smul.addr %s168, 60
          %s172 = sadd.s32 %s170, %s171
          %s173 = smul.addr %s172, 8
          %s174 = scalar_lea.vmem %s0, %s173
        $region28: #{tpu_custom_call.1} parent=23 // pred_fallthru
          _
      $region24: #{tpu_custom_call.1} parent=5 // pred_fallthru
        _
      %p175 = scmp.le.s32.totalorder 1, %s12
      %p176 = scmp.lt.s32.totalorder %s12, 3
      %p177 = pnand %p175, %p176
      %p178 = pneg %p177
      // Predicated region
      $region29: #{tpu_custom_call.1} parent=5 // pred_check
        _
      $region30: #{tpu_custom_call.1} parent=5 // pred_check_branch
        %180 = sbr.rel (%p177) target = $region32
      $region31: #{tpu_custom_call.1} parent=5 // pred_region
        %s181 = ssub.s32 %s12, 1
        %p182 = scmp.lt.s32.totalorder %s21, 1
        %s183 = scalar_select %p182, %s21, 1
        %p184 = scmp.lt.s32.totalorder %s22, 0
        %s185 = scalar_select %p184, %s22, 0
        %s186 = smul.addr %s183, 60
        %s187 = sadd.s32 %s185, %s186
        %s188 = smul.addr %s187, 8
        %s189 = scalar_lea.vmem %s0, %s188
        %p190 = pneg %p52
        %p191 = pneg %p49
        %p192 = scmp.lt.s32.totalorder %s22, 0
        %s193 = scalar_select %p192, %s22, 0
        %s194 = smul.addr %s193, 8
        %s195 = scalar_lea.vmem %s1, %s194
        %p196 = pneg %p78
        %p197 = pneg %p75
        %p198 = scmp.lt.s32.totalorder %s22, 0
        %s199 = scalar_select %p198, %s22, 0
        %s200 = scalar_lea.vmem %s2, %s199
        %p201 = pneg %p104
        %p202 = pneg %p101
        %p203 = pneg %p132
        %p204 = pneg %p129
        %s205 = sand.u32 %s119, 1
        %s206 = scalar_lea.sflag [#allocation3], %s205
        %s207 = sand.u32 %s119, 1
        %s208 = smul.addr %s207, 256
        %s209 = scalar_lea.vmem [#allocation2], %s208
        %p210 = scmp.lt.s32.totalorder %s21, 1
        %s211 = scalar_select %p210, %s21, 1
        %p212 = scmp.lt.s32.totalorder %s22, 0
        %s213 = scalar_select %p212, %s22, 0
        %s214 = smul.addr %s211, 60
        %s215 = sadd.s32 %s213, %s214
        %s216 = smul.addr %s215, 8
        %s217 = scalar_lea.vmem %s0, %s216
        %p218 = scmp.lt.s32.totalorder %s22, 0
        %s219 = scalar_select %p218, %s22, 0
        %s220 = smul.addr %s219, 8
        %s221 = scalar_lea.vmem %s1, %s220
        %p222 = scmp.lt.s32.totalorder %s22, 0
        %s223 = scalar_select %p222, %s22, 0
        %s224 = scalar_lea.vmem %s2, %s223
        %v225 = vld [vmem:[%s217] sm:$0xff]
        %v226 = vld [vmem:[%s217 + $0x8] sm:$0xff]
        %v227 = vld [vmem:[%s217 + $0x10] sm:$0xf]
        %v228 = vld [vmem:[%s217 + $0x18] sm:$0xff]
        %v229 = vld [vmem:[%s217 + $0x20] sm:$0xff]
        %v230 = vld [vmem:[%s217 + $0x28] sm:$0xf]
        %v231 = vld [vmem:[%s217 + $0x30] sm:$0xff]
        %v232 = vld [vmem:[%s217 + $0x38] sm:$0xff]
        %v233 = vld [vmem:[%s217 + $0x40] sm:$0xf]
        %v234 = vld [vmem:[%s217 + $0x48] sm:$0xff]
        %v235 = vld [vmem:[%s217 + $0x50] sm:$0xff]
        %v236 = vld [vmem:[%s217 + $0x58] sm:$0xf]
        %v237 = vld [vmem:[%s217 + $0x60] sm:$0xff]
        %v238 = vld [vmem:[%s217 + $0x68] sm:$0xff]
        %v239 = vld [vmem:[%s217 + $0x70] sm:$0xf]
        %v240 = vld [vmem:[%s217 + $0x78] sm:$0xff]
        %v241 = vld [vmem:[%s217 + $0x80] sm:$0xff]
        %v242 = vld [vmem:[%s217 + $0x88] sm:$0xf]
        %v243 = vld [vmem:[%s217 + $0x90] sm:$0xff]
        %v244 = vld [vmem:[%s217 + $0x98] sm:$0xff]
        %v245 = vld [vmem:[%s217 + $0xa0] sm:$0xf]
        %v246 = vld [vmem:[%s217 + $0xa8] sm:$0xff]
        %v247 = vld [vmem:[%s217 + $0xb0] sm:$0xff]
        %v248 = vld [vmem:[%s217 + $0xb8] sm:$0xf]
        %v249 = vld [vmem:[%s217 + $0xc0] sm:$0xff]
        %v250 = vld [vmem:[%s217 + $0xc8] sm:$0xff]
        %v251 = vld [vmem:[%s217 + $0xd0] sm:$0xf]
        %v252 = vld [vmem:[%s217 + $0xd8] sm:$0xff]
        %v253 = vld [vmem:[%s217 + $0xe0] sm:$0xff]
        %v254 = vld [vmem:[%s217 + $0xe8] sm:$0xf]
        %v255 = vld [vmem:[%s217 + $0xf0] sm:$0xff]
        %v256 = vld [vmem:[%s217 + $0xf8] sm:$0xff]
        %v257 = vld [vmem:[%s217 + $0x100] sm:$0xf]
        %v258 = vld [vmem:[%s217 + $0x108] sm:$0xff]
        %v259 = vld [vmem:[%s217 + $0x110] sm:$0xff]
        %v260 = vld [vmem:[%s217 + $0x118] sm:$0xf]
        %v261 = vld [vmem:[%s217 + $0x120] sm:$0xff]
        %v262 = vld [vmem:[%s217 + $0x128] sm:$0xff]
        %v263 = vld [vmem:[%s217 + $0x130] sm:$0xf]
        %v264 = vld [vmem:[%s217 + $0x138] sm:$0xff]
        %v265 = vld [vmem:[%s217 + $0x140] sm:$0xff]
        %v266 = vld [vmem:[%s217 + $0x148] sm:$0xf]
        %v267 = vld [vmem:[%s217 + $0x150] sm:$0xff]
        %v268 = vld [vmem:[%s217 + $0x158] sm:$0xff]
        %v269 = vld [vmem:[%s217 + $0x160] sm:$0xf]
        %v270 = vld [vmem:[%s217 + $0x168] sm:$0xff]
        %v271 = vld [vmem:[%s217 + $0x170] sm:$0xff]
        %v272 = vld [vmem:[%s217 + $0x178] sm:$0xf]
        %v273 = vld [vmem:[%s217 + $0x180] sm:$0xff]
        %v274 = vld [vmem:[%s217 + $0x188] sm:$0xff]
        %v275 = vld [vmem:[%s217 + $0x190] sm:$0xf]
        %v276 = vld [vmem:[%s217 + $0x198] sm:$0xff]
        %v277 = vld [vmem:[%s217 + $0x1a0] sm:$0xff]
        %v278 = vld [vmem:[%s217 + $0x1a8] sm:$0xf]
        %v279 = vld [vmem:[%s217 + $0x1b0] sm:$0xff]
        %v280 = vld [vmem:[%s217 + $0x1b8] sm:$0xff]
        %v281 = vld [vmem:[%s217 + $0x1c0] sm:$0xf]
        %v282 = vld [vmem:[%s217 + $0x1c8] sm:$0xff]
        %v283 = vld [vmem:[%s217 + $0x1d0] sm:$0xff]
        %v284 = vld [vmem:[%s217 + $0x1d8] sm:$0xf]
        %v285 = vld [vmem:[%s221] sm:$0xff]
        %v286 = vld [vmem:[%s221 + $0x8] sm:$0xff]
        %v287 = vld [vmem:[%s221 + $0x10] sm:$0xff]
        %v288 = vld [vmem:[%s221 + $0x18] sm:$0x1]
        %v289 = vlaneseq
        %v290 = vshrl.u32 %v289, 7
        %v291 = vsub.s32 0, %v290
        %v292 = vrot.slane %v285, %v291
        %v293 = vmul.f32 %v225, %v292
        %v294 = vmul.f32 %v226, %v292
        %v295 = vmul.f32 %v228, %v292
        %v296 = vmul.f32 %v229, %v292
        %v297 = vmul.f32 %v231, %v292
        %v298 = vmul.f32 %v232, %v292
        %v299 = vmul.f32 %v234, %v292
        %v300 = vmul.f32 %v235, %v292
        %v301 = vmul.f32 %v237, %v292
        %v302 = vmul.f32 %v238, %v292
        %v303 = vmul.f32 %v240, %v292
        %v304 = vmul.f32 %v241, %v292
        %v305 = vmul.f32 %v243, %v292
        %v306 = vmul.f32 %v244, %v292
        %v307 = vmul.f32 %v246, %v292
        %v308 = vmul.f32 %v247, %v292
        %v309 = vmul.f32 %v249, %v292
        %v310 = vmul.f32 %v250, %v292
        %v311 = vmul.f32 %v252, %v292
        %v312 = vmul.f32 %v253, %v292
        %v313 = vmul.f32 %v255, %v292
        %v314 = vmul.f32 %v256, %v292
        %v315 = vmul.f32 %v258, %v292
        %v316 = vmul.f32 %v259, %v292
        %v317 = vmul.f32 %v261, %v292
        %v318 = vmul.f32 %v262, %v292
        %v319 = vmul.f32 %v264, %v292
        %v320 = vmul.f32 %v265, %v292
        %v321 = vmul.f32 %v267, %v292
        %v322 = vmul.f32 %v268, %v292
        %v323 = vmul.f32 %v270, %v292
        %v324 = vmul.f32 %v271, %v292
        %v325 = vadd.f32 %v293, 0.0
        %v326 = vadd.f32 %v294, 0.0
        %v327 = vadd.f32 %v295, 0.0
        %v328 = vadd.f32 %v296, 0.0
        %v329 = vadd.f32 %v297, 0.0
        %v330 = vadd.f32 %v298, 0.0
        %v331 = vadd.f32 %v299, 0.0
        %v332 = vadd.f32 %v300, 0.0
        %v333 = vadd.f32 %v301, 0.0
        %v334 = vadd.f32 %v302, 0.0
        %v335 = vadd.f32 %v303, 0.0
        %v336 = vadd.f32 %v304, 0.0
        %v337 = vadd.f32 %v305, 0.0
        %v338 = vadd.f32 %v306, 0.0
        %v339 = vadd.f32 %v307, 0.0
        %v340 = vadd.f32 %v308, 0.0
        %v341 = vadd.f32 %v309, 0.0
        %v342 = vadd.f32 %v310, 0.0
        %v343 = vadd.f32 %v311, 0.0
        %v344 = vadd.f32 %v312, 0.0
        %v345 = vadd.f32 %v313, 0.0
        %v346 = vadd.f32 %v314, 0.0
        %v347 = vadd.f32 %v315, 0.0
        %v348 = vadd.f32 %v316, 0.0
        %v349 = vadd.f32 %v317, 0.0
        %v350 = vadd.f32 %v318, 0.0
        %v351 = vadd.f32 %v319, 0.0
        %v352 = vadd.f32 %v320, 0.0
        %v353 = vadd.f32 %v321, 0.0
        %v354 = vadd.f32 %v322, 0.0
        %v355 = vadd.f32 %v323, 0.0
        %v356 = vadd.f32 %v324, 0.0
        %v357 = vlaneseq
        %v358 = vshrl.u32 %v357, 7
        %v359 = vsub.s32 1, %v358
        %v360 = vrot.slane %v285, %v359
        %v361 = vmul.f32 %v225, %v360
        %v362 = vmul.f32 %v226, %v360
        %v363 = vmul.f32 %v227, %v360
        %v364 = vmul.f32 %v228, %v360
        %v365 = vmul.f32 %v229, %v360
        %v366 = vmul.f32 %v230, %v360
        %v367 = vmul.f32 %v231, %v360
        %v368 = vmul.f32 %v232, %v360
        %v369 = vmul.f32 %v233, %v360
        %v370 = vmul.f32 %v234, %v360
        %v371 = vmul.f32 %v235, %v360
        %v372 = vmul.f32 %v236, %v360
        %v373 = vmul.f32 %v237, %v360
        %v374 = vmul.f32 %v238, %v360
        %v375 = vmul.f32 %v239, %v360
        %v376 = vmul.f32 %v240, %v360
        %v377 = vmul.f32 %v241, %v360
        %v378 = vmul.f32 %v242, %v360
        %v379 = vmul.f32 %v243, %v360
        %v380 = vmul.f32 %v244, %v360
        %v381 = vmul.f32 %v245, %v360
        %v382 = vmul.f32 %v246, %v360
        %v383 = vmul.f32 %v247, %v360
        %v384 = vmul.f32 %v248, %v360
        %v385 = vmul.f32 %v249, %v360
        %v386 = vmul.f32 %v250, %v360
        %v387 = vmul.f32 %v251, %v360
        %v388 = vmul.f32 %v252, %v360
        %v389 = vmul.f32 %v253, %v360
        %v390 = vmul.f32 %v254, %v360
        %v391 = vmul.f32 %v255, %v360
        %v392 = vmul.f32 %v256, %v360
        %v393 = vmul.f32 %v257, %v360
        %v394 = vmul.f32 %v258, %v360
        %v395 = vmul.f32 %v259, %v360
        %v396 = vmul.f32 %v260, %v360
        %v397 = vmul.f32 %v261, %v360
        %v398 = vmul.f32 %v262, %v360
        %v399 = vmul.f32 %v263, %v360
        %v400 = vmul.f32 %v264, %v360
        %v401 = vmul.f32 %v265, %v360
        %v402 = vmul.f32 %v266, %v360
        %v403 = vmul.f32 %v267, %v360
        %v404 = vmul.f32 %v268, %v360
        %v405 = vmul.f32 %v269, %v360
        %v406 = vmul.f32 %v270, %v360
        %v407 = vmul.f32 %v271, %v360
        %v408 = vmul.f32 %v272, %v360
        %vm457 = vcmask 1046528
        %v458 = vrot.slane %v361, 1
        %v459 = vrot.slane %v362, 1
        %v460 = vsel %vm457, %v458, %v459
        %v461 = vrot.slane %v363, 1
        %v462 = vsel %vm457, %v459, %v461
        %v463 = vrot.slane %v364, 1
        %v464 = vrot.slane %v365, 1
        %v465 = vsel %vm457, %v463, %v464
        %v466 = vrot.slane %v366, 1
        %v467 = vsel %vm457, %v464, %v466
        %v468 = vrot.slane %v367, 1
        %v469 = vrot.slane %v368, 1
        %v470 = vsel %vm457, %v468, %v469
        %v471 = vrot.slane %v369, 1
        %v472 = vsel %vm457, %v469, %v471
        %v473 = vrot.slane %v370, 1
        %v474 = vrot.slane %v371, 1
        %v475 = vsel %vm457, %v473, %v474
        %v476 = vrot.slane %v372, 1
        %v477 = vsel %vm457, %v474, %v476
        %v478 = vrot.slane %v373, 1
        %v479 = vrot.slane %v374, 1
        %v480 = vsel %vm457, %v478, %v479
        %v481 = vrot.slane %v375, 1
        %v482 = vsel %vm457, %v479, %v481
        %v483 = vrot.slane %v376, 1
        %v484 = vrot.slane %v377, 1
        %v485 = vsel %vm457, %v483, %v484
        %v486 = vrot.slane %v378, 1
        %v487 = vsel %vm457, %v484, %v486
        %v488 = vrot.slane %v379, 1
        %v489 = vrot.slane %v380, 1
        %v490 = vsel %vm457, %v488, %v489
        %v491 = vrot.slane %v381, 1
        %v492 = vsel %vm457, %v489, %v491
        %v493 = vrot.slane %v382, 1
        %v494 = vrot.slane %v383, 1
        %v495 = vsel %vm457, %v493, %v494
        %v496 = vrot.slane %v384, 1
        %v497 = vsel %vm457, %v494, %v496
        %v498 = vrot.slane %v385, 1
        %v499 = vrot.slane %v386, 1
        %v500 = vsel %vm457, %v498, %v499
        %v501 = vrot.slane %v387, 1
        %v502 = vsel %vm457, %v499, %v501
        %v503 = vrot.slane %v388, 1
        %v504 = vrot.slane %v389, 1
        %v505 = vsel %vm457, %v503, %v504
        %v506 = vrot.slane %v390, 1
        %v507 = vsel %vm457, %v504, %v506
        %v508 = vrot.slane %v391, 1
        %v509 = vrot.slane %v392, 1
        %v510 = vsel %vm457, %v508, %v509
        %v511 = vrot.slane %v393, 1
        %v512 = vsel %vm457, %v509, %v511
        %v513 = vrot.slane %v394, 1
        %v514 = vrot.slane %v395, 1
        %v515 = vsel %vm457, %v513, %v514
        %v516 = vrot.slane %v396, 1
        %v517 = vsel %vm457, %v514, %v516
        %v518 = vrot.slane %v397, 1
        %v519 = vrot.slane %v398, 1
        %v520 = vsel %vm457, %v518, %v519
        %v521 = vrot.slane %v399, 1
        %v522 = vsel %vm457, %v519, %v521
        %v523 = vrot.slane %v400, 1
        %v524 = vrot.slane %v401, 1
        %v525 = vsel %vm457, %v523, %v524
        %v526 = vrot.slane %v402, 1
        %v527 = vsel %vm457, %v524, %v526
        %v528 = vrot.slane %v403, 1
        %v529 = vrot.slane %v404, 1
        %v530 = vsel %vm457, %v528, %v529
        %v531 = vrot.slane %v405, 1
        %v532 = vsel %vm457, %v529, %v531
        %v533 = vrot.slane %v406, 1
        %v534 = vrot.slane %v407, 1
        %v535 = vsel %vm457, %v533, %v534
        %v536 = vrot.slane %v408, 1
        %v537 = vsel %vm457, %v534, %v536
        %v570 = vadd.f32 %v325, %v460
        %v571 = vadd.f32 %v326, %v462
        %v572 = vadd.f32 %v327, %v465
        %v573 = vadd.f32 %v328, %v467
        %v574 = vadd.f32 %v329, %v470
        %v575 = vadd.f32 %v330, %v472
        %v576 = vadd.f32 %v331, %v475
        %v577 = vadd.f32 %v332, %v477
        %v578 = vadd.f32 %v333, %v480
        %v579 = vadd.f32 %v334, %v482
        %v580 = vadd.f32 %v335, %v485
        %v581 = vadd.f32 %v336, %v487
        %v582 = vadd.f32 %v337, %v490
        %v583 = vadd.f32 %v338, %v492
        %v584 = vadd.f32 %v339, %v495
        %v585 = vadd.f32 %v340, %v497
        %v586 = vadd.f32 %v341, %v500
        %v587 = vadd.f32 %v342, %v502
        %v588 = vadd.f32 %v343, %v505
        %v589 = vadd.f32 %v344, %v507
        %v590 = vadd.f32 %v345, %v510
        %v591 = vadd.f32 %v346, %v512
        %v592 = vadd.f32 %v347, %v515
        %v593 = vadd.f32 %v348, %v517
        %v594 = vadd.f32 %v349, %v520
        %v595 = vadd.f32 %v350, %v522
        %v596 = vadd.f32 %v351, %v525
        %v597 = vadd.f32 %v352, %v527
        %v598 = vadd.f32 %v353, %v530
        %v599 = vadd.f32 %v354, %v532
        %v600 = vadd.f32 %v355, %v535
        %v601 = vadd.f32 %v356, %v537
        %v602 = vlaneseq
        %v603 = vshrl.u32 %v602, 7
        %v604 = vsub.s32 2, %v603
        %v605 = vrot.slane %v285, %v604
        %v606 = vmul.f32 %v225, %v605
        %v607 = vmul.f32 %v226, %v605
        %v608 = vmul.f32 %v227, %v605
        %v609 = vmul.f32 %v228, %v605
        %v610 = vmul.f32 %v229, %v605
        %v611 = vmul.f32 %v230, %v605
        %v612 = vmul.f32 %v231, %v605
        %v613 = vmul.f32 %v232, %v605
        %v614 = vmul.f32 %v233, %v605
        %v615 = vmul.f32 %v234, %v605
        %v616 = vmul.f32 %v235, %v605
        %v617 = vmul.f32 %v236, %v605
        %v618 = vmul.f32 %v237, %v605
        %v619 = vmul.f32 %v238, %v605
        %v620 = vmul.f32 %v239, %v605
        %v621 = vmul.f32 %v240, %v605
        %v622 = vmul.f32 %v241, %v605
        %v623 = vmul.f32 %v242, %v605
        %v624 = vmul.f32 %v243, %v605
        %v625 = vmul.f32 %v244, %v605
        %v626 = vmul.f32 %v245, %v605
        %v627 = vmul.f32 %v246, %v605
        %v628 = vmul.f32 %v247, %v605
        %v629 = vmul.f32 %v248, %v605
        %v630 = vmul.f32 %v249, %v605
        %v631 = vmul.f32 %v250, %v605
        %v632 = vmul.f32 %v251, %v605
        %v633 = vmul.f32 %v252, %v605
        %v634 = vmul.f32 %v253, %v605
        %v635 = vmul.f32 %v254, %v605
        %v636 = vmul.f32 %v255, %v605
        %v637 = vmul.f32 %v256, %v605
        %v638 = vmul.f32 %v257, %v605
        %v639 = vmul.f32 %v258, %v605
        %v640 = vmul.f32 %v259, %v605
        %v641 = vmul.f32 %v260, %v605
        %v642 = vmul.f32 %v261, %v605
        %v643 = vmul.f32 %v262, %v605
        %v644 = vmul.f32 %v263, %v605
        %v645 = vmul.f32 %v264, %v605
        %v646 = vmul.f32 %v265, %v605
        %v647 = vmul.f32 %v266, %v605
        %v648 = vmul.f32 %v267, %v605
        %v649 = vmul.f32 %v268, %v605
        %v650 = vmul.f32 %v269, %v605
        %v651 = vmul.f32 %v270, %v605
        %v652 = vmul.f32 %v271, %v605
        %v653 = vmul.f32 %v272, %v605
        %vm702 = vcmask 1045504
        %v703 = vrot.slane %v606, 2
        %v704 = vrot.slane %v607, 2
        %v705 = vsel %vm702, %v703, %v704
        %v706 = vrot.slane %v608, 2
        %v707 = vsel %vm702, %v704, %v706
        %v708 = vrot.slane %v609, 2
        %v709 = vrot.slane %v610, 2
        %v710 = vsel %vm702, %v708, %v709
        %v711 = vrot.slane %v611, 2
        %v712 = vsel %vm702, %v709, %v711
        %v713 = vrot.slane %v612, 2
        %v714 = vrot.slane %v613, 2
        %v715 = vsel %vm702, %v713, %v714
        %v716 = vrot.slane %v614, 2
        %v717 = vsel %vm702, %v714, %v716
        %v718 = vrot.slane %v615, 2
        %v719 = vrot.slane %v616, 2
        %v720 = vsel %vm702, %v718, %v719
        %v721 = vrot.slane %v617, 2
        %v722 = vsel %vm702, %v719, %v721
        %v723 = vrot.slane %v618, 2
        %v724 = vrot.slane %v619, 2
        %v725 = vsel %vm702, %v723, %v724
        %v726 = vrot.slane %v620, 2
        %v727 = vsel %vm702, %v724, %v726
        %v728 = vrot.slane %v621, 2
        %v729 = vrot.slane %v622, 2
        %v730 = vsel %vm702, %v728, %v729
        %v731 = vrot.slane %v623, 2
        %v732 = vsel %vm702, %v729, %v731
        %v733 = vrot.slane %v624, 2
        %v734 = vrot.slane %v625, 2
        %v735 = vsel %vm702, %v733, %v734
        %v736 = vrot.slane %v626, 2
        %v737 = vsel %vm702, %v734, %v736
        %v738 = vrot.slane %v627, 2
        %v739 = vrot.slane %v628, 2
        %v740 = vsel %vm702, %v738, %v739
        %v741 = vrot.slane %v629, 2
        %v742 = vsel %vm702, %v739, %v741
        %v743 = vrot.slane %v630, 2
        %v744 = vrot.slane %v631, 2
        %v745 = vsel %vm702, %v743, %v744
        %v746 = vrot.slane %v632, 2
        %v747 = vsel %vm702, %v744, %v746
        %v748 = vrot.slane %v633, 2
        %v749 = vrot.slane %v634, 2
        %v750 = vsel %vm702, %v748, %v749
        %v751 = vrot.slane %v635, 2
        %v752 = vsel %vm702, %v749, %v751
        %v753 = vrot.slane %v636, 2
        %v754 = vrot.slane %v637, 2
        %v755 = vsel %vm702, %v753, %v754
        %v756 = vrot.slane %v638, 2
        %v757 = vsel %vm702, %v754, %v756
        %v758 = vrot.slane %v639, 2
        %v759 = vrot.slane %v640, 2
        %v760 = vsel %vm702, %v758, %v759
        %v761 = vrot.slane %v641, 2
        %v762 = vsel %vm702, %v759, %v761
        %v763 = vrot.slane %v642, 2
        %v764 = vrot.slane %v643, 2
        %v765 = vsel %vm702, %v763, %v764
        %v766 = vrot.slane %v644, 2
        %v767 = vsel %vm702, %v764, %v766
        %v768 = vrot.slane %v645, 2
        %v769 = vrot.slane %v646, 2
        %v770 = vsel %vm702, %v768, %v769
        %v771 = vrot.slane %v647, 2
        %v772 = vsel %vm702, %v769, %v771
        %v773 = vrot.slane %v648, 2
        %v774 = vrot.slane %v649, 2
        %v775 = vsel %vm702, %v773, %v774
        %v776 = vrot.slane %v650, 2
        %v777 = vsel %vm702, %v774, %v776
        %v778 = vrot.slane %v651, 2
        %v779 = vrot.slane %v652, 2
        %v780 = vsel %vm702, %v778, %v779
        %v781 = vrot.slane %v653, 2
        %v782 = vsel %vm702, %v779, %v781
        %v815 = vadd.f32 %v570, %v705
        %v816 = vadd.f32 %v571, %v707
        %v817 = vadd.f32 %v572, %v710
        %v818 = vadd.f32 %v573, %v712
        %v819 = vadd.f32 %v574, %v715
        %v820 = vadd.f32 %v575, %v717
        %v821 = vadd.f32 %v576, %v720
        %v822 = vadd.f32 %v577, %v722
        %v823 = vadd.f32 %v578, %v725
        %v824 = vadd.f32 %v579, %v727
        %v825 = vadd.f32 %v580, %v730
        %v826 = vadd.f32 %v581, %v732
        %v827 = vadd.f32 %v582, %v735
        %v828 = vadd.f32 %v583, %v737
        %v829 = vadd.f32 %v584, %v740
        %v830 = vadd.f32 %v585, %v742
        %v831 = vadd.f32 %v586, %v745
        %v832 = vadd.f32 %v587, %v747
        %v833 = vadd.f32 %v588, %v750
        %v834 = vadd.f32 %v589, %v752
        %v835 = vadd.f32 %v590, %v755
        %v836 = vadd.f32 %v591, %v757
        %v837 = vadd.f32 %v592, %v760
        %v838 = vadd.f32 %v593, %v762
        %v839 = vadd.f32 %v594, %v765
        %v840 = vadd.f32 %v595, %v767
        %v841 = vadd.f32 %v596, %v770
        %v842 = vadd.f32 %v597, %v772
        %v843 = vadd.f32 %v598, %v775
        %v844 = vadd.f32 %v599, %v777
        %v845 = vadd.f32 %v600, %v780
        %v846 = vadd.f32 %v601, %v782
        %v847 = vlaneseq
        %v848 = vshrl.u32 %v847, 7
        %v849 = vsub.s32 3, %v848
        %v850 = vrot.slane %v285, %v849
        %v851 = vmul.f32 %v225, %v850
        %v852 = vmul.f32 %v226, %v850
        %v853 = vmul.f32 %v227, %v850
        %v854 = vmul.f32 %v228, %v850
        %v855 = vmul.f32 %v229, %v850
        %v856 = vmul.f32 %v230, %v850
        %v857 = vmul.f32 %v231, %v850
        %v858 = vmul.f32 %v232, %v850
        %v859 = vmul.f32 %v233, %v850
        %v860 = vmul.f32 %v234, %v850
        %v861 = vmul.f32 %v235, %v850
        %v862 = vmul.f32 %v236, %v850
        %v863 = vmul.f32 %v237, %v850
        %v864 = vmul.f32 %v238, %v850
        %v865 = vmul.f32 %v239, %v850
        %v866 = vmul.f32 %v240, %v850
        %v867 = vmul.f32 %v241, %v850
        %v868 = vmul.f32 %v242, %v850
        %v869 = vmul.f32 %v243, %v850
        %v870 = vmul.f32 %v244, %v850
        %v871 = vmul.f32 %v245, %v850
        %v872 = vmul.f32 %v246, %v850
        %v873 = vmul.f32 %v247, %v850
        %v874 = vmul.f32 %v248, %v850
        %v875 = vmul.f32 %v249, %v850
        %v876 = vmul.f32 %v250, %v850
        %v877 = vmul.f32 %v251, %v850
        %v878 = vmul.f32 %v252, %v850
        %v879 = vmul.f32 %v253, %v850
        %v880 = vmul.f32 %v254, %v850
        %v881 = vmul.f32 %v255, %v850
        %v882 = vmul.f32 %v256, %v850
        %v883 = vmul.f32 %v257, %v850
        %v884 = vmul.f32 %v258, %v850
        %v885 = vmul.f32 %v259, %v850
        %v886 = vmul.f32 %v260, %v850
        %v887 = vmul.f32 %v261, %v850
        %v888 = vmul.f32 %v262, %v850
        %v889 = vmul.f32 %v263, %v850
        %v890 = vmul.f32 %v264, %v850
        %v891 = vmul.f32 %v265, %v850
        %v892 = vmul.f32 %v266, %v850
        %v893 = vmul.f32 %v267, %v850
        %v894 = vmul.f32 %v268, %v850
        %v895 = vmul.f32 %v269, %v850
        %v896 = vmul.f32 %v270, %v850
        %v897 = vmul.f32 %v271, %v850
        %v898 = vmul.f32 %v272, %v850
        %vm947 = vcmask 1044480
        %v948 = vrot.slane %v851, 3
        %v949 = vrot.slane %v852, 3
        %v950 = vsel %vm947, %v948, %v949
        %v951 = vrot.slane %v853, 3
        %v952 = vsel %vm947, %v949, %v951
        %v953 = vrot.slane %v854, 3
        %v954 = vrot.slane %v855, 3
        %v955 = vsel %vm947, %v953, %v954
        %v956 = vrot.slane %v856, 3
        %v957 = vsel %vm947, %v954, %v956
        %v958 = vrot.slane %v857, 3
        %v959 = vrot.slane %v858, 3
        %v960 = vsel %vm947, %v958, %v959
        %v961 = vrot.slane %v859, 3
        %v962 = vsel %vm947, %v959, %v961
        %v963 = vrot.slane %v860, 3
        %v964 = vrot.slane %v861, 3
        %v965 = vsel %vm947, %v963, %v964
        %v966 = vrot.slane %v862, 3
        %v967 = vsel %vm947, %v964, %v966
        %v968 = vrot.slane %v863, 3
        %v969 = vrot.slane %v864, 3
        %v970 = vsel %vm947, %v968, %v969
        %v971 = vrot.slane %v865, 3
        %v972 = vsel %vm947, %v969, %v971
        %v973 = vrot.slane %v866, 3
        %v974 = vrot.slane %v867, 3
        %v975 = vsel %vm947, %v973, %v974
        %v976 = vrot.slane %v868, 3
        %v977 = vsel %vm947, %v974, %v976
        %v978 = vrot.slane %v869, 3
        %v979 = vrot.slane %v870, 3
        %v980 = vsel %vm947, %v978, %v979
        %v981 = vrot.slane %v871, 3
        %v982 = vsel %vm947, %v979, %v981
        %v983 = vrot.slane %v872, 3
        %v984 = vrot.slane %v873, 3
        %v985 = vsel %vm947, %v983, %v984
        %v986 = vrot.slane %v874, 3
        %v987 = vsel %vm947, %v984, %v986
        %v988 = vrot.slane %v875, 3
        %v989 = vrot.slane %v876, 3
        %v990 = vsel %vm947, %v988, %v989
        %v991 = vrot.slane %v877, 3
        %v992 = vsel %vm947, %v989, %v991
        %v993 = vrot.slane %v878, 3
        %v994 = vrot.slane %v879, 3
        %v995 = vsel %vm947, %v993, %v994
        %v996 = vrot.slane %v880, 3
        %v997 = vsel %vm947, %v994, %v996
        %v998 = vrot.slane %v881, 3
        %v999 = vrot.slane %v882, 3
        %v1000 = vsel %vm947, %v998, %v999
        %v1001 = vrot.slane %v883, 3
        %v1002 = vsel %vm947, %v999, %v1001
        %v1003 = vrot.slane %v884, 3
        %v1004 = vrot.slane %v885, 3
        %v1005 = vsel %vm947, %v1003, %v1004
        %v1006 = vrot.slane %v886, 3
        %v1007 = vsel %vm947, %v1004, %v1006
        %v1008 = vrot.slane %v887, 3
        %v1009 = vrot.slane %v888, 3
        %v1010 = vsel %vm947, %v1008, %v1009
        %v1011 = vrot.slane %v889, 3
        %v1012 = vsel %vm947, %v1009, %v1011
        %v1013 = vrot.slane %v890, 3
        %v1014 = vrot.slane %v891, 3
        %v1015 = vsel %vm947, %v1013, %v1014
        %v1016 = vrot.slane %v892, 3
        %v1017 = vsel %vm947, %v1014, %v1016
        %v1018 = vrot.slane %v893, 3
        %v1019 = vrot.slane %v894, 3
        %v1020 = vsel %vm947, %v1018, %v1019
        %v1021 = vrot.slane %v895, 3
        %v1022 = vsel %vm947, %v1019, %v1021
        %v1023 = vrot.slane %v896, 3
        %v1024 = vrot.slane %v897, 3
        %v1025 = vsel %vm947, %v1023, %v1024
        %v1026 = vrot.slane %v898, 3
        %v1027 = vsel %vm947, %v1024, %v1026
        %v1060 = vadd.f32 %v815, %v950
        %v1061 = vadd.f32 %v816, %v952
        %v1062 = vadd.f32 %v817, %v955
        %v1063 = vadd.f32 %v818, %v957
        %v1064 = vadd.f32 %v819, %v960
        %v1065 = vadd.f32 %v820, %v962
        %v1066 = vadd.f32 %v821, %v965
        %v1067 = vadd.f32 %v822, %v967
        %v1068 = vadd.f32 %v823, %v970
        %v1069 = vadd.f32 %v824, %v972
        %v1070 = vadd.f32 %v825, %v975
        %v1071 = vadd.f32 %v826, %v977
        %v1072 = vadd.f32 %v827, %v980
        %v1073 = vadd.f32 %v828, %v982
        %v1074 = vadd.f32 %v829, %v985
        %v1075 = vadd.f32 %v830, %v987
        %v1076 = vadd.f32 %v831, %v990
        %v1077 = vadd.f32 %v832, %v992
        %v1078 = vadd.f32 %v833, %v995
        %v1079 = vadd.f32 %v834, %v997
        %v1080 = vadd.f32 %v835, %v1000
        %v1081 = vadd.f32 %v836, %v1002
        %v1082 = vadd.f32 %v837, %v1005
        %v1083 = vadd.f32 %v838, %v1007
        %v1084 = vadd.f32 %v839, %v1010
        %v1085 = vadd.f32 %v840, %v1012
        %v1086 = vadd.f32 %v841, %v1015
        %v1087 = vadd.f32 %v842, %v1017
        %v1088 = vadd.f32 %v843, %v1020
        %v1089 = vadd.f32 %v844, %v1022
        %v1090 = vadd.f32 %v845, %v1025
        %v1091 = vadd.f32 %v846, %v1027
        %v1092 = vlaneseq
        %v1093 = vshrl.u32 %v1092, 7
        %v1094 = vsub.s32 4, %v1093
        %v1095 = vrot.slane %v285, %v1094
        %v1096 = vmul.f32 %v225, %v1095
        %v1097 = vmul.f32 %v226, %v1095
        %v1098 = vmul.f32 %v227, %v1095
        %v1099 = vmul.f32 %v228, %v1095
        %v1100 = vmul.f32 %v229, %v1095
        %v1101 = vmul.f32 %v230, %v1095
        %v1102 = vmul.f32 %v231, %v1095
        %v1103 = vmul.f32 %v232, %v1095
        %v1104 = vmul.f32 %v233, %v1095
        %v1105 = vmul.f32 %v234, %v1095
        %v1106 = vmul.f32 %v235, %v1095
        %v1107 = vmul.f32 %v236, %v1095
        %v1108 = vmul.f32 %v237, %v1095
        %v1109 = vmul.f32 %v238, %v1095
        %v1110 = vmul.f32 %v239, %v1095
        %v1111 = vmul.f32 %v240, %v1095
        %v1112 = vmul.f32 %v241, %v1095
        %v1113 = vmul.f32 %v242, %v1095
        %v1114 = vmul.f32 %v243, %v1095
        %v1115 = vmul.f32 %v244, %v1095
        %v1116 = vmul.f32 %v245, %v1095
        %v1117 = vmul.f32 %v246, %v1095
        %v1118 = vmul.f32 %v247, %v1095
        %v1119 = vmul.f32 %v248, %v1095
        %v1120 = vmul.f32 %v249, %v1095
        %v1121 = vmul.f32 %v250, %v1095
        %v1122 = vmul.f32 %v251, %v1095
        %v1123 = vmul.f32 %v252, %v1095
        %v1124 = vmul.f32 %v253, %v1095
        %v1125 = vmul.f32 %v254, %v1095
        %v1126 = vmul.f32 %v255, %v1095
        %v1127 = vmul.f32 %v256, %v1095
        %v1128 = vmul.f32 %v257, %v1095
        %v1129 = vmul.f32 %v258, %v1095
        %v1130 = vmul.f32 %v259, %v1095
        %v1131 = vmul.f32 %v260, %v1095
        %v1132 = vmul.f32 %v261, %v1095
        %v1133 = vmul.f32 %v262, %v1095
        %v1134 = vmul.f32 %v263, %v1095
        %v1135 = vmul.f32 %v264, %v1095
        %v1136 = vmul.f32 %v265, %v1095
        %v1137 = vmul.f32 %v266, %v1095
        %v1138 = vmul.f32 %v267, %v1095
        %v1139 = vmul.f32 %v268, %v1095
        %v1140 = vmul.f32 %v269, %v1095
        %v1141 = vmul.f32 %v270, %v1095
        %v1142 = vmul.f32 %v271, %v1095
        %v1143 = vmul.f32 %v272, %v1095
        %vm1192 = vcmask 1043456
        %v1193 = vrot.slane %v1096, 4
        %v1194 = vrot.slane %v1097, 4
        %v1195 = vsel %vm1192, %v1193, %v1194
        %v1196 = vrot.slane %v1098, 4
        %v1197 = vsel %vm1192, %v1194, %v1196
        %v1198 = vrot.slane %v1099, 4
        %v1199 = vrot.slane %v1100, 4
        %v1200 = vsel %vm1192, %v1198, %v1199
        %v1201 = vrot.slane %v1101, 4
        %v1202 = vsel %vm1192, %v1199, %v1201
        %v1203 = vrot.slane %v1102, 4
        %v1204 = vrot.slane %v1103, 4
        %v1205 = vsel %vm1192, %v1203, %v1204
        %v1206 = vrot.slane %v1104, 4
        %v1207 = vsel %vm1192, %v1204, %v1206
        %v1208 = vrot.slane %v1105, 4
        %v1209 = vrot.slane %v1106, 4
        %v1210 = vsel %vm1192, %v1208, %v1209
        %v1211 = vrot.slane %v1107, 4
        %v1212 = vsel %vm1192, %v1209, %v1211
        %v1213 = vrot.slane %v1108, 4
        %v1214 = vrot.slane %v1109, 4
        %v1215 = vsel %vm1192, %v1213, %v1214
        %v1216 = vrot.slane %v1110, 4
        %v1217 = vsel %vm1192, %v1214, %v1216
        %v1218 = vrot.slane %v1111, 4
        %v1219 = vrot.slane %v1112, 4
        %v1220 = vsel %vm1192, %v1218, %v1219
        %v1221 = vrot.slane %v1113, 4
        %v1222 = vsel %vm1192, %v1219, %v1221
        %v1223 = vrot.slane %v1114, 4
        %v1224 = vrot.slane %v1115, 4
        %v1225 = vsel %vm1192, %v1223, %v1224
        %v1226 = vrot.slane %v1116, 4
        %v1227 = vsel %vm1192, %v1224, %v1226
        %v1228 = vrot.slane %v1117, 4
        %v1229 = vrot.slane %v1118, 4
        %v1230 = vsel %vm1192, %v1228, %v1229
        %v1231 = vrot.slane %v1119, 4
        %v1232 = vsel %vm1192, %v1229, %v1231
        %v1233 = vrot.slane %v1120, 4
        %v1234 = vrot.slane %v1121, 4
        %v1235 = vsel %vm1192, %v1233, %v1234
        %v1236 = vrot.slane %v1122, 4
        %v1237 = vsel %vm1192, %v1234, %v1236
        %v1238 = vrot.slane %v1123, 4
        %v1239 = vrot.slane %v1124, 4
        %v1240 = vsel %vm1192, %v1238, %v1239
        %v1241 = vrot.slane %v1125, 4
        %v1242 = vsel %vm1192, %v1239, %v1241
        %v1243 = vrot.slane %v1126, 4
        %v1244 = vrot.slane %v1127, 4
        %v1245 = vsel %vm1192, %v1243, %v1244
        %v1246 = vrot.slane %v1128, 4
        %v1247 = vsel %vm1192, %v1244, %v1246
        %v1248 = vrot.slane %v1129, 4
        %v1249 = vrot.slane %v1130, 4
        %v1250 = vsel %vm1192, %v1248, %v1249
        %v1251 = vrot.slane %v1131, 4
        %v1252 = vsel %vm1192, %v1249, %v1251
        %v1253 = vrot.slane %v1132, 4
        %v1254 = vrot.slane %v1133, 4
        %v1255 = vsel %vm1192, %v1253, %v1254
        %v1256 = vrot.slane %v1134, 4
        %v1257 = vsel %vm1192, %v1254, %v1256
        %v1258 = vrot.slane %v1135, 4
        %v1259 = vrot.slane %v1136, 4
        %v1260 = vsel %vm1192, %v1258, %v1259
        %v1261 = vrot.slane %v1137, 4
        %v1262 = vsel %vm1192, %v1259, %v1261
        %v1263 = vrot.slane %v1138, 4
        %v1264 = vrot.slane %v1139, 4
        %v1265 = vsel %vm1192, %v1263, %v1264
        %v1266 = vrot.slane %v1140, 4
        %v1267 = vsel %vm1192, %v1264, %v1266
        %v1268 = vrot.slane %v1141, 4
        %v1269 = vrot.slane %v1142, 4
        %v1270 = vsel %vm1192, %v1268, %v1269
        %v1271 = vrot.slane %v1143, 4
        %v1272 = vsel %vm1192, %v1269, %v1271
        %v1305 = vadd.f32 %v1060, %v1195
        %v1306 = vadd.f32 %v1061, %v1197
        %v1307 = vadd.f32 %v1062, %v1200
        %v1308 = vadd.f32 %v1063, %v1202
        %v1309 = vadd.f32 %v1064, %v1205
        %v1310 = vadd.f32 %v1065, %v1207
        %v1311 = vadd.f32 %v1066, %v1210
        %v1312 = vadd.f32 %v1067, %v1212
        %v1313 = vadd.f32 %v1068, %v1215
        %v1314 = vadd.f32 %v1069, %v1217
        %v1315 = vadd.f32 %v1070, %v1220
        %v1316 = vadd.f32 %v1071, %v1222
        %v1317 = vadd.f32 %v1072, %v1225
        %v1318 = vadd.f32 %v1073, %v1227
        %v1319 = vadd.f32 %v1074, %v1230
        %v1320 = vadd.f32 %v1075, %v1232
        %v1321 = vadd.f32 %v1076, %v1235
        %v1322 = vadd.f32 %v1077, %v1237
        %v1323 = vadd.f32 %v1078, %v1240
        %v1324 = vadd.f32 %v1079, %v1242
        %v1325 = vadd.f32 %v1080, %v1245
        %v1326 = vadd.f32 %v1081, %v1247
        %v1327 = vadd.f32 %v1082, %v1250
        %v1328 = vadd.f32 %v1083, %v1252
        %v1329 = vadd.f32 %v1084, %v1255
        %v1330 = vadd.f32 %v1085, %v1257
        %v1331 = vadd.f32 %v1086, %v1260
        %v1332 = vadd.f32 %v1087, %v1262
        %v1333 = vadd.f32 %v1088, %v1265
        %v1334 = vadd.f32 %v1089, %v1267
        %v1335 = vadd.f32 %v1090, %v1270
        %v1336 = vadd.f32 %v1091, %v1272
        %v1337 = vlaneseq
        %v1338 = vshrl.u32 %v1337, 7
        %v1339 = vsub.s32 5, %v1338
        %v1340 = vrot.slane %v285, %v1339
        %v1341 = vmul.f32 %v228, %v1340
        %v1342 = vmul.f32 %v229, %v1340
        %v1343 = vmul.f32 %v231, %v1340
        %v1344 = vmul.f32 %v232, %v1340
        %v1345 = vmul.f32 %v234, %v1340
        %v1346 = vmul.f32 %v235, %v1340
        %v1347 = vmul.f32 %v237, %v1340
        %v1348 = vmul.f32 %v238, %v1340
        %v1349 = vmul.f32 %v240, %v1340
        %v1350 = vmul.f32 %v241, %v1340
        %v1351 = vmul.f32 %v243, %v1340
        %v1352 = vmul.f32 %v244, %v1340
        %v1353 = vmul.f32 %v246, %v1340
        %v1354 = vmul.f32 %v247, %v1340
        %v1355 = vmul.f32 %v249, %v1340
        %v1356 = vmul.f32 %v250, %v1340
        %v1357 = vmul.f32 %v252, %v1340
        %v1358 = vmul.f32 %v253, %v1340
        %v1359 = vmul.f32 %v255, %v1340
        %v1360 = vmul.f32 %v256, %v1340
        %v1361 = vmul.f32 %v258, %v1340
        %v1362 = vmul.f32 %v259, %v1340
        %v1363 = vmul.f32 %v261, %v1340
        %v1364 = vmul.f32 %v262, %v1340
        %v1365 = vmul.f32 %v264, %v1340
        %v1366 = vmul.f32 %v265, %v1340
        %v1367 = vmul.f32 %v267, %v1340
        %v1368 = vmul.f32 %v268, %v1340
        %v1369 = vmul.f32 %v270, %v1340
        %v1370 = vmul.f32 %v271, %v1340
        %v1371 = vmul.f32 %v273, %v1340
        %v1372 = vmul.f32 %v274, %v1340
        %v1373 = vadd.f32 %v1305, %v1341
        %v1374 = vadd.f32 %v1306, %v1342
        %v1375 = vadd.f32 %v1307, %v1343
        %v1376 = vadd.f32 %v1308, %v1344
        %v1377 = vadd.f32 %v1309, %v1345
        %v1378 = vadd.f32 %v1310, %v1346
        %v1379 = vadd.f32 %v1311, %v1347
        %v1380 = vadd.f32 %v1312, %v1348
        %v1381 = vadd.f32 %v1313, %v1349
        %v1382 = vadd.f32 %v1314, %v1350
        %v1383 = vadd.f32 %v1315, %v1351
        %v1384 = vadd.f32 %v1316, %v1352
        %v1385 = vadd.f32 %v1317, %v1353
        %v1386 = vadd.f32 %v1318, %v1354
        %v1387 = vadd.f32 %v1319, %v1355
        %v1388 = vadd.f32 %v1320, %v1356
        %v1389 = vadd.f32 %v1321, %v1357
        %v1390 = vadd.f32 %v1322, %v1358
        %v1391 = vadd.f32 %v1323, %v1359
        %v1392 = vadd.f32 %v1324, %v1360
        %v1393 = vadd.f32 %v1325, %v1361
        %v1394 = vadd.f32 %v1326, %v1362
        %v1395 = vadd.f32 %v1327, %v1363
        %v1396 = vadd.f32 %v1328, %v1364
        %v1397 = vadd.f32 %v1329, %v1365
        %v1398 = vadd.f32 %v1330, %v1366
        %v1399 = vadd.f32 %v1331, %v1367
        %v1400 = vadd.f32 %v1332, %v1368
        %v1401 = vadd.f32 %v1333, %v1369
        %v1402 = vadd.f32 %v1334, %v1370
        %v1403 = vadd.f32 %v1335, %v1371
        %v1404 = vadd.f32 %v1336, %v1372
        %v1405 = vlaneseq
        %v1406 = vshrl.u32 %v1405, 7
        %v1407 = vsub.s32 6, %v1406
        %v1408 = vrot.slane %v285, %v1407
        %v1409 = vmul.f32 %v228, %v1408
        %v1410 = vmul.f32 %v229, %v1408
        %v1411 = vmul.f32 %v230, %v1408
        %v1412 = vmul.f32 %v231, %v1408
        %v1413 = vmul.f32 %v232, %v1408
        %v1414 = vmul.f32 %v233, %v1408
        %v1415 = vmul.f32 %v234, %v1408
        %v1416 = vmul.f32 %v235, %v1408
        %v1417 = vmul.f32 %v236, %v1408
        %v1418 = vmul.f32 %v237, %v1408
        %v1419 = vmul.f32 %v238, %v1408
        %v1420 = vmul.f32 %v239, %v1408
        %v1421 = vmul.f32 %v240, %v1408
        %v1422 = vmul.f32 %v241, %v1408
        %v1423 = vmul.f32 %v242, %v1408
        %v1424 = vmul.f32 %v243, %v1408
        %v1425 = vmul.f32 %v244, %v1408
        %v1426 = vmul.f32 %v245, %v1408
        %v1427 = vmul.f32 %v246, %v1408
        %v1428 = vmul.f32 %v247, %v1408
        %v1429 = vmul.f32 %v248, %v1408
        %v1430 = vmul.f32 %v249, %v1408
        %v1431 = vmul.f32 %v250, %v1408
        %v1432 = vmul.f32 %v251, %v1408
        %v1433 = vmul.f32 %v252, %v1408
        %v1434 = vmul.f32 %v253, %v1408
        %v1435 = vmul.f32 %v254, %v1408
        %v1436 = vmul.f32 %v255, %v1408
        %v1437 = vmul.f32 %v256, %v1408
        %v1438 = vmul.f32 %v257, %v1408
        %v1439 = vmul.f32 %v258, %v1408
        %v1440 = vmul.f32 %v259, %v1408
        %v1441 = vmul.f32 %v260, %v1408
        %v1442 = vmul.f32 %v261, %v1408
        %v1443 = vmul.f32 %v262, %v1408
        %v1444 = vmul.f32 %v263, %v1408
        %v1445 = vmul.f32 %v264, %v1408
        %v1446 = vmul.f32 %v265, %v1408
        %v1447 = vmul.f32 %v266, %v1408
        %v1448 = vmul.f32 %v267, %v1408
        %v1449 = vmul.f32 %v268, %v1408
        %v1450 = vmul.f32 %v269, %v1408
        %v1451 = vmul.f32 %v270, %v1408
        %v1452 = vmul.f32 %v271, %v1408
        %v1453 = vmul.f32 %v272, %v1408
        %v1454 = vmul.f32 %v273, %v1408
        %v1455 = vmul.f32 %v274, %v1408
        %v1456 = vmul.f32 %v275, %v1408
        %v1505 = vrot.slane %v1409, 1
        %v1506 = vrot.slane %v1410, 1
        %v1507 = vsel %vm457, %v1505, %v1506
        %v1508 = vrot.slane %v1411, 1
        %v1509 = vsel %vm457, %v1506, %v1508
        %v1510 = vrot.slane %v1412, 1
        %v1511 = vrot.slane %v1413, 1
        %v1512 = vsel %vm457, %v1510, %v1511
        %v1513 = vrot.slane %v1414, 1
        %v1514 = vsel %vm457, %v1511, %v1513
        %v1515 = vrot.slane %v1415, 1
        %v1516 = vrot.slane %v1416, 1
        %v1517 = vsel %vm457, %v1515, %v1516
        %v1518 = vrot.slane %v1417, 1
        %v1519 = vsel %vm457, %v1516, %v1518
        %v1520 = vrot.slane %v1418, 1
        %v1521 = vrot.slane %v1419, 1
        %v1522 = vsel %vm457, %v1520, %v1521
        %v1523 = vrot.slane %v1420, 1
        %v1524 = vsel %vm457, %v1521, %v1523
        %v1525 = vrot.slane %v1421, 1
        %v1526 = vrot.slane %v1422, 1
        %v1527 = vsel %vm457, %v1525, %v1526
        %v1528 = vrot.slane %v1423, 1
        %v1529 = vsel %vm457, %v1526, %v1528
        %v1530 = vrot.slane %v1424, 1
        %v1531 = vrot.slane %v1425, 1
        %v1532 = vsel %vm457, %v1530, %v1531
        %v1533 = vrot.slane %v1426, 1
        %v1534 = vsel %vm457, %v1531, %v1533
        %v1535 = vrot.slane %v1427, 1
        %v1536 = vrot.slane %v1428, 1
        %v1537 = vsel %vm457, %v1535, %v1536
        %v1538 = vrot.slane %v1429, 1
        %v1539 = vsel %vm457, %v1536, %v1538
        %v1540 = vrot.slane %v1430, 1
        %v1541 = vrot.slane %v1431, 1
        %v1542 = vsel %vm457, %v1540, %v1541
        %v1543 = vrot.slane %v1432, 1
        %v1544 = vsel %vm457, %v1541, %v1543
        %v1545 = vrot.slane %v1433, 1
        %v1546 = vrot.slane %v1434, 1
        %v1547 = vsel %vm457, %v1545, %v1546
        %v1548 = vrot.slane %v1435, 1
        %v1549 = vsel %vm457, %v1546, %v1548
        %v1550 = vrot.slane %v1436, 1
        %v1551 = vrot.slane %v1437, 1
        %v1552 = vsel %vm457, %v1550, %v1551
        %v1553 = vrot.slane %v1438, 1
        %v1554 = vsel %vm457, %v1551, %v1553
        %v1555 = vrot.slane %v1439, 1
        %v1556 = vrot.slane %v1440, 1
        %v1557 = vsel %vm457, %v1555, %v1556
        %v1558 = vrot.slane %v1441, 1
        %v1559 = vsel %vm457, %v1556, %v1558
        %v1560 = vrot.slane %v1442, 1
        %v1561 = vrot.slane %v1443, 1
        %v1562 = vsel %vm457, %v1560, %v1561
        %v1563 = vrot.slane %v1444, 1
        %v1564 = vsel %vm457, %v1561, %v1563
        %v1565 = vrot.slane %v1445, 1
        %v1566 = vrot.slane %v1446, 1
        %v1567 = vsel %vm457, %v1565, %v1566
        %v1568 = vrot.slane %v1447, 1
        %v1569 = vsel %vm457, %v1566, %v1568
        %v1570 = vrot.slane %v1448, 1
        %v1571 = vrot.slane %v1449, 1
        %v1572 = vsel %vm457, %v1570, %v1571
        %v1573 = vrot.slane %v1450, 1
        %v1574 = vsel %vm457, %v1571, %v1573
        %v1575 = vrot.slane %v1451, 1
        %v1576 = vrot.slane %v1452, 1
        %v1577 = vsel %vm457, %v1575, %v1576
        %v1578 = vrot.slane %v1453, 1
        %v1579 = vsel %vm457, %v1576, %v1578
        %v1580 = vrot.slane %v1454, 1
        %v1581 = vrot.slane %v1455, 1
        %v1582 = vsel %vm457, %v1580, %v1581
        %v1583 = vrot.slane %v1456, 1
        %v1584 = vsel %vm457, %v1581, %v1583
        %v1617 = vadd.f32 %v1373, %v1507
        %v1618 = vadd.f32 %v1374, %v1509
        %v1619 = vadd.f32 %v1375, %v1512
        %v1620 = vadd.f32 %v1376, %v1514
        %v1621 = vadd.f32 %v1377, %v1517
        %v1622 = vadd.f32 %v1378, %v1519
        %v1623 = vadd.f32 %v1379, %v1522
        %v1624 = vadd.f32 %v1380, %v1524
        %v1625 = vadd.f32 %v1381, %v1527
        %v1626 = vadd.f32 %v1382, %v1529
        %v1627 = vadd.f32 %v1383, %v1532
        %v1628 = vadd.f32 %v1384, %v1534
        %v1629 = vadd.f32 %v1385, %v1537
        %v1630 = vadd.f32 %v1386, %v1539
        %v1631 = vadd.f32 %v1387, %v1542
        %v1632 = vadd.f32 %v1388, %v1544
        %v1633 = vadd.f32 %v1389, %v1547
        %v1634 = vadd.f32 %v1390, %v1549
        %v1635 = vadd.f32 %v1391, %v1552
        %v1636 = vadd.f32 %v1392, %v1554
        %v1637 = vadd.f32 %v1393, %v1557
        %v1638 = vadd.f32 %v1394, %v1559
        %v1639 = vadd.f32 %v1395, %v1562
        %v1640 = vadd.f32 %v1396, %v1564
        %v1641 = vadd.f32 %v1397, %v1567
        %v1642 = vadd.f32 %v1398, %v1569
        %v1643 = vadd.f32 %v1399, %v1572
        %v1644 = vadd.f32 %v1400, %v1574
        %v1645 = vadd.f32 %v1401, %v1577
        %v1646 = vadd.f32 %v1402, %v1579
        %v1647 = vadd.f32 %v1403, %v1582
        %v1648 = vadd.f32 %v1404, %v1584
        %v1649 = vlaneseq
        %v1650 = vshrl.u32 %v1649, 7
        %v1651 = vsub.s32 7, %v1650
        %v1652 = vrot.slane %v285, %v1651
        %v1653 = vmul.f32 %v228, %v1652
        %v1654 = vmul.f32 %v229, %v1652
        %v1655 = vmul.f32 %v230, %v1652
        %v1656 = vmul.f32 %v231, %v1652
        %v1657 = vmul.f32 %v232, %v1652
        %v1658 = vmul.f32 %v233, %v1652
        %v1659 = vmul.f32 %v234, %v1652
        %v1660 = vmul.f32 %v235, %v1652
        %v1661 = vmul.f32 %v236, %v1652
        %v1662 = vmul.f32 %v237, %v1652
        %v1663 = vmul.f32 %v238, %v1652
        %v1664 = vmul.f32 %v239, %v1652
        %v1665 = vmul.f32 %v240, %v1652
        %v1666 = vmul.f32 %v241, %v1652
        %v1667 = vmul.f32 %v242, %v1652
        %v1668 = vmul.f32 %v243, %v1652
        %v1669 = vmul.f32 %v244, %v1652
        %v1670 = vmul.f32 %v245, %v1652
        %v1671 = vmul.f32 %v246, %v1652
        %v1672 = vmul.f32 %v247, %v1652
        %v1673 = vmul.f32 %v248, %v1652
        %v1674 = vmul.f32 %v249, %v1652
        %v1675 = vmul.f32 %v250, %v1652
        %v1676 = vmul.f32 %v251, %v1652
        %v1677 = vmul.f32 %v252, %v1652
        %v1678 = vmul.f32 %v253, %v1652
        %v1679 = vmul.f32 %v254, %v1652
        %v1680 = vmul.f32 %v255, %v1652
        %v1681 = vmul.f32 %v256, %v1652
        %v1682 = vmul.f32 %v257, %v1652
        %v1683 = vmul.f32 %v258, %v1652
        %v1684 = vmul.f32 %v259, %v1652
        %v1685 = vmul.f32 %v260, %v1652
        %v1686 = vmul.f32 %v261, %v1652
        %v1687 = vmul.f32 %v262, %v1652
        %v1688 = vmul.f32 %v263, %v1652
        %v1689 = vmul.f32 %v264, %v1652
        %v1690 = vmul.f32 %v265, %v1652
        %v1691 = vmul.f32 %v266, %v1652
        %v1692 = vmul.f32 %v267, %v1652
        %v1693 = vmul.f32 %v268, %v1652
        %v1694 = vmul.f32 %v269, %v1652
        %v1695 = vmul.f32 %v270, %v1652
        %v1696 = vmul.f32 %v271, %v1652
        %v1697 = vmul.f32 %v272, %v1652
        %v1698 = vmul.f32 %v273, %v1652
        %v1699 = vmul.f32 %v274, %v1652
        %v1700 = vmul.f32 %v275, %v1652
        %v1749 = vrot.slane %v1653, 2
        %v1750 = vrot.slane %v1654, 2
        %v1751 = vsel %vm702, %v1749, %v1750
        %v1752 = vrot.slane %v1655, 2
        %v1753 = vsel %vm702, %v1750, %v1752
        %v1754 = vrot.slane %v1656, 2
        %v1755 = vrot.slane %v1657, 2
        %v1756 = vsel %vm702, %v1754, %v1755
        %v1757 = vrot.slane %v1658, 2
        %v1758 = vsel %vm702, %v1755, %v1757
        %v1759 = vrot.slane %v1659, 2
        %v1760 = vrot.slane %v1660, 2
        %v1761 = vsel %vm702, %v1759, %v1760
        %v1762 = vrot.slane %v1661, 2
        %v1763 = vsel %vm702, %v1760, %v1762
        %v1764 = vrot.slane %v1662, 2
        %v1765 = vrot.slane %v1663, 2
        %v1766 = vsel %vm702, %v1764, %v1765
        %v1767 = vrot.slane %v1664, 2
        %v1768 = vsel %vm702, %v1765, %v1767
        %v1769 = vrot.slane %v1665, 2
        %v1770 = vrot.slane %v1666, 2
        %v1771 = vsel %vm702, %v1769, %v1770
        %v1772 = vrot.slane %v1667, 2
        %v1773 = vsel %vm702, %v1770, %v1772
        %v1774 = vrot.slane %v1668, 2
        %v1775 = vrot.slane %v1669, 2
        %v1776 = vsel %vm702, %v1774, %v1775
        %v1777 = vrot.slane %v1670, 2
        %v1778 = vsel %vm702, %v1775, %v1777
        %v1779 = vrot.slane %v1671, 2
        %v1780 = vrot.slane %v1672, 2
        %v1781 = vsel %vm702, %v1779, %v1780
        %v1782 = vrot.slane %v1673, 2
        %v1783 = vsel %vm702, %v1780, %v1782
        %v1784 = vrot.slane %v1674, 2
        %v1785 = vrot.slane %v1675, 2
        %v1786 = vsel %vm702, %v1784, %v1785
        %v1787 = vrot.slane %v1676, 2
        %v1788 = vsel %vm702, %v1785, %v1787
        %v1789 = vrot.slane %v1677, 2
        %v1790 = vrot.slane %v1678, 2
        %v1791 = vsel %vm702, %v1789, %v1790
        %v1792 = vrot.slane %v1679, 2
        %v1793 = vsel %vm702, %v1790, %v1792
        %v1794 = vrot.slane %v1680, 2
        %v1795 = vrot.slane %v1681, 2
        %v1796 = vsel %vm702, %v1794, %v1795
        %v1797 = vrot.slane %v1682, 2
        %v1798 = vsel %vm702, %v1795, %v1797
        %v1799 = vrot.slane %v1683, 2
        %v1800 = vrot.slane %v1684, 2
        %v1801 = vsel %vm702, %v1799, %v1800
        %v1802 = vrot.slane %v1685, 2
        %v1803 = vsel %vm702, %v1800, %v1802
        %v1804 = vrot.slane %v1686, 2
        %v1805 = vrot.slane %v1687, 2
        %v1806 = vsel %vm702, %v1804, %v1805
        %v1807 = vrot.slane %v1688, 2
        %v1808 = vsel %vm702, %v1805, %v1807
        %v1809 = vrot.slane %v1689, 2
        %v1810 = vrot.slane %v1690, 2
        %v1811 = vsel %vm702, %v1809, %v1810
        %v1812 = vrot.slane %v1691, 2
        %v1813 = vsel %vm702, %v1810, %v1812
        %v1814 = vrot.slane %v1692, 2
        %v1815 = vrot.slane %v1693, 2
        %v1816 = vsel %vm702, %v1814, %v1815
        %v1817 = vrot.slane %v1694, 2
        %v1818 = vsel %vm702, %v1815, %v1817
        %v1819 = vrot.slane %v1695, 2
        %v1820 = vrot.slane %v1696, 2
        %v1821 = vsel %vm702, %v1819, %v1820
        %v1822 = vrot.slane %v1697, 2
        %v1823 = vsel %vm702, %v1820, %v1822
        %v1824 = vrot.slane %v1698, 2
        %v1825 = vrot.slane %v1699, 2
        %v1826 = vsel %vm702, %v1824, %v1825
        %v1827 = vrot.slane %v1700, 2
        %v1828 = vsel %vm702, %v1825, %v1827
        %v1861 = vadd.f32 %v1617, %v1751
        %v1862 = vadd.f32 %v1618, %v1753
        %v1863 = vadd.f32 %v1619, %v1756
        %v1864 = vadd.f32 %v1620, %v1758
        %v1865 = vadd.f32 %v1621, %v1761
        %v1866 = vadd.f32 %v1622, %v1763
        %v1867 = vadd.f32 %v1623, %v1766
        %v1868 = vadd.f32 %v1624, %v1768
        %v1869 = vadd.f32 %v1625, %v1771
        %v1870 = vadd.f32 %v1626, %v1773
        %v1871 = vadd.f32 %v1627, %v1776
        %v1872 = vadd.f32 %v1628, %v1778
        %v1873 = vadd.f32 %v1629, %v1781
        %v1874 = vadd.f32 %v1630, %v1783
        %v1875 = vadd.f32 %v1631, %v1786
        %v1876 = vadd.f32 %v1632, %v1788
        %v1877 = vadd.f32 %v1633, %v1791
        %v1878 = vadd.f32 %v1634, %v1793
        %v1879 = vadd.f32 %v1635, %v1796
        %v1880 = vadd.f32 %v1636, %v1798
        %v1881 = vadd.f32 %v1637, %v1801
        %v1882 = vadd.f32 %v1638, %v1803
        %v1883 = vadd.f32 %v1639, %v1806
        %v1884 = vadd.f32 %v1640, %v1808
        %v1885 = vadd.f32 %v1641, %v1811
        %v1886 = vadd.f32 %v1642, %v1813
        %v1887 = vadd.f32 %v1643, %v1816
        %v1888 = vadd.f32 %v1644, %v1818
        %v1889 = vadd.f32 %v1645, %v1821
        %v1890 = vadd.f32 %v1646, %v1823
        %v1891 = vadd.f32 %v1647, %v1826
        %v1892 = vadd.f32 %v1648, %v1828
        %v1893 = vlaneseq
        %v1894 = vshrl.u32 %v1893, 7
        %v1895 = vsub.s32 0, %v1894
        %v1896 = vrot.slane %v286, %v1895
        %v1897 = vmul.f32 %v228, %v1896
        %v1898 = vmul.f32 %v229, %v1896
        %v1899 = vmul.f32 %v230, %v1896
        %v1900 = vmul.f32 %v231, %v1896
        %v1901 = vmul.f32 %v232, %v1896
        %v1902 = vmul.f32 %v233, %v1896
        %v1903 = vmul.f32 %v234, %v1896
        %v1904 = vmul.f32 %v235, %v1896
        %v1905 = vmul.f32 %v236, %v1896
        %v1906 = vmul.f32 %v237, %v1896
        %v1907 = vmul.f32 %v238, %v1896
        %v1908 = vmul.f32 %v239, %v1896
        %v1909 = vmul.f32 %v240, %v1896
        %v1910 = vmul.f32 %v241, %v1896
        %v1911 = vmul.f32 %v242, %v1896
        %v1912 = vmul.f32 %v243, %v1896
        %v1913 = vmul.f32 %v244, %v1896
        %v1914 = vmul.f32 %v245, %v1896
        %v1915 = vmul.f32 %v246, %v1896
        %v1916 = vmul.f32 %v247, %v1896
        %v1917 = vmul.f32 %v248, %v1896
        %v1918 = vmul.f32 %v249, %v1896
        %v1919 = vmul.f32 %v250, %v1896
        %v1920 = vmul.f32 %v251, %v1896
        %v1921 = vmul.f32 %v252, %v1896
        %v1922 = vmul.f32 %v253, %v1896
        %v1923 = vmul.f32 %v254, %v1896
        %v1924 = vmul.f32 %v255, %v1896
        %v1925 = vmul.f32 %v256, %v1896
        %v1926 = vmul.f32 %v257, %v1896
        %v1927 = vmul.f32 %v258, %v1896
        %v1928 = vmul.f32 %v259, %v1896
        %v1929 = vmul.f32 %v260, %v1896
        %v1930 = vmul.f32 %v261, %v1896
        %v1931 = vmul.f32 %v262, %v1896
        %v1932 = vmul.f32 %v263, %v1896
        %v1933 = vmul.f32 %v264, %v1896
        %v1934 = vmul.f32 %v265, %v1896
        %v1935 = vmul.f32 %v266, %v1896
        %v1936 = vmul.f32 %v267, %v1896
        %v1937 = vmul.f32 %v268, %v1896
        %v1938 = vmul.f32 %v269, %v1896
        %v1939 = vmul.f32 %v270, %v1896
        %v1940 = vmul.f32 %v271, %v1896
        %v1941 = vmul.f32 %v272, %v1896
        %v1942 = vmul.f32 %v273, %v1896
        %v1943 = vmul.f32 %v274, %v1896
        %v1944 = vmul.f32 %v275, %v1896
        %v1993 = vrot.slane %v1897, 3
        %v1994 = vrot.slane %v1898, 3
        %v1995 = vsel %vm947, %v1993, %v1994
        %v1996 = vrot.slane %v1899, 3
        %v1997 = vsel %vm947, %v1994, %v1996
        %v1998 = vrot.slane %v1900, 3
        %v1999 = vrot.slane %v1901, 3
        %v2000 = vsel %vm947, %v1998, %v1999
        %v2001 = vrot.slane %v1902, 3
        %v2002 = vsel %vm947, %v1999, %v2001
        %v2003 = vrot.slane %v1903, 3
        %v2004 = vrot.slane %v1904, 3
        %v2005 = vsel %vm947, %v2003, %v2004
        %v2006 = vrot.slane %v1905, 3
        %v2007 = vsel %vm947, %v2004, %v2006
        %v2008 = vrot.slane %v1906, 3
        %v2009 = vrot.slane %v1907, 3
        %v2010 = vsel %vm947, %v2008, %v2009
        %v2011 = vrot.slane %v1908, 3
        %v2012 = vsel %vm947, %v2009, %v2011
        %v2013 = vrot.slane %v1909, 3
        %v2014 = vrot.slane %v1910, 3
        %v2015 = vsel %vm947, %v2013, %v2014
        %v2016 = vrot.slane %v1911, 3
        %v2017 = vsel %vm947, %v2014, %v2016
        %v2018 = vrot.slane %v1912, 3
        %v2019 = vrot.slane %v1913, 3
        %v2020 = vsel %vm947, %v2018, %v2019
        %v2021 = vrot.slane %v1914, 3
        %v2022 = vsel %vm947, %v2019, %v2021
        %v2023 = vrot.slane %v1915, 3
        %v2024 = vrot.slane %v1916, 3
        %v2025 = vsel %vm947, %v2023, %v2024
        %v2026 = vrot.slane %v1917, 3
        %v2027 = vsel %vm947, %v2024, %v2026
        %v2028 = vrot.slane %v1918, 3
        %v2029 = vrot.slane %v1919, 3
        %v2030 = vsel %vm947, %v2028, %v2029
        %v2031 = vrot.slane %v1920, 3
        %v2032 = vsel %vm947, %v2029, %v2031
        %v2033 = vrot.slane %v1921, 3
        %v2034 = vrot.slane %v1922, 3
        %v2035 = vsel %vm947, %v2033, %v2034
        %v2036 = vrot.slane %v1923, 3
        %v2037 = vsel %vm947, %v2034, %v2036
        %v2038 = vrot.slane %v1924, 3
        %v2039 = vrot.slane %v1925, 3
        %v2040 = vsel %vm947, %v2038, %v2039
        %v2041 = vrot.slane %v1926, 3
        %v2042 = vsel %vm947, %v2039, %v2041
        %v2043 = vrot.slane %v1927, 3
        %v2044 = vrot.slane %v1928, 3
        %v2045 = vsel %vm947, %v2043, %v2044
        %v2046 = vrot.slane %v1929, 3
        %v2047 = vsel %vm947, %v2044, %v2046
        %v2048 = vrot.slane %v1930, 3
        %v2049 = vrot.slane %v1931, 3
        %v2050 = vsel %vm947, %v2048, %v2049
        %v2051 = vrot.slane %v1932, 3
        %v2052 = vsel %vm947, %v2049, %v2051
        %v2053 = vrot.slane %v1933, 3
        %v2054 = vrot.slane %v1934, 3
        %v2055 = vsel %vm947, %v2053, %v2054
        %v2056 = vrot.slane %v1935, 3
        %v2057 = vsel %vm947, %v2054, %v2056
        %v2058 = vrot.slane %v1936, 3
        %v2059 = vrot.slane %v1937, 3
        %v2060 = vsel %vm947, %v2058, %v2059
        %v2061 = vrot.slane %v1938, 3
        %v2062 = vsel %vm947, %v2059, %v2061
        %v2063 = vrot.slane %v1939, 3
        %v2064 = vrot.slane %v1940, 3
        %v2065 = vsel %vm947, %v2063, %v2064
        %v2066 = vrot.slane %v1941, 3
        %v2067 = vsel %vm947, %v2064, %v2066
        %v2068 = vrot.slane %v1942, 3
        %v2069 = vrot.slane %v1943, 3
        %v2070 = vsel %vm947, %v2068, %v2069
        %v2071 = vrot.slane %v1944, 3
        %v2072 = vsel %vm947, %v2069, %v2071
        %v2105 = vadd.f32 %v1861, %v1995
        %v2106 = vadd.f32 %v1862, %v1997
        %v2107 = vadd.f32 %v1863, %v2000
        %v2108 = vadd.f32 %v1864, %v2002
        %v2109 = vadd.f32 %v1865, %v2005
        %v2110 = vadd.f32 %v1866, %v2007
        %v2111 = vadd.f32 %v1867, %v2010
        %v2112 = vadd.f32 %v1868, %v2012
        %v2113 = vadd.f32 %v1869, %v2015
        %v2114 = vadd.f32 %v1870, %v2017
        %v2115 = vadd.f32 %v1871, %v2020
        %v2116 = vadd.f32 %v1872, %v2022
        %v2117 = vadd.f32 %v1873, %v2025
        %v2118 = vadd.f32 %v1874, %v2027
        %v2119 = vadd.f32 %v1875, %v2030
        %v2120 = vadd.f32 %v1876, %v2032
        %v2121 = vadd.f32 %v1877, %v2035
        %v2122 = vadd.f32 %v1878, %v2037
        %v2123 = vadd.f32 %v1879, %v2040
        %v2124 = vadd.f32 %v1880, %v2042
        %v2125 = vadd.f32 %v1881, %v2045
        %v2126 = vadd.f32 %v1882, %v2047
        %v2127 = vadd.f32 %v1883, %v2050
        %v2128 = vadd.f32 %v1884, %v2052
        %v2129 = vadd.f32 %v1885, %v2055
        %v2130 = vadd.f32 %v1886, %v2057
        %v2131 = vadd.f32 %v1887, %v2060
        %v2132 = vadd.f32 %v1888, %v2062
        %v2133 = vadd.f32 %v1889, %v2065
        %v2134 = vadd.f32 %v1890, %v2067
        %v2135 = vadd.f32 %v1891, %v2070
        %v2136 = vadd.f32 %v1892, %v2072
        %v2137 = vlaneseq
        %v2138 = vshrl.u32 %v2137, 7
        %v2139 = vsub.s32 1, %v2138
        %v2140 = vrot.slane %v286, %v2139
        %v2141 = vmul.f32 %v228, %v2140
        %v2142 = vmul.f32 %v229, %v2140
        %v2143 = vmul.f32 %v230, %v2140
        %v2144 = vmul.f32 %v231, %v2140
        %v2145 = vmul.f32 %v232, %v2140
        %v2146 = vmul.f32 %v233, %v2140
        %v2147 = vmul.f32 %v234, %v2140
        %v2148 = vmul.f32 %v235, %v2140
        %v2149 = vmul.f32 %v236, %v2140
        %v2150 = vmul.f32 %v237, %v2140
        %v2151 = vmul.f32 %v238, %v2140
        %v2152 = vmul.f32 %v239, %v2140
        %v2153 = vmul.f32 %v240, %v2140
        %v2154 = vmul.f32 %v241, %v2140
        %v2155 = vmul.f32 %v242, %v2140
        %v2156 = vmul.f32 %v243, %v2140
        %v2157 = vmul.f32 %v244, %v2140
        %v2158 = vmul.f32 %v245, %v2140
        %v2159 = vmul.f32 %v246, %v2140
        %v2160 = vmul.f32 %v247, %v2140
        %v2161 = vmul.f32 %v248, %v2140
        %v2162 = vmul.f32 %v249, %v2140
        %v2163 = vmul.f32 %v250, %v2140
        %v2164 = vmul.f32 %v251, %v2140
        %v2165 = vmul.f32 %v252, %v2140
        %v2166 = vmul.f32 %v253, %v2140
        %v2167 = vmul.f32 %v254, %v2140
        %v2168 = vmul.f32 %v255, %v2140
        %v2169 = vmul.f32 %v256, %v2140
        %v2170 = vmul.f32 %v257, %v2140
        %v2171 = vmul.f32 %v258, %v2140
        %v2172 = vmul.f32 %v259, %v2140
        %v2173 = vmul.f32 %v260, %v2140
        %v2174 = vmul.f32 %v261, %v2140
        %v2175 = vmul.f32 %v262, %v2140
        %v2176 = vmul.f32 %v263, %v2140
        %v2177 = vmul.f32 %v264, %v2140
        %v2178 = vmul.f32 %v265, %v2140
        %v2179 = vmul.f32 %v266, %v2140
        %v2180 = vmul.f32 %v267, %v2140
        %v2181 = vmul.f32 %v268, %v2140
        %v2182 = vmul.f32 %v269, %v2140
        %v2183 = vmul.f32 %v270, %v2140
        %v2184 = vmul.f32 %v271, %v2140
        %v2185 = vmul.f32 %v272, %v2140
        %v2186 = vmul.f32 %v273, %v2140
        %v2187 = vmul.f32 %v274, %v2140
        %v2188 = vmul.f32 %v275, %v2140
        %v2237 = vrot.slane %v2141, 4
        %v2238 = vrot.slane %v2142, 4
        %v2239 = vsel %vm1192, %v2237, %v2238
        %v2240 = vrot.slane %v2143, 4
        %v2241 = vsel %vm1192, %v2238, %v2240
        %v2242 = vrot.slane %v2144, 4
        %v2243 = vrot.slane %v2145, 4
        %v2244 = vsel %vm1192, %v2242, %v2243
        %v2245 = vrot.slane %v2146, 4
        %v2246 = vsel %vm1192, %v2243, %v2245
        %v2247 = vrot.slane %v2147, 4
        %v2248 = vrot.slane %v2148, 4
        %v2249 = vsel %vm1192, %v2247, %v2248
        %v2250 = vrot.slane %v2149, 4
        %v2251 = vsel %vm1192, %v2248, %v2250
        %v2252 = vrot.slane %v2150, 4
        %v2253 = vrot.slane %v2151, 4
        %v2254 = vsel %vm1192, %v2252, %v2253
        %v2255 = vrot.slane %v2152, 4
        %v2256 = vsel %vm1192, %v2253, %v2255
        %v2257 = vrot.slane %v2153, 4
        %v2258 = vrot.slane %v2154, 4
        %v2259 = vsel %vm1192, %v2257, %v2258
        %v2260 = vrot.slane %v2155, 4
        %v2261 = vsel %vm1192, %v2258, %v2260
        %v2262 = vrot.slane %v2156, 4
        %v2263 = vrot.slane %v2157, 4
        %v2264 = vsel %vm1192, %v2262, %v2263
        %v2265 = vrot.slane %v2158, 4
        %v2266 = vsel %vm1192, %v2263, %v2265
        %v2267 = vrot.slane %v2159, 4
        %v2268 = vrot.slane %v2160, 4
        %v2269 = vsel %vm1192, %v2267, %v2268
        %v2270 = vrot.slane %v2161, 4
        %v2271 = vsel %vm1192, %v2268, %v2270
        %v2272 = vrot.slane %v2162, 4
        %v2273 = vrot.slane %v2163, 4
        %v2274 = vsel %vm1192, %v2272, %v2273
        %v2275 = vrot.slane %v2164, 4
        %v2276 = vsel %vm1192, %v2273, %v2275
        %v2277 = vrot.slane %v2165, 4
        %v2278 = vrot.slane %v2166, 4
        %v2279 = vsel %vm1192, %v2277, %v2278
        %v2280 = vrot.slane %v2167, 4
        %v2281 = vsel %vm1192, %v2278, %v2280
        %v2282 = vrot.slane %v2168, 4
        %v2283 = vrot.slane %v2169, 4
        %v2284 = vsel %vm1192, %v2282, %v2283
        %v2285 = vrot.slane %v2170, 4
        %v2286 = vsel %vm1192, %v2283, %v2285
        %v2287 = vrot.slane %v2171, 4
        %v2288 = vrot.slane %v2172, 4
        %v2289 = vsel %vm1192, %v2287, %v2288
        %v2290 = vrot.slane %v2173, 4
        %v2291 = vsel %vm1192, %v2288, %v2290
        %v2292 = vrot.slane %v2174, 4
        %v2293 = vrot.slane %v2175, 4
        %v2294 = vsel %vm1192, %v2292, %v2293
        %v2295 = vrot.slane %v2176, 4
        %v2296 = vsel %vm1192, %v2293, %v2295
        %v2297 = vrot.slane %v2177, 4
        %v2298 = vrot.slane %v2178, 4
        %v2299 = vsel %vm1192, %v2297, %v2298
        %v2300 = vrot.slane %v2179, 4
        %v2301 = vsel %vm1192, %v2298, %v2300
        %v2302 = vrot.slane %v2180, 4
        %v2303 = vrot.slane %v2181, 4
        %v2304 = vsel %vm1192, %v2302, %v2303
        %v2305 = vrot.slane %v2182, 4
        %v2306 = vsel %vm1192, %v2303, %v2305
        %v2307 = vrot.slane %v2183, 4
        %v2308 = vrot.slane %v2184, 4
        %v2309 = vsel %vm1192, %v2307, %v2308
        %v2310 = vrot.slane %v2185, 4
        %v2311 = vsel %vm1192, %v2308, %v2310
        %v2312 = vrot.slane %v2186, 4
        %v2313 = vrot.slane %v2187, 4
        %v2314 = vsel %vm1192, %v2312, %v2313
        %v2315 = vrot.slane %v2188, 4
        %v2316 = vsel %vm1192, %v2313, %v2315
        %v2349 = vadd.f32 %v2105, %v2239
        %v2350 = vadd.f32 %v2106, %v2241
        %v2351 = vadd.f32 %v2107, %v2244
        %v2352 = vadd.f32 %v2108, %v2246
        %v2353 = vadd.f32 %v2109, %v2249
        %v2354 = vadd.f32 %v2110, %v2251
        %v2355 = vadd.f32 %v2111, %v2254
        %v2356 = vadd.f32 %v2112, %v2256
        %v2357 = vadd.f32 %v2113, %v2259
        %v2358 = vadd.f32 %v2114, %v2261
        %v2359 = vadd.f32 %v2115, %v2264
        %v2360 = vadd.f32 %v2116, %v2266
        %v2361 = vadd.f32 %v2117, %v2269
        %v2362 = vadd.f32 %v2118, %v2271
        %v2363 = vadd.f32 %v2119, %v2274
        %v2364 = vadd.f32 %v2120, %v2276
        %v2365 = vadd.f32 %v2121, %v2279
        %v2366 = vadd.f32 %v2122, %v2281
        %v2367 = vadd.f32 %v2123, %v2284
        %v2368 = vadd.f32 %v2124, %v2286
        %v2369 = vadd.f32 %v2125, %v2289
        %v2370 = vadd.f32 %v2126, %v2291
        %v2371 = vadd.f32 %v2127, %v2294
        %v2372 = vadd.f32 %v2128, %v2296
        %v2373 = vadd.f32 %v2129, %v2299
        %v2374 = vadd.f32 %v2130, %v2301
        %v2375 = vadd.f32 %v2131, %v2304
        %v2376 = vadd.f32 %v2132, %v2306
        %v2377 = vadd.f32 %v2133, %v2309
        %v2378 = vadd.f32 %v2134, %v2311
        %v2379 = vadd.f32 %v2135, %v2314
        %v2380 = vadd.f32 %v2136, %v2316
        %v2381 = vlaneseq
        %v2382 = vshrl.u32 %v2381, 7
        %v2383 = vsub.s32 2, %v2382
        %v2384 = vrot.slane %v286, %v2383
        %v2385 = vmul.f32 %v231, %v2384
        %v2386 = vmul.f32 %v232, %v2384
        %v2387 = vmul.f32 %v234, %v2384
        %v2388 = vmul.f32 %v235, %v2384
        %v2389 = vmul.f32 %v237, %v2384
        %v2390 = vmul.f32 %v238, %v2384
        %v2391 = vmul.f32 %v240, %v2384
        %v2392 = vmul.f32 %v241, %v2384
        %v2393 = vmul.f32 %v243, %v2384
        %v2394 = vmul.f32 %v244, %v2384
        %v2395 = vmul.f32 %v246, %v2384
        %v2396 = vmul.f32 %v247, %v2384
        %v2397 = vmul.f32 %v249, %v2384
        %v2398 = vmul.f32 %v250, %v2384
        %v2399 = vmul.f32 %v252, %v2384
        %v2400 = vmul.f32 %v253, %v2384
        %v2401 = vmul.f32 %v255, %v2384
        %v2402 = vmul.f32 %v256, %v2384
        %v2403 = vmul.f32 %v258, %v2384
        %v2404 = vmul.f32 %v259, %v2384
        %v2405 = vmul.f32 %v261, %v2384
        %v2406 = vmul.f32 %v262, %v2384
        %v2407 = vmul.f32 %v264, %v2384
        %v2408 = vmul.f32 %v265, %v2384
        %v2409 = vmul.f32 %v267, %v2384
        %v2410 = vmul.f32 %v268, %v2384
        %v2411 = vmul.f32 %v270, %v2384
        %v2412 = vmul.f32 %v271, %v2384
        %v2413 = vmul.f32 %v273, %v2384
        %v2414 = vmul.f32 %v274, %v2384
        %v2415 = vmul.f32 %v276, %v2384
        %v2416 = vmul.f32 %v277, %v2384
        %v2417 = vadd.f32 %v2349, %v2385
        %v2418 = vadd.f32 %v2350, %v2386
        %v2419 = vadd.f32 %v2351, %v2387
        %v2420 = vadd.f32 %v2352, %v2388
        %v2421 = vadd.f32 %v2353, %v2389
        %v2422 = vadd.f32 %v2354, %v2390
        %v2423 = vadd.f32 %v2355, %v2391
        %v2424 = vadd.f32 %v2356, %v2392
        %v2425 = vadd.f32 %v2357, %v2393
        %v2426 = vadd.f32 %v2358, %v2394
        %v2427 = vadd.f32 %v2359, %v2395
        %v2428 = vadd.f32 %v2360, %v2396
        %v2429 = vadd.f32 %v2361, %v2397
        %v2430 = vadd.f32 %v2362, %v2398
        %v2431 = vadd.f32 %v2363, %v2399
        %v2432 = vadd.f32 %v2364, %v2400
        %v2433 = vadd.f32 %v2365, %v2401
        %v2434 = vadd.f32 %v2366, %v2402
        %v2435 = vadd.f32 %v2367, %v2403
        %v2436 = vadd.f32 %v2368, %v2404
        %v2437 = vadd.f32 %v2369, %v2405
        %v2438 = vadd.f32 %v2370, %v2406
        %v2439 = vadd.f32 %v2371, %v2407
        %v2440 = vadd.f32 %v2372, %v2408
        %v2441 = vadd.f32 %v2373, %v2409
        %v2442 = vadd.f32 %v2374, %v2410
        %v2443 = vadd.f32 %v2375, %v2411
        %v2444 = vadd.f32 %v2376, %v2412
        %v2445 = vadd.f32 %v2377, %v2413
        %v2446 = vadd.f32 %v2378, %v2414
        %v2447 = vadd.f32 %v2379, %v2415
        %v2448 = vadd.f32 %v2380, %v2416
        %v2449 = vlaneseq
        %v2450 = vshrl.u32 %v2449, 7
        %v2451 = vsub.s32 3, %v2450
        %v2452 = vrot.slane %v286, %v2451
        %v2453 = vmul.f32 %v231, %v2452
        %v2454 = vmul.f32 %v232, %v2452
        %v2455 = vmul.f32 %v233, %v2452
        %v2456 = vmul.f32 %v234, %v2452
        %v2457 = vmul.f32 %v235, %v2452
        %v2458 = vmul.f32 %v236, %v2452
        %v2459 = vmul.f32 %v237, %v2452
        %v2460 = vmul.f32 %v238, %v2452
        %v2461 = vmul.f32 %v239, %v2452
        %v2462 = vmul.f32 %v240, %v2452
        %v2463 = vmul.f32 %v241, %v2452
        %v2464 = vmul.f32 %v242, %v2452
        %v2465 = vmul.f32 %v243, %v2452
        %v2466 = vmul.f32 %v244, %v2452
        %v2467 = vmul.f32 %v245, %v2452
        %v2468 = vmul.f32 %v246, %v2452
        %v2469 = vmul.f32 %v247, %v2452
        %v2470 = vmul.f32 %v248, %v2452
        %v2471 = vmul.f32 %v249, %v2452
        %v2472 = vmul.f32 %v250, %v2452
        %v2473 = vmul.f32 %v251, %v2452
        %v2474 = vmul.f32 %v252, %v2452
        %v2475 = vmul.f32 %v253, %v2452
        %v2476 = vmul.f32 %v254, %v2452
        %v2477 = vmul.f32 %v255, %v2452
        %v2478 = vmul.f32 %v256, %v2452
        %v2479 = vmul.f32 %v257, %v2452
        %v2480 = vmul.f32 %v258, %v2452
        %v2481 = vmul.f32 %v259, %v2452
        %v2482 = vmul.f32 %v260, %v2452
        %v2483 = vmul.f32 %v261, %v2452
        %v2484 = vmul.f32 %v262, %v2452
        %v2485 = vmul.f32 %v263, %v2452
        %v2486 = vmul.f32 %v264, %v2452
        %v2487 = vmul.f32 %v265, %v2452
        %v2488 = vmul.f32 %v266, %v2452
        %v2489 = vmul.f32 %v267, %v2452
        %v2490 = vmul.f32 %v268, %v2452
        %v2491 = vmul.f32 %v269, %v2452
        %v2492 = vmul.f32 %v270, %v2452
        %v2493 = vmul.f32 %v271, %v2452
        %v2494 = vmul.f32 %v272, %v2452
        %v2495 = vmul.f32 %v273, %v2452
        %v2496 = vmul.f32 %v274, %v2452
        %v2497 = vmul.f32 %v275, %v2452
        %v2498 = vmul.f32 %v276, %v2452
        %v2499 = vmul.f32 %v277, %v2452
        %v2500 = vmul.f32 %v278, %v2452
        %v2549 = vrot.slane %v2453, 1
        %v2550 = vrot.slane %v2454, 1
        %v2551 = vsel %vm457, %v2549, %v2550
        %v2552 = vrot.slane %v2455, 1
        %v2553 = vsel %vm457, %v2550, %v2552
        %v2554 = vrot.slane %v2456, 1
        %v2555 = vrot.slane %v2457, 1
        %v2556 = vsel %vm457, %v2554, %v2555
        %v2557 = vrot.slane %v2458, 1
        %v2558 = vsel %vm457, %v2555, %v2557
        %v2559 = vrot.slane %v2459, 1
        %v2560 = vrot.slane %v2460, 1
        %v2561 = vsel %vm457, %v2559, %v2560
        %v2562 = vrot.slane %v2461, 1
        %v2563 = vsel %vm457, %v2560, %v2562
        %v2564 = vrot.slane %v2462, 1
        %v2565 = vrot.slane %v2463, 1
        %v2566 = vsel %vm457, %v2564, %v2565
        %v2567 = vrot.slane %v2464, 1
        %v2568 = vsel %vm457, %v2565, %v2567
        %v2569 = vrot.slane %v2465, 1
        %v2570 = vrot.slane %v2466, 1
        %v2571 = vsel %vm457, %v2569, %v2570
        %v2572 = vrot.slane %v2467, 1
        %v2573 = vsel %vm457, %v2570, %v2572
        %v2574 = vrot.slane %v2468, 1
        %v2575 = vrot.slane %v2469, 1
        %v2576 = vsel %vm457, %v2574, %v2575
        %v2577 = vrot.slane %v2470, 1
        %v2578 = vsel %vm457, %v2575, %v2577
        %v2579 = vrot.slane %v2471, 1
        %v2580 = vrot.slane %v2472, 1
        %v2581 = vsel %vm457, %v2579, %v2580
        %v2582 = vrot.slane %v2473, 1
        %v2583 = vsel %vm457, %v2580, %v2582
        %v2584 = vrot.slane %v2474, 1
        %v2585 = vrot.slane %v2475, 1
        %v2586 = vsel %vm457, %v2584, %v2585
        %v2587 = vrot.slane %v2476, 1
        %v2588 = vsel %vm457, %v2585, %v2587
        %v2589 = vrot.slane %v2477, 1
        %v2590 = vrot.slane %v2478, 1
        %v2591 = vsel %vm457, %v2589, %v2590
        %v2592 = vrot.slane %v2479, 1
        %v2593 = vsel %vm457, %v2590, %v2592
        %v2594 = vrot.slane %v2480, 1
        %v2595 = vrot.slane %v2481, 1
        %v2596 = vsel %vm457, %v2594, %v2595
        %v2597 = vrot.slane %v2482, 1
        %v2598 = vsel %vm457, %v2595, %v2597
        %v2599 = vrot.slane %v2483, 1
        %v2600 = vrot.slane %v2484, 1
        %v2601 = vsel %vm457, %v2599, %v2600
        %v2602 = vrot.slane %v2485, 1
        %v2603 = vsel %vm457, %v2600, %v2602
        %v2604 = vrot.slane %v2486, 1
        %v2605 = vrot.slane %v2487, 1
        %v2606 = vsel %vm457, %v2604, %v2605
        %v2607 = vrot.slane %v2488, 1
        %v2608 = vsel %vm457, %v2605, %v2607
        %v2609 = vrot.slane %v2489, 1
        %v2610 = vrot.slane %v2490, 1
        %v2611 = vsel %vm457, %v2609, %v2610
        %v2612 = vrot.slane %v2491, 1
        %v2613 = vsel %vm457, %v2610, %v2612
        %v2614 = vrot.slane %v2492, 1
        %v2615 = vrot.slane %v2493, 1
        %v2616 = vsel %vm457, %v2614, %v2615
        %v2617 = vrot.slane %v2494, 1
        %v2618 = vsel %vm457, %v2615, %v2617
        %v2619 = vrot.slane %v2495, 1
        %v2620 = vrot.slane %v2496, 1
        %v2621 = vsel %vm457, %v2619, %v2620
        %v2622 = vrot.slane %v2497, 1
        %v2623 = vsel %vm457, %v2620, %v2622
        %v2624 = vrot.slane %v2498, 1
        %v2625 = vrot.slane %v2499, 1
        %v2626 = vsel %vm457, %v2624, %v2625
        %v2627 = vrot.slane %v2500, 1
        %v2628 = vsel %vm457, %v2625, %v2627
        %v2661 = vadd.f32 %v2417, %v2551
        %v2662 = vadd.f32 %v2418, %v2553
        %v2663 = vadd.f32 %v2419, %v2556
        %v2664 = vadd.f32 %v2420, %v2558
        %v2665 = vadd.f32 %v2421, %v2561
        %v2666 = vadd.f32 %v2422, %v2563
        %v2667 = vadd.f32 %v2423, %v2566
        %v2668 = vadd.f32 %v2424, %v2568
        %v2669 = vadd.f32 %v2425, %v2571
        %v2670 = vadd.f32 %v2426, %v2573
        %v2671 = vadd.f32 %v2427, %v2576
        %v2672 = vadd.f32 %v2428, %v2578
        %v2673 = vadd.f32 %v2429, %v2581
        %v2674 = vadd.f32 %v2430, %v2583
        %v2675 = vadd.f32 %v2431, %v2586
        %v2676 = vadd.f32 %v2432, %v2588
        %v2677 = vadd.f32 %v2433, %v2591
        %v2678 = vadd.f32 %v2434, %v2593
        %v2679 = vadd.f32 %v2435, %v2596
        %v2680 = vadd.f32 %v2436, %v2598
        %v2681 = vadd.f32 %v2437, %v2601
        %v2682 = vadd.f32 %v2438, %v2603
        %v2683 = vadd.f32 %v2439, %v2606
        %v2684 = vadd.f32 %v2440, %v2608
        %v2685 = vadd.f32 %v2441, %v2611
        %v2686 = vadd.f32 %v2442, %v2613
        %v2687 = vadd.f32 %v2443, %v2616
        %v2688 = vadd.f32 %v2444, %v2618
        %v2689 = vadd.f32 %v2445, %v2621
        %v2690 = vadd.f32 %v2446, %v2623
        %v2691 = vadd.f32 %v2447, %v2626
        %v2692 = vadd.f32 %v2448, %v2628
        %v2693 = vlaneseq
        %v2694 = vshrl.u32 %v2693, 7
        %v2695 = vsub.s32 4, %v2694
        %v2696 = vrot.slane %v286, %v2695
        %v2697 = vmul.f32 %v231, %v2696
        %v2698 = vmul.f32 %v232, %v2696
        %v2699 = vmul.f32 %v233, %v2696
        %v2700 = vmul.f32 %v234, %v2696
        %v2701 = vmul.f32 %v235, %v2696
        %v2702 = vmul.f32 %v236, %v2696
        %v2703 = vmul.f32 %v237, %v2696
        %v2704 = vmul.f32 %v238, %v2696
        %v2705 = vmul.f32 %v239, %v2696
        %v2706 = vmul.f32 %v240, %v2696
        %v2707 = vmul.f32 %v241, %v2696
        %v2708 = vmul.f32 %v242, %v2696
        %v2709 = vmul.f32 %v243, %v2696
        %v2710 = vmul.f32 %v244, %v2696
        %v2711 = vmul.f32 %v245, %v2696
        %v2712 = vmul.f32 %v246, %v2696
        %v2713 = vmul.f32 %v247, %v2696
        %v2714 = vmul.f32 %v248, %v2696
        %v2715 = vmul.f32 %v249, %v2696
        %v2716 = vmul.f32 %v250, %v2696
        %v2717 = vmul.f32 %v251, %v2696
        %v2718 = vmul.f32 %v252, %v2696
        %v2719 = vmul.f32 %v253, %v2696
        %v2720 = vmul.f32 %v254, %v2696
        %v2721 = vmul.f32 %v255, %v2696
        %v2722 = vmul.f32 %v256, %v2696
        %v2723 = vmul.f32 %v257, %v2696
        %v2724 = vmul.f32 %v258, %v2696
        %v2725 = vmul.f32 %v259, %v2696
        %v2726 = vmul.f32 %v260, %v2696
        %v2727 = vmul.f32 %v261, %v2696
        %v2728 = vmul.f32 %v262, %v2696
        %v2729 = vmul.f32 %v263, %v2696
        %v2730 = vmul.f32 %v264, %v2696
        %v2731 = vmul.f32 %v265, %v2696
        %v2732 = vmul.f32 %v266, %v2696
        %v2733 = vmul.f32 %v267, %v2696
        %v2734 = vmul.f32 %v268, %v2696
        %v2735 = vmul.f32 %v269, %v2696
        %v2736 = vmul.f32 %v270, %v2696
        %v2737 = vmul.f32 %v271, %v2696
        %v2738 = vmul.f32 %v272, %v2696
        %v2739 = vmul.f32 %v273, %v2696
        %v2740 = vmul.f32 %v274, %v2696
        %v2741 = vmul.f32 %v275, %v2696
        %v2742 = vmul.f32 %v276, %v2696
        %v2743 = vmul.f32 %v277, %v2696
        %v2744 = vmul.f32 %v278, %v2696
        %v2793 = vrot.slane %v2697, 2
        %v2794 = vrot.slane %v2698, 2
        %v2795 = vsel %vm702, %v2793, %v2794
        %v2796 = vrot.slane %v2699, 2
        %v2797 = vsel %vm702, %v2794, %v2796
        %v2798 = vrot.slane %v2700, 2
        %v2799 = vrot.slane %v2701, 2
        %v2800 = vsel %vm702, %v2798, %v2799
        %v2801 = vrot.slane %v2702, 2
        %v2802 = vsel %vm702, %v2799, %v2801
        %v2803 = vrot.slane %v2703, 2
        %v2804 = vrot.slane %v2704, 2
        %v2805 = vsel %vm702, %v2803, %v2804
        %v2806 = vrot.slane %v2705, 2
        %v2807 = vsel %vm702, %v2804, %v2806
        %v2808 = vrot.slane %v2706, 2
        %v2809 = vrot.slane %v2707, 2
        %v2810 = vsel %vm702, %v2808, %v2809
        %v2811 = vrot.slane %v2708, 2
        %v2812 = vsel %vm702, %v2809, %v2811
        %v2813 = vrot.slane %v2709, 2
        %v2814 = vrot.slane %v2710, 2
        %v2815 = vsel %vm702, %v2813, %v2814
        %v2816 = vrot.slane %v2711, 2
        %v2817 = vsel %vm702, %v2814, %v2816
        %v2818 = vrot.slane %v2712, 2
        %v2819 = vrot.slane %v2713, 2
        %v2820 = vsel %vm702, %v2818, %v2819
        %v2821 = vrot.slane %v2714, 2
        %v2822 = vsel %vm702, %v2819, %v2821
        %v2823 = vrot.slane %v2715, 2
        %v2824 = vrot.slane %v2716, 2
        %v2825 = vsel %vm702, %v2823, %v2824
        %v2826 = vrot.slane %v2717, 2
        %v2827 = vsel %vm702, %v2824, %v2826
        %v2828 = vrot.slane %v2718, 2
        %v2829 = vrot.slane %v2719, 2
        %v2830 = vsel %vm702, %v2828, %v2829
        %v2831 = vrot.slane %v2720, 2
        %v2832 = vsel %vm702, %v2829, %v2831
        %v2833 = vrot.slane %v2721, 2
        %v2834 = vrot.slane %v2722, 2
        %v2835 = vsel %vm702, %v2833, %v2834
        %v2836 = vrot.slane %v2723, 2
        %v2837 = vsel %vm702, %v2834, %v2836
        %v2838 = vrot.slane %v2724, 2
        %v2839 = vrot.slane %v2725, 2
        %v2840 = vsel %vm702, %v2838, %v2839
        %v2841 = vrot.slane %v2726, 2
        %v2842 = vsel %vm702, %v2839, %v2841
        %v2843 = vrot.slane %v2727, 2
        %v2844 = vrot.slane %v2728, 2
        %v2845 = vsel %vm702, %v2843, %v2844
        %v2846 = vrot.slane %v2729, 2
        %v2847 = vsel %vm702, %v2844, %v2846
        %v2848 = vrot.slane %v2730, 2
        %v2849 = vrot.slane %v2731, 2
        %v2850 = vsel %vm702, %v2848, %v2849
        %v2851 = vrot.slane %v2732, 2
        %v2852 = vsel %vm702, %v2849, %v2851
        %v2853 = vrot.slane %v2733, 2
        %v2854 = vrot.slane %v2734, 2
        %v2855 = vsel %vm702, %v2853, %v2854
        %v2856 = vrot.slane %v2735, 2
        %v2857 = vsel %vm702, %v2854, %v2856
        %v2858 = vrot.slane %v2736, 2
        %v2859 = vrot.slane %v2737, 2
        %v2860 = vsel %vm702, %v2858, %v2859
        %v2861 = vrot.slane %v2738, 2
        %v2862 = vsel %vm702, %v2859, %v2861
        %v2863 = vrot.slane %v2739, 2
        %v2864 = vrot.slane %v2740, 2
        %v2865 = vsel %vm702, %v2863, %v2864
        %v2866 = vrot.slane %v2741, 2
        %v2867 = vsel %vm702, %v2864, %v2866
        %v2868 = vrot.slane %v2742, 2
        %v2869 = vrot.slane %v2743, 2
        %v2870 = vsel %vm702, %v2868, %v2869
        %v2871 = vrot.slane %v2744, 2
        %v2872 = vsel %vm702, %v2869, %v2871
        %v2905 = vadd.f32 %v2661, %v2795
        %v2906 = vadd.f32 %v2662, %v2797
        %v2907 = vadd.f32 %v2663, %v2800
        %v2908 = vadd.f32 %v2664, %v2802
        %v2909 = vadd.f32 %v2665, %v2805
        %v2910 = vadd.f32 %v2666, %v2807
        %v2911 = vadd.f32 %v2667, %v2810
        %v2912 = vadd.f32 %v2668, %v2812
        %v2913 = vadd.f32 %v2669, %v2815
        %v2914 = vadd.f32 %v2670, %v2817
        %v2915 = vadd.f32 %v2671, %v2820
        %v2916 = vadd.f32 %v2672, %v2822
        %v2917 = vadd.f32 %v2673, %v2825
        %v2918 = vadd.f32 %v2674, %v2827
        %v2919 = vadd.f32 %v2675, %v2830
        %v2920 = vadd.f32 %v2676, %v2832
        %v2921 = vadd.f32 %v2677, %v2835
        %v2922 = vadd.f32 %v2678, %v2837
        %v2923 = vadd.f32 %v2679, %v2840
        %v2924 = vadd.f32 %v2680, %v2842
        %v2925 = vadd.f32 %v2681, %v2845
        %v2926 = vadd.f32 %v2682, %v2847
        %v2927 = vadd.f32 %v2683, %v2850
        %v2928 = vadd.f32 %v2684, %v2852
        %v2929 = vadd.f32 %v2685, %v2855
        %v2930 = vadd.f32 %v2686, %v2857
        %v2931 = vadd.f32 %v2687, %v2860
        %v2932 = vadd.f32 %v2688, %v2862
        %v2933 = vadd.f32 %v2689, %v2865
        %v2934 = vadd.f32 %v2690, %v2867
        %v2935 = vadd.f32 %v2691, %v2870
        %v2936 = vadd.f32 %v2692, %v2872
        %v2937 = vlaneseq
        %v2938 = vshrl.u32 %v2937, 7
        %v2939 = vsub.s32 5, %v2938
        %v2940 = vrot.slane %v286, %v2939
        %v2941 = vmul.f32 %v231, %v2940
        %v2942 = vmul.f32 %v232, %v2940
        %v2943 = vmul.f32 %v233, %v2940
        %v2944 = vmul.f32 %v234, %v2940
        %v2945 = vmul.f32 %v235, %v2940
        %v2946 = vmul.f32 %v236, %v2940
        %v2947 = vmul.f32 %v237, %v2940
        %v2948 = vmul.f32 %v238, %v2940
        %v2949 = vmul.f32 %v239, %v2940
        %v2950 = vmul.f32 %v240, %v2940
        %v2951 = vmul.f32 %v241, %v2940
        %v2952 = vmul.f32 %v242, %v2940
        %v2953 = vmul.f32 %v243, %v2940
        %v2954 = vmul.f32 %v244, %v2940
        %v2955 = vmul.f32 %v245, %v2940
        %v2956 = vmul.f32 %v246, %v2940
        %v2957 = vmul.f32 %v247, %v2940
        %v2958 = vmul.f32 %v248, %v2940
        %v2959 = vmul.f32 %v249, %v2940
        %v2960 = vmul.f32 %v250, %v2940
        %v2961 = vmul.f32 %v251, %v2940
        %v2962 = vmul.f32 %v252, %v2940
        %v2963 = vmul.f32 %v253, %v2940
        %v2964 = vmul.f32 %v254, %v2940
        %v2965 = vmul.f32 %v255, %v2940
        %v2966 = vmul.f32 %v256, %v2940
        %v2967 = vmul.f32 %v257, %v2940
        %v2968 = vmul.f32 %v258, %v2940
        %v2969 = vmul.f32 %v259, %v2940
        %v2970 = vmul.f32 %v260, %v2940
        %v2971 = vmul.f32 %v261, %v2940
        %v2972 = vmul.f32 %v262, %v2940
        %v2973 = vmul.f32 %v263, %v2940
        %v2974 = vmul.f32 %v264, %v2940
        %v2975 = vmul.f32 %v265, %v2940
        %v2976 = vmul.f32 %v266, %v2940
        %v2977 = vmul.f32 %v267, %v2940
        %v2978 = vmul.f32 %v268, %v2940
        %v2979 = vmul.f32 %v269, %v2940
        %v2980 = vmul.f32 %v270, %v2940
        %v2981 = vmul.f32 %v271, %v2940
        %v2982 = vmul.f32 %v272, %v2940
        %v2983 = vmul.f32 %v273, %v2940
        %v2984 = vmul.f32 %v274, %v2940
        %v2985 = vmul.f32 %v275, %v2940
        %v2986 = vmul.f32 %v276, %v2940
        %v2987 = vmul.f32 %v277, %v2940
        %v2988 = vmul.f32 %v278, %v2940
        %v3037 = vrot.slane %v2941, 3
        %v3038 = vrot.slane %v2942, 3
        %v3039 = vsel %vm947, %v3037, %v3038
        %v3040 = vrot.slane %v2943, 3
        %v3041 = vsel %vm947, %v3038, %v3040
        %v3042 = vrot.slane %v2944, 3
        %v3043 = vrot.slane %v2945, 3
        %v3044 = vsel %vm947, %v3042, %v3043
        %v3045 = vrot.slane %v2946, 3
        %v3046 = vsel %vm947, %v3043, %v3045
        %v3047 = vrot.slane %v2947, 3
        %v3048 = vrot.slane %v2948, 3
        %v3049 = vsel %vm947, %v3047, %v3048
        %v3050 = vrot.slane %v2949, 3
        %v3051 = vsel %vm947, %v3048, %v3050
        %v3052 = vrot.slane %v2950, 3
        %v3053 = vrot.slane %v2951, 3
        %v3054 = vsel %vm947, %v3052, %v3053
        %v3055 = vrot.slane %v2952, 3
        %v3056 = vsel %vm947, %v3053, %v3055
        %v3057 = vrot.slane %v2953, 3
        %v3058 = vrot.slane %v2954, 3
        %v3059 = vsel %vm947, %v3057, %v3058
        %v3060 = vrot.slane %v2955, 3
        %v3061 = vsel %vm947, %v3058, %v3060
        %v3062 = vrot.slane %v2956, 3
        %v3063 = vrot.slane %v2957, 3
        %v3064 = vsel %vm947, %v3062, %v3063
        %v3065 = vrot.slane %v2958, 3
        %v3066 = vsel %vm947, %v3063, %v3065
        %v3067 = vrot.slane %v2959, 3
        %v3068 = vrot.slane %v2960, 3
        %v3069 = vsel %vm947, %v3067, %v3068
        %v3070 = vrot.slane %v2961, 3
        %v3071 = vsel %vm947, %v3068, %v3070
        %v3072 = vrot.slane %v2962, 3
        %v3073 = vrot.slane %v2963, 3
        %v3074 = vsel %vm947, %v3072, %v3073
        %v3075 = vrot.slane %v2964, 3
        %v3076 = vsel %vm947, %v3073, %v3075
        %v3077 = vrot.slane %v2965, 3
        %v3078 = vrot.slane %v2966, 3
        %v3079 = vsel %vm947, %v3077, %v3078
        %v3080 = vrot.slane %v2967, 3
        %v3081 = vsel %vm947, %v3078, %v3080
        %v3082 = vrot.slane %v2968, 3
        %v3083 = vrot.slane %v2969, 3
        %v3084 = vsel %vm947, %v3082, %v3083
        %v3085 = vrot.slane %v2970, 3
        %v3086 = vsel %vm947, %v3083, %v3085
        %v3087 = vrot.slane %v2971, 3
        %v3088 = vrot.slane %v2972, 3
        %v3089 = vsel %vm947, %v3087, %v3088
        %v3090 = vrot.slane %v2973, 3
        %v3091 = vsel %vm947, %v3088, %v3090
        %v3092 = vrot.slane %v2974, 3
        %v3093 = vrot.slane %v2975, 3
        %v3094 = vsel %vm947, %v3092, %v3093
        %v3095 = vrot.slane %v2976, 3
        %v3096 = vsel %vm947, %v3093, %v3095
        %v3097 = vrot.slane %v2977, 3
        %v3098 = vrot.slane %v2978, 3
        %v3099 = vsel %vm947, %v3097, %v3098
        %v3100 = vrot.slane %v2979, 3
        %v3101 = vsel %vm947, %v3098, %v3100
        %v3102 = vrot.slane %v2980, 3
        %v3103 = vrot.slane %v2981, 3
        %v3104 = vsel %vm947, %v3102, %v3103
        %v3105 = vrot.slane %v2982, 3
        %v3106 = vsel %vm947, %v3103, %v3105
        %v3107 = vrot.slane %v2983, 3
        %v3108 = vrot.slane %v2984, 3
        %v3109 = vsel %vm947, %v3107, %v3108
        %v3110 = vrot.slane %v2985, 3
        %v3111 = vsel %vm947, %v3108, %v3110
        %v3112 = vrot.slane %v2986, 3
        %v3113 = vrot.slane %v2987, 3
        %v3114 = vsel %vm947, %v3112, %v3113
        %v3115 = vrot.slane %v2988, 3
        %v3116 = vsel %vm947, %v3113, %v3115
        %v3149 = vadd.f32 %v2905, %v3039
        %v3150 = vadd.f32 %v2906, %v3041
        %v3151 = vadd.f32 %v2907, %v3044
        %v3152 = vadd.f32 %v2908, %v3046
        %v3153 = vadd.f32 %v2909, %v3049
        %v3154 = vadd.f32 %v2910, %v3051
        %v3155 = vadd.f32 %v2911, %v3054
        %v3156 = vadd.f32 %v2912, %v3056
        %v3157 = vadd.f32 %v2913, %v3059
        %v3158 = vadd.f32 %v2914, %v3061
        %v3159 = vadd.f32 %v2915, %v3064
        %v3160 = vadd.f32 %v2916, %v3066
        %v3161 = vadd.f32 %v2917, %v3069
        %v3162 = vadd.f32 %v2918, %v3071
        %v3163 = vadd.f32 %v2919, %v3074
        %v3164 = vadd.f32 %v2920, %v3076
        %v3165 = vadd.f32 %v2921, %v3079
        %v3166 = vadd.f32 %v2922, %v3081
        %v3167 = vadd.f32 %v2923, %v3084
        %v3168 = vadd.f32 %v2924, %v3086
        %v3169 = vadd.f32 %v2925, %v3089
        %v3170 = vadd.f32 %v2926, %v3091
        %v3171 = vadd.f32 %v2927, %v3094
        %v3172 = vadd.f32 %v2928, %v3096
        %v3173 = vadd.f32 %v2929, %v3099
        %v3174 = vadd.f32 %v2930, %v3101
        %v3175 = vadd.f32 %v2931, %v3104
        %v3176 = vadd.f32 %v2932, %v3106
        %v3177 = vadd.f32 %v2933, %v3109
        %v3178 = vadd.f32 %v2934, %v3111
        %v3179 = vadd.f32 %v2935, %v3114
        %v3180 = vadd.f32 %v2936, %v3116
        %v3181 = vlaneseq
        %v3182 = vshrl.u32 %v3181, 7
        %v3183 = vsub.s32 6, %v3182
        %v3184 = vrot.slane %v286, %v3183
        %v3185 = vmul.f32 %v231, %v3184
        %v3186 = vmul.f32 %v232, %v3184
        %v3187 = vmul.f32 %v233, %v3184
        %v3188 = vmul.f32 %v234, %v3184
        %v3189 = vmul.f32 %v235, %v3184
        %v3190 = vmul.f32 %v236, %v3184
        %v3191 = vmul.f32 %v237, %v3184
        %v3192 = vmul.f32 %v238, %v3184
        %v3193 = vmul.f32 %v239, %v3184
        %v3194 = vmul.f32 %v240, %v3184
        %v3195 = vmul.f32 %v241, %v3184
        %v3196 = vmul.f32 %v242, %v3184
        %v3197 = vmul.f32 %v243, %v3184
        %v3198 = vmul.f32 %v244, %v3184
        %v3199 = vmul.f32 %v245, %v3184
        %v3200 = vmul.f32 %v246, %v3184
        %v3201 = vmul.f32 %v247, %v3184
        %v3202 = vmul.f32 %v248, %v3184
        %v3203 = vmul.f32 %v249, %v3184
        %v3204 = vmul.f32 %v250, %v3184
        %v3205 = vmul.f32 %v251, %v3184
        %v3206 = vmul.f32 %v252, %v3184
        %v3207 = vmul.f32 %v253, %v3184
        %v3208 = vmul.f32 %v254, %v3184
        %v3209 = vmul.f32 %v255, %v3184
        %v3210 = vmul.f32 %v256, %v3184
        %v3211 = vmul.f32 %v257, %v3184
        %v3212 = vmul.f32 %v258, %v3184
        %v3213 = vmul.f32 %v259, %v3184
        %v3214 = vmul.f32 %v260, %v3184
        %v3215 = vmul.f32 %v261, %v3184
        %v3216 = vmul.f32 %v262, %v3184
        %v3217 = vmul.f32 %v263, %v3184
        %v3218 = vmul.f32 %v264, %v3184
        %v3219 = vmul.f32 %v265, %v3184
        %v3220 = vmul.f32 %v266, %v3184
        %v3221 = vmul.f32 %v267, %v3184
        %v3222 = vmul.f32 %v268, %v3184
        %v3223 = vmul.f32 %v269, %v3184
        %v3224 = vmul.f32 %v270, %v3184
        %v3225 = vmul.f32 %v271, %v3184
        %v3226 = vmul.f32 %v272, %v3184
        %v3227 = vmul.f32 %v273, %v3184
        %v3228 = vmul.f32 %v274, %v3184
        %v3229 = vmul.f32 %v275, %v3184
        %v3230 = vmul.f32 %v276, %v3184
        %v3231 = vmul.f32 %v277, %v3184
        %v3232 = vmul.f32 %v278, %v3184
        %v3281 = vrot.slane %v3185, 4
        %v3282 = vrot.slane %v3186, 4
        %v3283 = vsel %vm1192, %v3281, %v3282
        %v3284 = vrot.slane %v3187, 4
        %v3285 = vsel %vm1192, %v3282, %v3284
        %v3286 = vrot.slane %v3188, 4
        %v3287 = vrot.slane %v3189, 4
        %v3288 = vsel %vm1192, %v3286, %v3287
        %v3289 = vrot.slane %v3190, 4
        %v3290 = vsel %vm1192, %v3287, %v3289
        %v3291 = vrot.slane %v3191, 4
        %v3292 = vrot.slane %v3192, 4
        %v3293 = vsel %vm1192, %v3291, %v3292
        %v3294 = vrot.slane %v3193, 4
        %v3295 = vsel %vm1192, %v3292, %v3294
        %v3296 = vrot.slane %v3194, 4
        %v3297 = vrot.slane %v3195, 4
        %v3298 = vsel %vm1192, %v3296, %v3297
        %v3299 = vrot.slane %v3196, 4
        %v3300 = vsel %vm1192, %v3297, %v3299
        %v3301 = vrot.slane %v3197, 4
        %v3302 = vrot.slane %v3198, 4
        %v3303 = vsel %vm1192, %v3301, %v3302
        %v3304 = vrot.slane %v3199, 4
        %v3305 = vsel %vm1192, %v3302, %v3304
        %v3306 = vrot.slane %v3200, 4
        %v3307 = vrot.slane %v3201, 4
        %v3308 = vsel %vm1192, %v3306, %v3307
        %v3309 = vrot.slane %v3202, 4
        %v3310 = vsel %vm1192, %v3307, %v3309
        %v3311 = vrot.slane %v3203, 4
        %v3312 = vrot.slane %v3204, 4
        %v3313 = vsel %vm1192, %v3311, %v3312
        %v3314 = vrot.slane %v3205, 4
        %v3315 = vsel %vm1192, %v3312, %v3314
        %v3316 = vrot.slane %v3206, 4
        %v3317 = vrot.slane %v3207, 4
        %v3318 = vsel %vm1192, %v3316, %v3317
        %v3319 = vrot.slane %v3208, 4
        %v3320 = vsel %vm1192, %v3317, %v3319
        %v3321 = vrot.slane %v3209, 4
        %v3322 = vrot.slane %v3210, 4
        %v3323 = vsel %vm1192, %v3321, %v3322
        %v3324 = vrot.slane %v3211, 4
        %v3325 = vsel %vm1192, %v3322, %v3324
        %v3326 = vrot.slane %v3212, 4
        %v3327 = vrot.slane %v3213, 4
        %v3328 = vsel %vm1192, %v3326, %v3327
        %v3329 = vrot.slane %v3214, 4
        %v3330 = vsel %vm1192, %v3327, %v3329
        %v3331 = vrot.slane %v3215, 4
        %v3332 = vrot.slane %v3216, 4
        %v3333 = vsel %vm1192, %v3331, %v3332
        %v3334 = vrot.slane %v3217, 4
        %v3335 = vsel %vm1192, %v3332, %v3334
        %v3336 = vrot.slane %v3218, 4
        %v3337 = vrot.slane %v3219, 4
        %v3338 = vsel %vm1192, %v3336, %v3337
        %v3339 = vrot.slane %v3220, 4
        %v3340 = vsel %vm1192, %v3337, %v3339
        %v3341 = vrot.slane %v3221, 4
        %v3342 = vrot.slane %v3222, 4
        %v3343 = vsel %vm1192, %v3341, %v3342
        %v3344 = vrot.slane %v3223, 4
        %v3345 = vsel %vm1192, %v3342, %v3344
        %v3346 = vrot.slane %v3224, 4
        %v3347 = vrot.slane %v3225, 4
        %v3348 = vsel %vm1192, %v3346, %v3347
        %v3349 = vrot.slane %v3226, 4
        %v3350 = vsel %vm1192, %v3347, %v3349
        %v3351 = vrot.slane %v3227, 4
        %v3352 = vrot.slane %v3228, 4
        %v3353 = vsel %vm1192, %v3351, %v3352
        %v3354 = vrot.slane %v3229, 4
        %v3355 = vsel %vm1192, %v3352, %v3354
        %v3356 = vrot.slane %v3230, 4
        %v3357 = vrot.slane %v3231, 4
        %v3358 = vsel %vm1192, %v3356, %v3357
        %v3359 = vrot.slane %v3232, 4
        %v3360 = vsel %vm1192, %v3357, %v3359
        %v3393 = vadd.f32 %v3149, %v3283
        %v3394 = vadd.f32 %v3150, %v3285
        %v3395 = vadd.f32 %v3151, %v3288
        %v3396 = vadd.f32 %v3152, %v3290
        %v3397 = vadd.f32 %v3153, %v3293
        %v3398 = vadd.f32 %v3154, %v3295
        %v3399 = vadd.f32 %v3155, %v3298
        %v3400 = vadd.f32 %v3156, %v3300
        %v3401 = vadd.f32 %v3157, %v3303
        %v3402 = vadd.f32 %v3158, %v3305
        %v3403 = vadd.f32 %v3159, %v3308
        %v3404 = vadd.f32 %v3160, %v3310
        %v3405 = vadd.f32 %v3161, %v3313
        %v3406 = vadd.f32 %v3162, %v3315
        %v3407 = vadd.f32 %v3163, %v3318
        %v3408 = vadd.f32 %v3164, %v3320
        %v3409 = vadd.f32 %v3165, %v3323
        %v3410 = vadd.f32 %v3166, %v3325
        %v3411 = vadd.f32 %v3167, %v3328
        %v3412 = vadd.f32 %v3168, %v3330
        %v3413 = vadd.f32 %v3169, %v3333
        %v3414 = vadd.f32 %v3170, %v3335
        %v3415 = vadd.f32 %v3171, %v3338
        %v3416 = vadd.f32 %v3172, %v3340
        %v3417 = vadd.f32 %v3173, %v3343
        %v3418 = vadd.f32 %v3174, %v3345
        %v3419 = vadd.f32 %v3175, %v3348
        %v3420 = vadd.f32 %v3176, %v3350
        %v3421 = vadd.f32 %v3177, %v3353
        %v3422 = vadd.f32 %v3178, %v3355
        %v3423 = vadd.f32 %v3179, %v3358
        %v3424 = vadd.f32 %v3180, %v3360
        %v3425 = vlaneseq
        %v3426 = vshrl.u32 %v3425, 7
        %v3427 = vsub.s32 7, %v3426
        %v3428 = vrot.slane %v286, %v3427
        %v3429 = vmul.f32 %v234, %v3428
        %v3430 = vmul.f32 %v235, %v3428
        %v3431 = vmul.f32 %v237, %v3428
        %v3432 = vmul.f32 %v238, %v3428
        %v3433 = vmul.f32 %v240, %v3428
        %v3434 = vmul.f32 %v241, %v3428
        %v3435 = vmul.f32 %v243, %v3428
        %v3436 = vmul.f32 %v244, %v3428
        %v3437 = vmul.f32 %v246, %v3428
        %v3438 = vmul.f32 %v247, %v3428
        %v3439 = vmul.f32 %v249, %v3428
        %v3440 = vmul.f32 %v250, %v3428
        %v3441 = vmul.f32 %v252, %v3428
        %v3442 = vmul.f32 %v253, %v3428
        %v3443 = vmul.f32 %v255, %v3428
        %v3444 = vmul.f32 %v256, %v3428
        %v3445 = vmul.f32 %v258, %v3428
        %v3446 = vmul.f32 %v259, %v3428
        %v3447 = vmul.f32 %v261, %v3428
        %v3448 = vmul.f32 %v262, %v3428
        %v3449 = vmul.f32 %v264, %v3428
        %v3450 = vmul.f32 %v265, %v3428
        %v3451 = vmul.f32 %v267, %v3428
        %v3452 = vmul.f32 %v268, %v3428
        %v3453 = vmul.f32 %v270, %v3428
        %v3454 = vmul.f32 %v271, %v3428
        %v3455 = vmul.f32 %v273, %v3428
        %v3456 = vmul.f32 %v274, %v3428
        %v3457 = vmul.f32 %v276, %v3428
        %v3458 = vmul.f32 %v277, %v3428
        %v3459 = vmul.f32 %v279, %v3428
        %v3460 = vmul.f32 %v280, %v3428
        %v3461 = vadd.f32 %v3393, %v3429
        %v3462 = vadd.f32 %v3394, %v3430
        %v3463 = vadd.f32 %v3395, %v3431
        %v3464 = vadd.f32 %v3396, %v3432
        %v3465 = vadd.f32 %v3397, %v3433
        %v3466 = vadd.f32 %v3398, %v3434
        %v3467 = vadd.f32 %v3399, %v3435
        %v3468 = vadd.f32 %v3400, %v3436
        %v3469 = vadd.f32 %v3401, %v3437
        %v3470 = vadd.f32 %v3402, %v3438
        %v3471 = vadd.f32 %v3403, %v3439
        %v3472 = vadd.f32 %v3404, %v3440
        %v3473 = vadd.f32 %v3405, %v3441
        %v3474 = vadd.f32 %v3406, %v3442
        %v3475 = vadd.f32 %v3407, %v3443
        %v3476 = vadd.f32 %v3408, %v3444
        %v3477 = vadd.f32 %v3409, %v3445
        %v3478 = vadd.f32 %v3410, %v3446
        %v3479 = vadd.f32 %v3411, %v3447
        %v3480 = vadd.f32 %v3412, %v3448
        %v3481 = vadd.f32 %v3413, %v3449
        %v3482 = vadd.f32 %v3414, %v3450
        %v3483 = vadd.f32 %v3415, %v3451
        %v3484 = vadd.f32 %v3416, %v3452
        %v3485 = vadd.f32 %v3417, %v3453
        %v3486 = vadd.f32 %v3418, %v3454
        %v3487 = vadd.f32 %v3419, %v3455
        %v3488 = vadd.f32 %v3420, %v3456
        %v3489 = vadd.f32 %v3421, %v3457
        %v3490 = vadd.f32 %v3422, %v3458
        %v3491 = vadd.f32 %v3423, %v3459
        %v3492 = vadd.f32 %v3424, %v3460
        %v3493 = vlaneseq
        %v3494 = vshrl.u32 %v3493, 7
        %v3495 = vsub.s32 0, %v3494
        %v3496 = vrot.slane %v287, %v3495
        %v3497 = vmul.f32 %v234, %v3496
        %v3498 = vmul.f32 %v235, %v3496
        %v3499 = vmul.f32 %v236, %v3496
        %v3500 = vmul.f32 %v237, %v3496
        %v3501 = vmul.f32 %v238, %v3496
        %v3502 = vmul.f32 %v239, %v3496
        %v3503 = vmul.f32 %v240, %v3496
        %v3504 = vmul.f32 %v241, %v3496
        %v3505 = vmul.f32 %v242, %v3496
        %v3506 = vmul.f32 %v243, %v3496
        %v3507 = vmul.f32 %v244, %v3496
        %v3508 = vmul.f32 %v245, %v3496
        %v3509 = vmul.f32 %v246, %v3496
        %v3510 = vmul.f32 %v247, %v3496
        %v3511 = vmul.f32 %v248, %v3496
        %v3512 = vmul.f32 %v249, %v3496
        %v3513 = vmul.f32 %v250, %v3496
        %v3514 = vmul.f32 %v251, %v3496
        %v3515 = vmul.f32 %v252, %v3496
        %v3516 = vmul.f32 %v253, %v3496
        %v3517 = vmul.f32 %v254, %v3496
        %v3518 = vmul.f32 %v255, %v3496
        %v3519 = vmul.f32 %v256, %v3496
        %v3520 = vmul.f32 %v257, %v3496
        %v3521 = vmul.f32 %v258, %v3496
        %v3522 = vmul.f32 %v259, %v3496
        %v3523 = vmul.f32 %v260, %v3496
        %v3524 = vmul.f32 %v261, %v3496
        %v3525 = vmul.f32 %v262, %v3496
        %v3526 = vmul.f32 %v263, %v3496
        %v3527 = vmul.f32 %v264, %v3496
        %v3528 = vmul.f32 %v265, %v3496
        %v3529 = vmul.f32 %v266, %v3496
        %v3530 = vmul.f32 %v267, %v3496
        %v3531 = vmul.f32 %v268, %v3496
        %v3532 = vmul.f32 %v269, %v3496
        %v3533 = vmul.f32 %v270, %v3496
        %v3534 = vmul.f32 %v271, %v3496
        %v3535 = vmul.f32 %v272, %v3496
        %v3536 = vmul.f32 %v273, %v3496
        %v3537 = vmul.f32 %v274, %v3496
        %v3538 = vmul.f32 %v275, %v3496
        %v3539 = vmul.f32 %v276, %v3496
        %v3540 = vmul.f32 %v277, %v3496
        %v3541 = vmul.f32 %v278, %v3496
        %v3542 = vmul.f32 %v279, %v3496
        %v3543 = vmul.f32 %v280, %v3496
        %v3544 = vmul.f32 %v281, %v3496
        %v3593 = vrot.slane %v3497, 1
        %v3594 = vrot.slane %v3498, 1
        %v3595 = vsel %vm457, %v3593, %v3594
        %v3596 = vrot.slane %v3499, 1
        %v3597 = vsel %vm457, %v3594, %v3596
        %v3598 = vrot.slane %v3500, 1
        %v3599 = vrot.slane %v3501, 1
        %v3600 = vsel %vm457, %v3598, %v3599
        %v3601 = vrot.slane %v3502, 1
        %v3602 = vsel %vm457, %v3599, %v3601
        %v3603 = vrot.slane %v3503, 1
        %v3604 = vrot.slane %v3504, 1
        %v3605 = vsel %vm457, %v3603, %v3604
        %v3606 = vrot.slane %v3505, 1
        %v3607 = vsel %vm457, %v3604, %v3606
        %v3608 = vrot.slane %v3506, 1
        %v3609 = vrot.slane %v3507, 1
        %v3610 = vsel %vm457, %v3608, %v3609
        %v3611 = vrot.slane %v3508, 1
        %v3612 = vsel %vm457, %v3609, %v3611
        %v3613 = vrot.slane %v3509, 1
        %v3614 = vrot.slane %v3510, 1
        %v3615 = vsel %vm457, %v3613, %v3614
        %v3616 = vrot.slane %v3511, 1
        %v3617 = vsel %vm457, %v3614, %v3616
        %v3618 = vrot.slane %v3512, 1
        %v3619 = vrot.slane %v3513, 1
        %v3620 = vsel %vm457, %v3618, %v3619
        %v3621 = vrot.slane %v3514, 1
        %v3622 = vsel %vm457, %v3619, %v3621
        %v3623 = vrot.slane %v3515, 1
        %v3624 = vrot.slane %v3516, 1
        %v3625 = vsel %vm457, %v3623, %v3624
        %v3626 = vrot.slane %v3517, 1
        %v3627 = vsel %vm457, %v3624, %v3626
        %v3628 = vrot.slane %v3518, 1
        %v3629 = vrot.slane %v3519, 1
        %v3630 = vsel %vm457, %v3628, %v3629
        %v3631 = vrot.slane %v3520, 1
        %v3632 = vsel %vm457, %v3629, %v3631
        %v3633 = vrot.slane %v3521, 1
        %v3634 = vrot.slane %v3522, 1
        %v3635 = vsel %vm457, %v3633, %v3634
        %v3636 = vrot.slane %v3523, 1
        %v3637 = vsel %vm457, %v3634, %v3636
        %v3638 = vrot.slane %v3524, 1
        %v3639 = vrot.slane %v3525, 1
        %v3640 = vsel %vm457, %v3638, %v3639
        %v3641 = vrot.slane %v3526, 1
        %v3642 = vsel %vm457, %v3639, %v3641
        %v3643 = vrot.slane %v3527, 1
        %v3644 = vrot.slane %v3528, 1
        %v3645 = vsel %vm457, %v3643, %v3644
        %v3646 = vrot.slane %v3529, 1
        %v3647 = vsel %vm457, %v3644, %v3646
        %v3648 = vrot.slane %v3530, 1
        %v3649 = vrot.slane %v3531, 1
        %v3650 = vsel %vm457, %v3648, %v3649
        %v3651 = vrot.slane %v3532, 1
        %v3652 = vsel %vm457, %v3649, %v3651
        %v3653 = vrot.slane %v3533, 1
        %v3654 = vrot.slane %v3534, 1
        %v3655 = vsel %vm457, %v3653, %v3654
        %v3656 = vrot.slane %v3535, 1
        %v3657 = vsel %vm457, %v3654, %v3656
        %v3658 = vrot.slane %v3536, 1
        %v3659 = vrot.slane %v3537, 1
        %v3660 = vsel %vm457, %v3658, %v3659
        %v3661 = vrot.slane %v3538, 1
        %v3662 = vsel %vm457, %v3659, %v3661
        %v3663 = vrot.slane %v3539, 1
        %v3664 = vrot.slane %v3540, 1
        %v3665 = vsel %vm457, %v3663, %v3664
        %v3666 = vrot.slane %v3541, 1
        %v3667 = vsel %vm457, %v3664, %v3666
        %v3668 = vrot.slane %v3542, 1
        %v3669 = vrot.slane %v3543, 1
        %v3670 = vsel %vm457, %v3668, %v3669
        %v3671 = vrot.slane %v3544, 1
        %v3672 = vsel %vm457, %v3669, %v3671
        %v3705 = vadd.f32 %v3461, %v3595
        %v3706 = vadd.f32 %v3462, %v3597
        %v3707 = vadd.f32 %v3463, %v3600
        %v3708 = vadd.f32 %v3464, %v3602
        %v3709 = vadd.f32 %v3465, %v3605
        %v3710 = vadd.f32 %v3466, %v3607
        %v3711 = vadd.f32 %v3467, %v3610
        %v3712 = vadd.f32 %v3468, %v3612
        %v3713 = vadd.f32 %v3469, %v3615
        %v3714 = vadd.f32 %v3470, %v3617
        %v3715 = vadd.f32 %v3471, %v3620
        %v3716 = vadd.f32 %v3472, %v3622
        %v3717 = vadd.f32 %v3473, %v3625
        %v3718 = vadd.f32 %v3474, %v3627
        %v3719 = vadd.f32 %v3475, %v3630
        %v3720 = vadd.f32 %v3476, %v3632
        %v3721 = vadd.f32 %v3477, %v3635
        %v3722 = vadd.f32 %v3478, %v3637
        %v3723 = vadd.f32 %v3479, %v3640
        %v3724 = vadd.f32 %v3480, %v3642
        %v3725 = vadd.f32 %v3481, %v3645
        %v3726 = vadd.f32 %v3482, %v3647
        %v3727 = vadd.f32 %v3483, %v3650
        %v3728 = vadd.f32 %v3484, %v3652
        %v3729 = vadd.f32 %v3485, %v3655
        %v3730 = vadd.f32 %v3486, %v3657
        %v3731 = vadd.f32 %v3487, %v3660
        %v3732 = vadd.f32 %v3488, %v3662
        %v3733 = vadd.f32 %v3489, %v3665
        %v3734 = vadd.f32 %v3490, %v3667
        %v3735 = vadd.f32 %v3491, %v3670
        %v3736 = vadd.f32 %v3492, %v3672
        %v3737 = vlaneseq
        %v3738 = vshrl.u32 %v3737, 7
        %v3739 = vsub.s32 1, %v3738
        %v3740 = vrot.slane %v287, %v3739
        %v3741 = vmul.f32 %v234, %v3740
        %v3742 = vmul.f32 %v235, %v3740
        %v3743 = vmul.f32 %v236, %v3740
        %v3744 = vmul.f32 %v237, %v3740
        %v3745 = vmul.f32 %v238, %v3740
        %v3746 = vmul.f32 %v239, %v3740
        %v3747 = vmul.f32 %v240, %v3740
        %v3748 = vmul.f32 %v241, %v3740
        %v3749 = vmul.f32 %v242, %v3740
        %v3750 = vmul.f32 %v243, %v3740
        %v3751 = vmul.f32 %v244, %v3740
        %v3752 = vmul.f32 %v245, %v3740
        %v3753 = vmul.f32 %v246, %v3740
        %v3754 = vmul.f32 %v247, %v3740
        %v3755 = vmul.f32 %v248, %v3740
        %v3756 = vmul.f32 %v249, %v3740
        %v3757 = vmul.f32 %v250, %v3740
        %v3758 = vmul.f32 %v251, %v3740
        %v3759 = vmul.f32 %v252, %v3740
        %v3760 = vmul.f32 %v253, %v3740
        %v3761 = vmul.f32 %v254, %v3740
        %v3762 = vmul.f32 %v255, %v3740
        %v3763 = vmul.f32 %v256, %v3740
        %v3764 = vmul.f32 %v257, %v3740
        %v3765 = vmul.f32 %v258, %v3740
        %v3766 = vmul.f32 %v259, %v3740
        %v3767 = vmul.f32 %v260, %v3740
        %v3768 = vmul.f32 %v261, %v3740
        %v3769 = vmul.f32 %v262, %v3740
        %v3770 = vmul.f32 %v263, %v3740
        %v3771 = vmul.f32 %v264, %v3740
        %v3772 = vmul.f32 %v265, %v3740
        %v3773 = vmul.f32 %v266, %v3740
        %v3774 = vmul.f32 %v267, %v3740
        %v3775 = vmul.f32 %v268, %v3740
        %v3776 = vmul.f32 %v269, %v3740
        %v3777 = vmul.f32 %v270, %v3740
        %v3778 = vmul.f32 %v271, %v3740
        %v3779 = vmul.f32 %v272, %v3740
        %v3780 = vmul.f32 %v273, %v3740
        %v3781 = vmul.f32 %v274, %v3740
        %v3782 = vmul.f32 %v275, %v3740
        %v3783 = vmul.f32 %v276, %v3740
        %v3784 = vmul.f32 %v277, %v3740
        %v3785 = vmul.f32 %v278, %v3740
        %v3786 = vmul.f32 %v279, %v3740
        %v3787 = vmul.f32 %v280, %v3740
        %v3788 = vmul.f32 %v281, %v3740
        %v3837 = vrot.slane %v3741, 2
        %v3838 = vrot.slane %v3742, 2
        %v3839 = vsel %vm702, %v3837, %v3838
        %v3840 = vrot.slane %v3743, 2
        %v3841 = vsel %vm702, %v3838, %v3840
        %v3842 = vrot.slane %v3744, 2
        %v3843 = vrot.slane %v3745, 2
        %v3844 = vsel %vm702, %v3842, %v3843
        %v3845 = vrot.slane %v3746, 2
        %v3846 = vsel %vm702, %v3843, %v3845
        %v3847 = vrot.slane %v3747, 2
        %v3848 = vrot.slane %v3748, 2
        %v3849 = vsel %vm702, %v3847, %v3848
        %v3850 = vrot.slane %v3749, 2
        %v3851 = vsel %vm702, %v3848, %v3850
        %v3852 = vrot.slane %v3750, 2
        %v3853 = vrot.slane %v3751, 2
        %v3854 = vsel %vm702, %v3852, %v3853
        %v3855 = vrot.slane %v3752, 2
        %v3856 = vsel %vm702, %v3853, %v3855
        %v3857 = vrot.slane %v3753, 2
        %v3858 = vrot.slane %v3754, 2
        %v3859 = vsel %vm702, %v3857, %v3858
        %v3860 = vrot.slane %v3755, 2
        %v3861 = vsel %vm702, %v3858, %v3860
        %v3862 = vrot.slane %v3756, 2
        %v3863 = vrot.slane %v3757, 2
        %v3864 = vsel %vm702, %v3862, %v3863
        %v3865 = vrot.slane %v3758, 2
        %v3866 = vsel %vm702, %v3863, %v3865
        %v3867 = vrot.slane %v3759, 2
        %v3868 = vrot.slane %v3760, 2
        %v3869 = vsel %vm702, %v3867, %v3868
        %v3870 = vrot.slane %v3761, 2
        %v3871 = vsel %vm702, %v3868, %v3870
        %v3872 = vrot.slane %v3762, 2
        %v3873 = vrot.slane %v3763, 2
        %v3874 = vsel %vm702, %v3872, %v3873
        %v3875 = vrot.slane %v3764, 2
        %v3876 = vsel %vm702, %v3873, %v3875
        %v3877 = vrot.slane %v3765, 2
        %v3878 = vrot.slane %v3766, 2
        %v3879 = vsel %vm702, %v3877, %v3878
        %v3880 = vrot.slane %v3767, 2
        %v3881 = vsel %vm702, %v3878, %v3880
        %v3882 = vrot.slane %v3768, 2
        %v3883 = vrot.slane %v3769, 2
        %v3884 = vsel %vm702, %v3882, %v3883
        %v3885 = vrot.slane %v3770, 2
        %v3886 = vsel %vm702, %v3883, %v3885
        %v3887 = vrot.slane %v3771, 2
        %v3888 = vrot.slane %v3772, 2
        %v3889 = vsel %vm702, %v3887, %v3888
        %v3890 = vrot.slane %v3773, 2
        %v3891 = vsel %vm702, %v3888, %v3890
        %v3892 = vrot.slane %v3774, 2
        %v3893 = vrot.slane %v3775, 2
        %v3894 = vsel %vm702, %v3892, %v3893
        %v3895 = vrot.slane %v3776, 2
        %v3896 = vsel %vm702, %v3893, %v3895
        %v3897 = vrot.slane %v3777, 2
        %v3898 = vrot.slane %v3778, 2
        %v3899 = vsel %vm702, %v3897, %v3898
        %v3900 = vrot.slane %v3779, 2
        %v3901 = vsel %vm702, %v3898, %v3900
        %v3902 = vrot.slane %v3780, 2
        %v3903 = vrot.slane %v3781, 2
        %v3904 = vsel %vm702, %v3902, %v3903
        %v3905 = vrot.slane %v3782, 2
        %v3906 = vsel %vm702, %v3903, %v3905
        %v3907 = vrot.slane %v3783, 2
        %v3908 = vrot.slane %v3784, 2
        %v3909 = vsel %vm702, %v3907, %v3908
        %v3910 = vrot.slane %v3785, 2
        %v3911 = vsel %vm702, %v3908, %v3910
        %v3912 = vrot.slane %v3786, 2
        %v3913 = vrot.slane %v3787, 2
        %v3914 = vsel %vm702, %v3912, %v3913
        %v3915 = vrot.slane %v3788, 2
        %v3916 = vsel %vm702, %v3913, %v3915
        %v3949 = vadd.f32 %v3705, %v3839
        %v3950 = vadd.f32 %v3706, %v3841
        %v3951 = vadd.f32 %v3707, %v3844
        %v3952 = vadd.f32 %v3708, %v3846
        %v3953 = vadd.f32 %v3709, %v3849
        %v3954 = vadd.f32 %v3710, %v3851
        %v3955 = vadd.f32 %v3711, %v3854
        %v3956 = vadd.f32 %v3712, %v3856
        %v3957 = vadd.f32 %v3713, %v3859
        %v3958 = vadd.f32 %v3714, %v3861
        %v3959 = vadd.f32 %v3715, %v3864
        %v3960 = vadd.f32 %v3716, %v3866
        %v3961 = vadd.f32 %v3717, %v3869
        %v3962 = vadd.f32 %v3718, %v3871
        %v3963 = vadd.f32 %v3719, %v3874
        %v3964 = vadd.f32 %v3720, %v3876
        %v3965 = vadd.f32 %v3721, %v3879
        %v3966 = vadd.f32 %v3722, %v3881
        %v3967 = vadd.f32 %v3723, %v3884
        %v3968 = vadd.f32 %v3724, %v3886
        %v3969 = vadd.f32 %v3725, %v3889
        %v3970 = vadd.f32 %v3726, %v3891
        %v3971 = vadd.f32 %v3727, %v3894
        %v3972 = vadd.f32 %v3728, %v3896
        %v3973 = vadd.f32 %v3729, %v3899
        %v3974 = vadd.f32 %v3730, %v3901
        %v3975 = vadd.f32 %v3731, %v3904
        %v3976 = vadd.f32 %v3732, %v3906
        %v3977 = vadd.f32 %v3733, %v3909
        %v3978 = vadd.f32 %v3734, %v3911
        %v3979 = vadd.f32 %v3735, %v3914
        %v3980 = vadd.f32 %v3736, %v3916
        %v3981 = vlaneseq
        %v3982 = vshrl.u32 %v3981, 7
        %v3983 = vsub.s32 2, %v3982
        %v3984 = vrot.slane %v287, %v3983
        %v3985 = vmul.f32 %v234, %v3984
        %v3986 = vmul.f32 %v235, %v3984
        %v3987 = vmul.f32 %v236, %v3984
        %v3988 = vmul.f32 %v237, %v3984
        %v3989 = vmul.f32 %v238, %v3984
        %v3990 = vmul.f32 %v239, %v3984
        %v3991 = vmul.f32 %v240, %v3984
        %v3992 = vmul.f32 %v241, %v3984
        %v3993 = vmul.f32 %v242, %v3984
        %v3994 = vmul.f32 %v243, %v3984
        %v3995 = vmul.f32 %v244, %v3984
        %v3996 = vmul.f32 %v245, %v3984
        %v3997 = vmul.f32 %v246, %v3984
        %v3998 = vmul.f32 %v247, %v3984
        %v3999 = vmul.f32 %v248, %v3984
        %v4000 = vmul.f32 %v249, %v3984
        %v4001 = vmul.f32 %v250, %v3984
        %v4002 = vmul.f32 %v251, %v3984
        %v4003 = vmul.f32 %v252, %v3984
        %v4004 = vmul.f32 %v253, %v3984
        %v4005 = vmul.f32 %v254, %v3984
        %v4006 = vmul.f32 %v255, %v3984
        %v4007 = vmul.f32 %v256, %v3984
        %v4008 = vmul.f32 %v257, %v3984
        %v4009 = vmul.f32 %v258, %v3984
        %v4010 = vmul.f32 %v259, %v3984
        %v4011 = vmul.f32 %v260, %v3984
        %v4012 = vmul.f32 %v261, %v3984
        %v4013 = vmul.f32 %v262, %v3984
        %v4014 = vmul.f32 %v263, %v3984
        %v4015 = vmul.f32 %v264, %v3984
        %v4016 = vmul.f32 %v265, %v3984
        %v4017 = vmul.f32 %v266, %v3984
        %v4018 = vmul.f32 %v267, %v3984
        %v4019 = vmul.f32 %v268, %v3984
        %v4020 = vmul.f32 %v269, %v3984
        %v4021 = vmul.f32 %v270, %v3984
        %v4022 = vmul.f32 %v271, %v3984
        %v4023 = vmul.f32 %v272, %v3984
        %v4024 = vmul.f32 %v273, %v3984
        %v4025 = vmul.f32 %v274, %v3984
        %v4026 = vmul.f32 %v275, %v3984
        %v4027 = vmul.f32 %v276, %v3984
        %v4028 = vmul.f32 %v277, %v3984
        %v4029 = vmul.f32 %v278, %v3984
        %v4030 = vmul.f32 %v279, %v3984
        %v4031 = vmul.f32 %v280, %v3984
        %v4032 = vmul.f32 %v281, %v3984
        %v4081 = vrot.slane %v3985, 3
        %v4082 = vrot.slane %v3986, 3
        %v4083 = vsel %vm947, %v4081, %v4082
        %v4084 = vrot.slane %v3987, 3
        %v4085 = vsel %vm947, %v4082, %v4084
        %v4086 = vrot.slane %v3988, 3
        %v4087 = vrot.slane %v3989, 3
        %v4088 = vsel %vm947, %v4086, %v4087
        %v4089 = vrot.slane %v3990, 3
        %v4090 = vsel %vm947, %v4087, %v4089
        %v4091 = vrot.slane %v3991, 3
        %v4092 = vrot.slane %v3992, 3
        %v4093 = vsel %vm947, %v4091, %v4092
        %v4094 = vrot.slane %v3993, 3
        %v4095 = vsel %vm947, %v4092, %v4094
        %v4096 = vrot.slane %v3994, 3
        %v4097 = vrot.slane %v3995, 3
        %v4098 = vsel %vm947, %v4096, %v4097
        %v4099 = vrot.slane %v3996, 3
        %v4100 = vsel %vm947, %v4097, %v4099
        %v4101 = vrot.slane %v3997, 3
        %v4102 = vrot.slane %v3998, 3
        %v4103 = vsel %vm947, %v4101, %v4102
        %v4104 = vrot.slane %v3999, 3
        %v4105 = vsel %vm947, %v4102, %v4104
        %v4106 = vrot.slane %v4000, 3
        %v4107 = vrot.slane %v4001, 3
        %v4108 = vsel %vm947, %v4106, %v4107
        %v4109 = vrot.slane %v4002, 3
        %v4110 = vsel %vm947, %v4107, %v4109
        %v4111 = vrot.slane %v4003, 3
        %v4112 = vrot.slane %v4004, 3
        %v4113 = vsel %vm947, %v4111, %v4112
        %v4114 = vrot.slane %v4005, 3
        %v4115 = vsel %vm947, %v4112, %v4114
        %v4116 = vrot.slane %v4006, 3
        %v4117 = vrot.slane %v4007, 3
        %v4118 = vsel %vm947, %v4116, %v4117
        %v4119 = vrot.slane %v4008, 3
        %v4120 = vsel %vm947, %v4117, %v4119
        %v4121 = vrot.slane %v4009, 3
        %v4122 = vrot.slane %v4010, 3
        %v4123 = vsel %vm947, %v4121, %v4122
        %v4124 = vrot.slane %v4011, 3
        %v4125 = vsel %vm947, %v4122, %v4124
        %v4126 = vrot.slane %v4012, 3
        %v4127 = vrot.slane %v4013, 3
        %v4128 = vsel %vm947, %v4126, %v4127
        %v4129 = vrot.slane %v4014, 3
        %v4130 = vsel %vm947, %v4127, %v4129
        %v4131 = vrot.slane %v4015, 3
        %v4132 = vrot.slane %v4016, 3
        %v4133 = vsel %vm947, %v4131, %v4132
        %v4134 = vrot.slane %v4017, 3
        %v4135 = vsel %vm947, %v4132, %v4134
        %v4136 = vrot.slane %v4018, 3
        %v4137 = vrot.slane %v4019, 3
        %v4138 = vsel %vm947, %v4136, %v4137
        %v4139 = vrot.slane %v4020, 3
        %v4140 = vsel %vm947, %v4137, %v4139
        %v4141 = vrot.slane %v4021, 3
        %v4142 = vrot.slane %v4022, 3
        %v4143 = vsel %vm947, %v4141, %v4142
        %v4144 = vrot.slane %v4023, 3
        %v4145 = vsel %vm947, %v4142, %v4144
        %v4146 = vrot.slane %v4024, 3
        %v4147 = vrot.slane %v4025, 3
        %v4148 = vsel %vm947, %v4146, %v4147
        %v4149 = vrot.slane %v4026, 3
        %v4150 = vsel %vm947, %v4147, %v4149
        %v4151 = vrot.slane %v4027, 3
        %v4152 = vrot.slane %v4028, 3
        %v4153 = vsel %vm947, %v4151, %v4152
        %v4154 = vrot.slane %v4029, 3
        %v4155 = vsel %vm947, %v4152, %v4154
        %v4156 = vrot.slane %v4030, 3
        %v4157 = vrot.slane %v4031, 3
        %v4158 = vsel %vm947, %v4156, %v4157
        %v4159 = vrot.slane %v4032, 3
        %v4160 = vsel %vm947, %v4157, %v4159
        %v4193 = vadd.f32 %v3949, %v4083
        %v4194 = vadd.f32 %v3950, %v4085
        %v4195 = vadd.f32 %v3951, %v4088
        %v4196 = vadd.f32 %v3952, %v4090
        %v4197 = vadd.f32 %v3953, %v4093
        %v4198 = vadd.f32 %v3954, %v4095
        %v4199 = vadd.f32 %v3955, %v4098
        %v4200 = vadd.f32 %v3956, %v4100
        %v4201 = vadd.f32 %v3957, %v4103
        %v4202 = vadd.f32 %v3958, %v4105
        %v4203 = vadd.f32 %v3959, %v4108
        %v4204 = vadd.f32 %v3960, %v4110
        %v4205 = vadd.f32 %v3961, %v4113
        %v4206 = vadd.f32 %v3962, %v4115
        %v4207 = vadd.f32 %v3963, %v4118
        %v4208 = vadd.f32 %v3964, %v4120
        %v4209 = vadd.f32 %v3965, %v4123
        %v4210 = vadd.f32 %v3966, %v4125
        %v4211 = vadd.f32 %v3967, %v4128
        %v4212 = vadd.f32 %v3968, %v4130
        %v4213 = vadd.f32 %v3969, %v4133
        %v4214 = vadd.f32 %v3970, %v4135
        %v4215 = vadd.f32 %v3971, %v4138
        %v4216 = vadd.f32 %v3972, %v4140
        %v4217 = vadd.f32 %v3973, %v4143
        %v4218 = vadd.f32 %v3974, %v4145
        %v4219 = vadd.f32 %v3975, %v4148
        %v4220 = vadd.f32 %v3976, %v4150
        %v4221 = vadd.f32 %v3977, %v4153
        %v4222 = vadd.f32 %v3978, %v4155
        %v4223 = vadd.f32 %v3979, %v4158
        %v4224 = vadd.f32 %v3980, %v4160
        %v4225 = vlaneseq
        %v4226 = vshrl.u32 %v4225, 7
        %v4227 = vsub.s32 3, %v4226
        %v4228 = vrot.slane %v287, %v4227
        %v4229 = vmul.f32 %v234, %v4228
        %v4230 = vmul.f32 %v235, %v4228
        %v4231 = vmul.f32 %v236, %v4228
        %v4232 = vmul.f32 %v237, %v4228
        %v4233 = vmul.f32 %v238, %v4228
        %v4234 = vmul.f32 %v239, %v4228
        %v4235 = vmul.f32 %v240, %v4228
        %v4236 = vmul.f32 %v241, %v4228
        %v4237 = vmul.f32 %v242, %v4228
        %v4238 = vmul.f32 %v243, %v4228
        %v4239 = vmul.f32 %v244, %v4228
        %v4240 = vmul.f32 %v245, %v4228
        %v4241 = vmul.f32 %v246, %v4228
        %v4242 = vmul.f32 %v247, %v4228
        %v4243 = vmul.f32 %v248, %v4228
        %v4244 = vmul.f32 %v249, %v4228
        %v4245 = vmul.f32 %v250, %v4228
        %v4246 = vmul.f32 %v251, %v4228
        %v4247 = vmul.f32 %v252, %v4228
        %v4248 = vmul.f32 %v253, %v4228
        %v4249 = vmul.f32 %v254, %v4228
        %v4250 = vmul.f32 %v255, %v4228
        %v4251 = vmul.f32 %v256, %v4228
        %v4252 = vmul.f32 %v257, %v4228
        %v4253 = vmul.f32 %v258, %v4228
        %v4254 = vmul.f32 %v259, %v4228
        %v4255 = vmul.f32 %v260, %v4228
        %v4256 = vmul.f32 %v261, %v4228
        %v4257 = vmul.f32 %v262, %v4228
        %v4258 = vmul.f32 %v263, %v4228
        %v4259 = vmul.f32 %v264, %v4228
        %v4260 = vmul.f32 %v265, %v4228
        %v4261 = vmul.f32 %v266, %v4228
        %v4262 = vmul.f32 %v267, %v4228
        %v4263 = vmul.f32 %v268, %v4228
        %v4264 = vmul.f32 %v269, %v4228
        %v4265 = vmul.f32 %v270, %v4228
        %v4266 = vmul.f32 %v271, %v4228
        %v4267 = vmul.f32 %v272, %v4228
        %v4268 = vmul.f32 %v273, %v4228
        %v4269 = vmul.f32 %v274, %v4228
        %v4270 = vmul.f32 %v275, %v4228
        %v4271 = vmul.f32 %v276, %v4228
        %v4272 = vmul.f32 %v277, %v4228
        %v4273 = vmul.f32 %v278, %v4228
        %v4274 = vmul.f32 %v279, %v4228
        %v4275 = vmul.f32 %v280, %v4228
        %v4276 = vmul.f32 %v281, %v4228
        %v4325 = vrot.slane %v4229, 4
        %v4326 = vrot.slane %v4230, 4
        %v4327 = vsel %vm1192, %v4325, %v4326
        %v4328 = vrot.slane %v4231, 4
        %v4329 = vsel %vm1192, %v4326, %v4328
        %v4330 = vrot.slane %v4232, 4
        %v4331 = vrot.slane %v4233, 4
        %v4332 = vsel %vm1192, %v4330, %v4331
        %v4333 = vrot.slane %v4234, 4
        %v4334 = vsel %vm1192, %v4331, %v4333
        %v4335 = vrot.slane %v4235, 4
        %v4336 = vrot.slane %v4236, 4
        %v4337 = vsel %vm1192, %v4335, %v4336
        %v4338 = vrot.slane %v4237, 4
        %v4339 = vsel %vm1192, %v4336, %v4338
        %v4340 = vrot.slane %v4238, 4
        %v4341 = vrot.slane %v4239, 4
        %v4342 = vsel %vm1192, %v4340, %v4341
        %v4343 = vrot.slane %v4240, 4
        %v4344 = vsel %vm1192, %v4341, %v4343
        %v4345 = vrot.slane %v4241, 4
        %v4346 = vrot.slane %v4242, 4
        %v4347 = vsel %vm1192, %v4345, %v4346
        %v4348 = vrot.slane %v4243, 4
        %v4349 = vsel %vm1192, %v4346, %v4348
        %v4350 = vrot.slane %v4244, 4
        %v4351 = vrot.slane %v4245, 4
        %v4352 = vsel %vm1192, %v4350, %v4351
        %v4353 = vrot.slane %v4246, 4
        %v4354 = vsel %vm1192, %v4351, %v4353
        %v4355 = vrot.slane %v4247, 4
        %v4356 = vrot.slane %v4248, 4
        %v4357 = vsel %vm1192, %v4355, %v4356
        %v4358 = vrot.slane %v4249, 4
        %v4359 = vsel %vm1192, %v4356, %v4358
        %v4360 = vrot.slane %v4250, 4
        %v4361 = vrot.slane %v4251, 4
        %v4362 = vsel %vm1192, %v4360, %v4361
        %v4363 = vrot.slane %v4252, 4
        %v4364 = vsel %vm1192, %v4361, %v4363
        %v4365 = vrot.slane %v4253, 4
        %v4366 = vrot.slane %v4254, 4
        %v4367 = vsel %vm1192, %v4365, %v4366
        %v4368 = vrot.slane %v4255, 4
        %v4369 = vsel %vm1192, %v4366, %v4368
        %v4370 = vrot.slane %v4256, 4
        %v4371 = vrot.slane %v4257, 4
        %v4372 = vsel %vm1192, %v4370, %v4371
        %v4373 = vrot.slane %v4258, 4
        %v4374 = vsel %vm1192, %v4371, %v4373
        %v4375 = vrot.slane %v4259, 4
        %v4376 = vrot.slane %v4260, 4
        %v4377 = vsel %vm1192, %v4375, %v4376
        %v4378 = vrot.slane %v4261, 4
        %v4379 = vsel %vm1192, %v4376, %v4378
        %v4380 = vrot.slane %v4262, 4
        %v4381 = vrot.slane %v4263, 4
        %v4382 = vsel %vm1192, %v4380, %v4381
        %v4383 = vrot.slane %v4264, 4
        %v4384 = vsel %vm1192, %v4381, %v4383
        %v4385 = vrot.slane %v4265, 4
        %v4386 = vrot.slane %v4266, 4
        %v4387 = vsel %vm1192, %v4385, %v4386
        %v4388 = vrot.slane %v4267, 4
        %v4389 = vsel %vm1192, %v4386, %v4388
        %v4390 = vrot.slane %v4268, 4
        %v4391 = vrot.slane %v4269, 4
        %v4392 = vsel %vm1192, %v4390, %v4391
        %v4393 = vrot.slane %v4270, 4
        %v4394 = vsel %vm1192, %v4391, %v4393
        %v4395 = vrot.slane %v4271, 4
        %v4396 = vrot.slane %v4272, 4
        %v4397 = vsel %vm1192, %v4395, %v4396
        %v4398 = vrot.slane %v4273, 4
        %v4399 = vsel %vm1192, %v4396, %v4398
        %v4400 = vrot.slane %v4274, 4
        %v4401 = vrot.slane %v4275, 4
        %v4402 = vsel %vm1192, %v4400, %v4401
        %v4403 = vrot.slane %v4276, 4
        %v4404 = vsel %vm1192, %v4401, %v4403
        %v4437 = vadd.f32 %v4193, %v4327
        %v4438 = vadd.f32 %v4194, %v4329
        %v4439 = vadd.f32 %v4195, %v4332
        %v4440 = vadd.f32 %v4196, %v4334
        %v4441 = vadd.f32 %v4197, %v4337
        %v4442 = vadd.f32 %v4198, %v4339
        %v4443 = vadd.f32 %v4199, %v4342
        %v4444 = vadd.f32 %v4200, %v4344
        %v4445 = vadd.f32 %v4201, %v4347
        %v4446 = vadd.f32 %v4202, %v4349
        %v4447 = vadd.f32 %v4203, %v4352
        %v4448 = vadd.f32 %v4204, %v4354
        %v4449 = vadd.f32 %v4205, %v4357
        %v4450 = vadd.f32 %v4206, %v4359
        %v4451 = vadd.f32 %v4207, %v4362
        %v4452 = vadd.f32 %v4208, %v4364
        %v4453 = vadd.f32 %v4209, %v4367
        %v4454 = vadd.f32 %v4210, %v4369
        %v4455 = vadd.f32 %v4211, %v4372
        %v4456 = vadd.f32 %v4212, %v4374
        %v4457 = vadd.f32 %v4213, %v4377
        %v4458 = vadd.f32 %v4214, %v4379
        %v4459 = vadd.f32 %v4215, %v4382
        %v4460 = vadd.f32 %v4216, %v4384
        %v4461 = vadd.f32 %v4217, %v4387
        %v4462 = vadd.f32 %v4218, %v4389
        %v4463 = vadd.f32 %v4219, %v4392
        %v4464 = vadd.f32 %v4220, %v4394
        %v4465 = vadd.f32 %v4221, %v4397
        %v4466 = vadd.f32 %v4222, %v4399
        %v4467 = vadd.f32 %v4223, %v4402
        %v4468 = vadd.f32 %v4224, %v4404
        %v4469 = vlaneseq
        %v4470 = vshrl.u32 %v4469, 7
        %v4471 = vsub.s32 4, %v4470
        %v4472 = vrot.slane %v287, %v4471
        %v4473 = vmul.f32 %v237, %v4472
        %v4474 = vmul.f32 %v238, %v4472
        %v4475 = vmul.f32 %v240, %v4472
        %v4476 = vmul.f32 %v241, %v4472
        %v4477 = vmul.f32 %v243, %v4472
        %v4478 = vmul.f32 %v244, %v4472
        %v4479 = vmul.f32 %v246, %v4472
        %v4480 = vmul.f32 %v247, %v4472
        %v4481 = vmul.f32 %v249, %v4472
        %v4482 = vmul.f32 %v250, %v4472
        %v4483 = vmul.f32 %v252, %v4472
        %v4484 = vmul.f32 %v253, %v4472
        %v4485 = vmul.f32 %v255, %v4472
        %v4486 = vmul.f32 %v256, %v4472
        %v4487 = vmul.f32 %v258, %v4472
        %v4488 = vmul.f32 %v259, %v4472
        %v4489 = vmul.f32 %v261, %v4472
        %v4490 = vmul.f32 %v262, %v4472
        %v4491 = vmul.f32 %v264, %v4472
        %v4492 = vmul.f32 %v265, %v4472
        %v4493 = vmul.f32 %v267, %v4472
        %v4494 = vmul.f32 %v268, %v4472
        %v4495 = vmul.f32 %v270, %v4472
        %v4496 = vmul.f32 %v271, %v4472
        %v4497 = vmul.f32 %v273, %v4472
        %v4498 = vmul.f32 %v274, %v4472
        %v4499 = vmul.f32 %v276, %v4472
        %v4500 = vmul.f32 %v277, %v4472
        %v4501 = vmul.f32 %v279, %v4472
        %v4502 = vmul.f32 %v280, %v4472
        %v4503 = vmul.f32 %v282, %v4472
        %v4504 = vmul.f32 %v283, %v4472
        %v4505 = vadd.f32 %v4437, %v4473
        %v4506 = vadd.f32 %v4438, %v4474
        %v4507 = vadd.f32 %v4439, %v4475
        %v4508 = vadd.f32 %v4440, %v4476
        %v4509 = vadd.f32 %v4441, %v4477
        %v4510 = vadd.f32 %v4442, %v4478
        %v4511 = vadd.f32 %v4443, %v4479
        %v4512 = vadd.f32 %v4444, %v4480
        %v4513 = vadd.f32 %v4445, %v4481
        %v4514 = vadd.f32 %v4446, %v4482
        %v4515 = vadd.f32 %v4447, %v4483
        %v4516 = vadd.f32 %v4448, %v4484
        %v4517 = vadd.f32 %v4449, %v4485
        %v4518 = vadd.f32 %v4450, %v4486
        %v4519 = vadd.f32 %v4451, %v4487
        %v4520 = vadd.f32 %v4452, %v4488
        %v4521 = vadd.f32 %v4453, %v4489
        %v4522 = vadd.f32 %v4454, %v4490
        %v4523 = vadd.f32 %v4455, %v4491
        %v4524 = vadd.f32 %v4456, %v4492
        %v4525 = vadd.f32 %v4457, %v4493
        %v4526 = vadd.f32 %v4458, %v4494
        %v4527 = vadd.f32 %v4459, %v4495
        %v4528 = vadd.f32 %v4460, %v4496
        %v4529 = vadd.f32 %v4461, %v4497
        %v4530 = vadd.f32 %v4462, %v4498
        %v4531 = vadd.f32 %v4463, %v4499
        %v4532 = vadd.f32 %v4464, %v4500
        %v4533 = vadd.f32 %v4465, %v4501
        %v4534 = vadd.f32 %v4466, %v4502
        %v4535 = vadd.f32 %v4467, %v4503
        %v4536 = vadd.f32 %v4468, %v4504
        %v4537 = vlaneseq
        %v4538 = vshrl.u32 %v4537, 7
        %v4539 = vsub.s32 5, %v4538
        %v4540 = vrot.slane %v287, %v4539
        %v4541 = vmul.f32 %v237, %v4540
        %v4542 = vmul.f32 %v238, %v4540
        %v4543 = vmul.f32 %v239, %v4540
        %v4544 = vmul.f32 %v240, %v4540
        %v4545 = vmul.f32 %v241, %v4540
        %v4546 = vmul.f32 %v242, %v4540
        %v4547 = vmul.f32 %v243, %v4540
        %v4548 = vmul.f32 %v244, %v4540
        %v4549 = vmul.f32 %v245, %v4540
        %v4550 = vmul.f32 %v246, %v4540
        %v4551 = vmul.f32 %v247, %v4540
        %v4552 = vmul.f32 %v248, %v4540
        %v4553 = vmul.f32 %v249, %v4540
        %v4554 = vmul.f32 %v250, %v4540
        %v4555 = vmul.f32 %v251, %v4540
        %v4556 = vmul.f32 %v252, %v4540
        %v4557 = vmul.f32 %v253, %v4540
        %v4558 = vmul.f32 %v254, %v4540
        %v4559 = vmul.f32 %v255, %v4540
        %v4560 = vmul.f32 %v256, %v4540
        %v4561 = vmul.f32 %v257, %v4540
        %v4562 = vmul.f32 %v258, %v4540
        %v4563 = vmul.f32 %v259, %v4540
        %v4564 = vmul.f32 %v260, %v4540
        %v4565 = vmul.f32 %v261, %v4540
        %v4566 = vmul.f32 %v262, %v4540
        %v4567 = vmul.f32 %v263, %v4540
        %v4568 = vmul.f32 %v264, %v4540
        %v4569 = vmul.f32 %v265, %v4540
        %v4570 = vmul.f32 %v266, %v4540
        %v4571 = vmul.f32 %v267, %v4540
        %v4572 = vmul.f32 %v268, %v4540
        %v4573 = vmul.f32 %v269, %v4540
        %v4574 = vmul.f32 %v270, %v4540
        %v4575 = vmul.f32 %v271, %v4540
        %v4576 = vmul.f32 %v272, %v4540
        %v4577 = vmul.f32 %v273, %v4540
        %v4578 = vmul.f32 %v274, %v4540
        %v4579 = vmul.f32 %v275, %v4540
        %v4580 = vmul.f32 %v276, %v4540
        %v4581 = vmul.f32 %v277, %v4540
        %v4582 = vmul.f32 %v278, %v4540
        %v4583 = vmul.f32 %v279, %v4540
        %v4584 = vmul.f32 %v280, %v4540
        %v4585 = vmul.f32 %v281, %v4540
        %v4586 = vmul.f32 %v282, %v4540
        %v4587 = vmul.f32 %v283, %v4540
        %v4588 = vmul.f32 %v284, %v4540
        %v4637 = vrot.slane %v4541, 1
        %v4638 = vrot.slane %v4542, 1
        %v4639 = vsel %vm457, %v4637, %v4638
        %v4640 = vrot.slane %v4543, 1
        %v4641 = vsel %vm457, %v4638, %v4640
        %v4642 = vrot.slane %v4544, 1
        %v4643 = vrot.slane %v4545, 1
        %v4644 = vsel %vm457, %v4642, %v4643
        %v4645 = vrot.slane %v4546, 1
        %v4646 = vsel %vm457, %v4643, %v4645
        %v4647 = vrot.slane %v4547, 1
        %v4648 = vrot.slane %v4548, 1
        %v4649 = vsel %vm457, %v4647, %v4648
        %v4650 = vrot.slane %v4549, 1
        %v4651 = vsel %vm457, %v4648, %v4650
        %v4652 = vrot.slane %v4550, 1
        %v4653 = vrot.slane %v4551, 1
        %v4654 = vsel %vm457, %v4652, %v4653
        %v4655 = vrot.slane %v4552, 1
        %v4656 = vsel %vm457, %v4653, %v4655
        %v4657 = vrot.slane %v4553, 1
        %v4658 = vrot.slane %v4554, 1
        %v4659 = vsel %vm457, %v4657, %v4658
        %v4660 = vrot.slane %v4555, 1
        %v4661 = vsel %vm457, %v4658, %v4660
        %v4662 = vrot.slane %v4556, 1
        %v4663 = vrot.slane %v4557, 1
        %v4664 = vsel %vm457, %v4662, %v4663
        %v4665 = vrot.slane %v4558, 1
        %v4666 = vsel %vm457, %v4663, %v4665
        %v4667 = vrot.slane %v4559, 1
        %v4668 = vrot.slane %v4560, 1
        %v4669 = vsel %vm457, %v4667, %v4668
        %v4670 = vrot.slane %v4561, 1
        %v4671 = vsel %vm457, %v4668, %v4670
        %v4672 = vrot.slane %v4562, 1
        %v4673 = vrot.slane %v4563, 1
        %v4674 = vsel %vm457, %v4672, %v4673
        %v4675 = vrot.slane %v4564, 1
        %v4676 = vsel %vm457, %v4673, %v4675
        %v4677 = vrot.slane %v4565, 1
        %v4678 = vrot.slane %v4566, 1
        %v4679 = vsel %vm457, %v4677, %v4678
        %v4680 = vrot.slane %v4567, 1
        %v4681 = vsel %vm457, %v4678, %v4680
        %v4682 = vrot.slane %v4568, 1
        %v4683 = vrot.slane %v4569, 1
        %v4684 = vsel %vm457, %v4682, %v4683
        %v4685 = vrot.slane %v4570, 1
        %v4686 = vsel %vm457, %v4683, %v4685
        %v4687 = vrot.slane %v4571, 1
        %v4688 = vrot.slane %v4572, 1
        %v4689 = vsel %vm457, %v4687, %v4688
        %v4690 = vrot.slane %v4573, 1
        %v4691 = vsel %vm457, %v4688, %v4690
        %v4692 = vrot.slane %v4574, 1
        %v4693 = vrot.slane %v4575, 1
        %v4694 = vsel %vm457, %v4692, %v4693
        %v4695 = vrot.slane %v4576, 1
        %v4696 = vsel %vm457, %v4693, %v4695
        %v4697 = vrot.slane %v4577, 1
        %v4698 = vrot.slane %v4578, 1
        %v4699 = vsel %vm457, %v4697, %v4698
        %v4700 = vrot.slane %v4579, 1
        %v4701 = vsel %vm457, %v4698, %v4700
        %v4702 = vrot.slane %v4580, 1
        %v4703 = vrot.slane %v4581, 1
        %v4704 = vsel %vm457, %v4702, %v4703
        %v4705 = vrot.slane %v4582, 1
        %v4706 = vsel %vm457, %v4703, %v4705
        %v4707 = vrot.slane %v4583, 1
        %v4708 = vrot.slane %v4584, 1
        %v4709 = vsel %vm457, %v4707, %v4708
        %v4710 = vrot.slane %v4585, 1
        %v4711 = vsel %vm457, %v4708, %v4710
        %v4712 = vrot.slane %v4586, 1
        %v4713 = vrot.slane %v4587, 1
        %v4714 = vsel %vm457, %v4712, %v4713
        %v4715 = vrot.slane %v4588, 1
        %v4716 = vsel %vm457, %v4713, %v4715
        %v4749 = vadd.f32 %v4505, %v4639
        %v4750 = vadd.f32 %v4506, %v4641
        %v4751 = vadd.f32 %v4507, %v4644
        %v4752 = vadd.f32 %v4508, %v4646
        %v4753 = vadd.f32 %v4509, %v4649
        %v4754 = vadd.f32 %v4510, %v4651
        %v4755 = vadd.f32 %v4511, %v4654
        %v4756 = vadd.f32 %v4512, %v4656
        %v4757 = vadd.f32 %v4513, %v4659
        %v4758 = vadd.f32 %v4514, %v4661
        %v4759 = vadd.f32 %v4515, %v4664
        %v4760 = vadd.f32 %v4516, %v4666
        %v4761 = vadd.f32 %v4517, %v4669
        %v4762 = vadd.f32 %v4518, %v4671
        %v4763 = vadd.f32 %v4519, %v4674
        %v4764 = vadd.f32 %v4520, %v4676
        %v4765 = vadd.f32 %v4521, %v4679
        %v4766 = vadd.f32 %v4522, %v4681
        %v4767 = vadd.f32 %v4523, %v4684
        %v4768 = vadd.f32 %v4524, %v4686
        %v4769 = vadd.f32 %v4525, %v4689
        %v4770 = vadd.f32 %v4526, %v4691
        %v4771 = vadd.f32 %v4527, %v4694
        %v4772 = vadd.f32 %v4528, %v4696
        %v4773 = vadd.f32 %v4529, %v4699
        %v4774 = vadd.f32 %v4530, %v4701
        %v4775 = vadd.f32 %v4531, %v4704
        %v4776 = vadd.f32 %v4532, %v4706
        %v4777 = vadd.f32 %v4533, %v4709
        %v4778 = vadd.f32 %v4534, %v4711
        %v4779 = vadd.f32 %v4535, %v4714
        %v4780 = vadd.f32 %v4536, %v4716
        %v4781 = vlaneseq
        %v4782 = vshrl.u32 %v4781, 7
        %v4783 = vsub.s32 6, %v4782
        %v4784 = vrot.slane %v287, %v4783
        %v4785 = vmul.f32 %v237, %v4784
        %v4786 = vmul.f32 %v238, %v4784
        %v4787 = vmul.f32 %v239, %v4784
        %v4788 = vmul.f32 %v240, %v4784
        %v4789 = vmul.f32 %v241, %v4784
        %v4790 = vmul.f32 %v242, %v4784
        %v4791 = vmul.f32 %v243, %v4784
        %v4792 = vmul.f32 %v244, %v4784
        %v4793 = vmul.f32 %v245, %v4784
        %v4794 = vmul.f32 %v246, %v4784
        %v4795 = vmul.f32 %v247, %v4784
        %v4796 = vmul.f32 %v248, %v4784
        %v4797 = vmul.f32 %v249, %v4784
        %v4798 = vmul.f32 %v250, %v4784
        %v4799 = vmul.f32 %v251, %v4784
        %v4800 = vmul.f32 %v252, %v4784
        %v4801 = vmul.f32 %v253, %v4784
        %v4802 = vmul.f32 %v254, %v4784
        %v4803 = vmul.f32 %v255, %v4784
        %v4804 = vmul.f32 %v256, %v4784
        %v4805 = vmul.f32 %v257, %v4784
        %v4806 = vmul.f32 %v258, %v4784
        %v4807 = vmul.f32 %v259, %v4784
        %v4808 = vmul.f32 %v260, %v4784
        %v4809 = vmul.f32 %v261, %v4784
        %v4810 = vmul.f32 %v262, %v4784
        %v4811 = vmul.f32 %v263, %v4784
        %v4812 = vmul.f32 %v264, %v4784
        %v4813 = vmul.f32 %v265, %v4784
        %v4814 = vmul.f32 %v266, %v4784
        %v4815 = vmul.f32 %v267, %v4784
        %v4816 = vmul.f32 %v268, %v4784
        %v4817 = vmul.f32 %v269, %v4784
        %v4818 = vmul.f32 %v270, %v4784
        %v4819 = vmul.f32 %v271, %v4784
        %v4820 = vmul.f32 %v272, %v4784
        %v4821 = vmul.f32 %v273, %v4784
        %v4822 = vmul.f32 %v274, %v4784
        %v4823 = vmul.f32 %v275, %v4784
        %v4824 = vmul.f32 %v276, %v4784
        %v4825 = vmul.f32 %v277, %v4784
        %v4826 = vmul.f32 %v278, %v4784
        %v4827 = vmul.f32 %v279, %v4784
        %v4828 = vmul.f32 %v280, %v4784
        %v4829 = vmul.f32 %v281, %v4784
        %v4830 = vmul.f32 %v282, %v4784
        %v4831 = vmul.f32 %v283, %v4784
        %v4832 = vmul.f32 %v284, %v4784
        %v4881 = vrot.slane %v4785, 2
        %v4882 = vrot.slane %v4786, 2
        %v4883 = vsel %vm702, %v4881, %v4882
        %v4884 = vrot.slane %v4787, 2
        %v4885 = vsel %vm702, %v4882, %v4884
        %v4886 = vrot.slane %v4788, 2
        %v4887 = vrot.slane %v4789, 2
        %v4888 = vsel %vm702, %v4886, %v4887
        %v4889 = vrot.slane %v4790, 2
        %v4890 = vsel %vm702, %v4887, %v4889
        %v4891 = vrot.slane %v4791, 2
        %v4892 = vrot.slane %v4792, 2
        %v4893 = vsel %vm702, %v4891, %v4892
        %v4894 = vrot.slane %v4793, 2
        %v4895 = vsel %vm702, %v4892, %v4894
        %v4896 = vrot.slane %v4794, 2
        %v4897 = vrot.slane %v4795, 2
        %v4898 = vsel %vm702, %v4896, %v4897
        %v4899 = vrot.slane %v4796, 2
        %v4900 = vsel %vm702, %v4897, %v4899
        %v4901 = vrot.slane %v4797, 2
        %v4902 = vrot.slane %v4798, 2
        %v4903 = vsel %vm702, %v4901, %v4902
        %v4904 = vrot.slane %v4799, 2
        %v4905 = vsel %vm702, %v4902, %v4904
        %v4906 = vrot.slane %v4800, 2
        %v4907 = vrot.slane %v4801, 2
        %v4908 = vsel %vm702, %v4906, %v4907
        %v4909 = vrot.slane %v4802, 2
        %v4910 = vsel %vm702, %v4907, %v4909
        %v4911 = vrot.slane %v4803, 2
        %v4912 = vrot.slane %v4804, 2
        %v4913 = vsel %vm702, %v4911, %v4912
        %v4914 = vrot.slane %v4805, 2
        %v4915 = vsel %vm702, %v4912, %v4914
        %v4916 = vrot.slane %v4806, 2
        %v4917 = vrot.slane %v4807, 2
        %v4918 = vsel %vm702, %v4916, %v4917
        %v4919 = vrot.slane %v4808, 2
        %v4920 = vsel %vm702, %v4917, %v4919
        %v4921 = vrot.slane %v4809, 2
        %v4922 = vrot.slane %v4810, 2
        %v4923 = vsel %vm702, %v4921, %v4922
        %v4924 = vrot.slane %v4811, 2
        %v4925 = vsel %vm702, %v4922, %v4924
        %v4926 = vrot.slane %v4812, 2
        %v4927 = vrot.slane %v4813, 2
        %v4928 = vsel %vm702, %v4926, %v4927
        %v4929 = vrot.slane %v4814, 2
        %v4930 = vsel %vm702, %v4927, %v4929
        %v4931 = vrot.slane %v4815, 2
        %v4932 = vrot.slane %v4816, 2
        %v4933 = vsel %vm702, %v4931, %v4932
        %v4934 = vrot.slane %v4817, 2
        %v4935 = vsel %vm702, %v4932, %v4934
        %v4936 = vrot.slane %v4818, 2
        %v4937 = vrot.slane %v4819, 2
        %v4938 = vsel %vm702, %v4936, %v4937
        %v4939 = vrot.slane %v4820, 2
        %v4940 = vsel %vm702, %v4937, %v4939
        %v4941 = vrot.slane %v4821, 2
        %v4942 = vrot.slane %v4822, 2
        %v4943 = vsel %vm702, %v4941, %v4942
        %v4944 = vrot.slane %v4823, 2
        %v4945 = vsel %vm702, %v4942, %v4944
        %v4946 = vrot.slane %v4824, 2
        %v4947 = vrot.slane %v4825, 2
        %v4948 = vsel %vm702, %v4946, %v4947
        %v4949 = vrot.slane %v4826, 2
        %v4950 = vsel %vm702, %v4947, %v4949
        %v4951 = vrot.slane %v4827, 2
        %v4952 = vrot.slane %v4828, 2
        %v4953 = vsel %vm702, %v4951, %v4952
        %v4954 = vrot.slane %v4829, 2
        %v4955 = vsel %vm702, %v4952, %v4954
        %v4956 = vrot.slane %v4830, 2
        %v4957 = vrot.slane %v4831, 2
        %v4958 = vsel %vm702, %v4956, %v4957
        %v4959 = vrot.slane %v4832, 2
        %v4960 = vsel %vm702, %v4957, %v4959
        %v4993 = vadd.f32 %v4749, %v4883
        %v4994 = vadd.f32 %v4750, %v4885
        %v4995 = vadd.f32 %v4751, %v4888
        %v4996 = vadd.f32 %v4752, %v4890
        %v4997 = vadd.f32 %v4753, %v4893
        %v4998 = vadd.f32 %v4754, %v4895
        %v4999 = vadd.f32 %v4755, %v4898
        %v5000 = vadd.f32 %v4756, %v4900
        %v5001 = vadd.f32 %v4757, %v4903
        %v5002 = vadd.f32 %v4758, %v4905
        %v5003 = vadd.f32 %v4759, %v4908
        %v5004 = vadd.f32 %v4760, %v4910
        %v5005 = vadd.f32 %v4761, %v4913
        %v5006 = vadd.f32 %v4762, %v4915
        %v5007 = vadd.f32 %v4763, %v4918
        %v5008 = vadd.f32 %v4764, %v4920
        %v5009 = vadd.f32 %v4765, %v4923
        %v5010 = vadd.f32 %v4766, %v4925
        %v5011 = vadd.f32 %v4767, %v4928
        %v5012 = vadd.f32 %v4768, %v4930
        %v5013 = vadd.f32 %v4769, %v4933
        %v5014 = vadd.f32 %v4770, %v4935
        %v5015 = vadd.f32 %v4771, %v4938
        %v5016 = vadd.f32 %v4772, %v4940
        %v5017 = vadd.f32 %v4773, %v4943
        %v5018 = vadd.f32 %v4774, %v4945
        %v5019 = vadd.f32 %v4775, %v4948
        %v5020 = vadd.f32 %v4776, %v4950
        %v5021 = vadd.f32 %v4777, %v4953
        %v5022 = vadd.f32 %v4778, %v4955
        %v5023 = vadd.f32 %v4779, %v4958
        %v5024 = vadd.f32 %v4780, %v4960
        %v5025 = vlaneseq
        %v5026 = vshrl.u32 %v5025, 7
        %v5027 = vsub.s32 7, %v5026
        %v5028 = vrot.slane %v287, %v5027
        %v5029 = vmul.f32 %v237, %v5028
        %v5030 = vmul.f32 %v238, %v5028
        %v5031 = vmul.f32 %v239, %v5028
        %v5032 = vmul.f32 %v240, %v5028
        %v5033 = vmul.f32 %v241, %v5028
        %v5034 = vmul.f32 %v242, %v5028
        %v5035 = vmul.f32 %v243, %v5028
        %v5036 = vmul.f32 %v244, %v5028
        %v5037 = vmul.f32 %v245, %v5028
        %v5038 = vmul.f32 %v246, %v5028
        %v5039 = vmul.f32 %v247, %v5028
        %v5040 = vmul.f32 %v248, %v5028
        %v5041 = vmul.f32 %v249, %v5028
        %v5042 = vmul.f32 %v250, %v5028
        %v5043 = vmul.f32 %v251, %v5028
        %v5044 = vmul.f32 %v252, %v5028
        %v5045 = vmul.f32 %v253, %v5028
        %v5046 = vmul.f32 %v254, %v5028
        %v5047 = vmul.f32 %v255, %v5028
        %v5048 = vmul.f32 %v256, %v5028
        %v5049 = vmul.f32 %v257, %v5028
        %v5050 = vmul.f32 %v258, %v5028
        %v5051 = vmul.f32 %v259, %v5028
        %v5052 = vmul.f32 %v260, %v5028
        %v5053 = vmul.f32 %v261, %v5028
        %v5054 = vmul.f32 %v262, %v5028
        %v5055 = vmul.f32 %v263, %v5028
        %v5056 = vmul.f32 %v264, %v5028
        %v5057 = vmul.f32 %v265, %v5028
        %v5058 = vmul.f32 %v266, %v5028
        %v5059 = vmul.f32 %v267, %v5028
        %v5060 = vmul.f32 %v268, %v5028
        %v5061 = vmul.f32 %v269, %v5028
        %v5062 = vmul.f32 %v270, %v5028
        %v5063 = vmul.f32 %v271, %v5028
        %v5064 = vmul.f32 %v272, %v5028
        %v5065 = vmul.f32 %v273, %v5028
        %v5066 = vmul.f32 %v274, %v5028
        %v5067 = vmul.f32 %v275, %v5028
        %v5068 = vmul.f32 %v276, %v5028
        %v5069 = vmul.f32 %v277, %v5028
        %v5070 = vmul.f32 %v278, %v5028
        %v5071 = vmul.f32 %v279, %v5028
        %v5072 = vmul.f32 %v280, %v5028
        %v5073 = vmul.f32 %v281, %v5028
        %v5074 = vmul.f32 %v282, %v5028
        %v5075 = vmul.f32 %v283, %v5028
        %v5076 = vmul.f32 %v284, %v5028
        %v5125 = vrot.slane %v5029, 3
        %v5126 = vrot.slane %v5030, 3
        %v5127 = vsel %vm947, %v5125, %v5126
        %v5128 = vrot.slane %v5031, 3
        %v5129 = vsel %vm947, %v5126, %v5128
        %v5130 = vrot.slane %v5032, 3
        %v5131 = vrot.slane %v5033, 3
        %v5132 = vsel %vm947, %v5130, %v5131
        %v5133 = vrot.slane %v5034, 3
        %v5134 = vsel %vm947, %v5131, %v5133
        %v5135 = vrot.slane %v5035, 3
        %v5136 = vrot.slane %v5036, 3
        %v5137 = vsel %vm947, %v5135, %v5136
        %v5138 = vrot.slane %v5037, 3
        %v5139 = vsel %vm947, %v5136, %v5138
        %v5140 = vrot.slane %v5038, 3
        %v5141 = vrot.slane %v5039, 3
        %v5142 = vsel %vm947, %v5140, %v5141
        %v5143 = vrot.slane %v5040, 3
        %v5144 = vsel %vm947, %v5141, %v5143
        %v5145 = vrot.slane %v5041, 3
        %v5146 = vrot.slane %v5042, 3
        %v5147 = vsel %vm947, %v5145, %v5146
        %v5148 = vrot.slane %v5043, 3
        %v5149 = vsel %vm947, %v5146, %v5148
        %v5150 = vrot.slane %v5044, 3
        %v5151 = vrot.slane %v5045, 3
        %v5152 = vsel %vm947, %v5150, %v5151
        %v5153 = vrot.slane %v5046, 3
        %v5154 = vsel %vm947, %v5151, %v5153
        %v5155 = vrot.slane %v5047, 3
        %v5156 = vrot.slane %v5048, 3
        %v5157 = vsel %vm947, %v5155, %v5156
        %v5158 = vrot.slane %v5049, 3
        %v5159 = vsel %vm947, %v5156, %v5158
        %v5160 = vrot.slane %v5050, 3
        %v5161 = vrot.slane %v5051, 3
        %v5162 = vsel %vm947, %v5160, %v5161
        %v5163 = vrot.slane %v5052, 3
        %v5164 = vsel %vm947, %v5161, %v5163
        %v5165 = vrot.slane %v5053, 3
        %v5166 = vrot.slane %v5054, 3
        %v5167 = vsel %vm947, %v5165, %v5166
        %v5168 = vrot.slane %v5055, 3
        %v5169 = vsel %vm947, %v5166, %v5168
        %v5170 = vrot.slane %v5056, 3
        %v5171 = vrot.slane %v5057, 3
        %v5172 = vsel %vm947, %v5170, %v5171
        %v5173 = vrot.slane %v5058, 3
        %v5174 = vsel %vm947, %v5171, %v5173
        %v5175 = vrot.slane %v5059, 3
        %v5176 = vrot.slane %v5060, 3
        %v5177 = vsel %vm947, %v5175, %v5176
        %v5178 = vrot.slane %v5061, 3
        %v5179 = vsel %vm947, %v5176, %v5178
        %v5180 = vrot.slane %v5062, 3
        %v5181 = vrot.slane %v5063, 3
        %v5182 = vsel %vm947, %v5180, %v5181
        %v5183 = vrot.slane %v5064, 3
        %v5184 = vsel %vm947, %v5181, %v5183
        %v5185 = vrot.slane %v5065, 3
        %v5186 = vrot.slane %v5066, 3
        %v5187 = vsel %vm947, %v5185, %v5186
        %v5188 = vrot.slane %v5067, 3
        %v5189 = vsel %vm947, %v5186, %v5188
        %v5190 = vrot.slane %v5068, 3
        %v5191 = vrot.slane %v5069, 3
        %v5192 = vsel %vm947, %v5190, %v5191
        %v5193 = vrot.slane %v5070, 3
        %v5194 = vsel %vm947, %v5191, %v5193
        %v5195 = vrot.slane %v5071, 3
        %v5196 = vrot.slane %v5072, 3
        %v5197 = vsel %vm947, %v5195, %v5196
        %v5198 = vrot.slane %v5073, 3
        %v5199 = vsel %vm947, %v5196, %v5198
        %v5200 = vrot.slane %v5074, 3
        %v5201 = vrot.slane %v5075, 3
        %v5202 = vsel %vm947, %v5200, %v5201
        %v5203 = vrot.slane %v5076, 3
        %v5204 = vsel %vm947, %v5201, %v5203
        %v5237 = vadd.f32 %v4993, %v5127
        %v5238 = vadd.f32 %v4994, %v5129
        %v5239 = vadd.f32 %v4995, %v5132
        %v5240 = vadd.f32 %v4996, %v5134
        %v5241 = vadd.f32 %v4997, %v5137
        %v5242 = vadd.f32 %v4998, %v5139
        %v5243 = vadd.f32 %v4999, %v5142
        %v5244 = vadd.f32 %v5000, %v5144
        %v5245 = vadd.f32 %v5001, %v5147
        %v5246 = vadd.f32 %v5002, %v5149
        %v5247 = vadd.f32 %v5003, %v5152
        %v5248 = vadd.f32 %v5004, %v5154
        %v5249 = vadd.f32 %v5005, %v5157
        %v5250 = vadd.f32 %v5006, %v5159
        %v5251 = vadd.f32 %v5007, %v5162
        %v5252 = vadd.f32 %v5008, %v5164
        %v5253 = vadd.f32 %v5009, %v5167
        %v5254 = vadd.f32 %v5010, %v5169
        %v5255 = vadd.f32 %v5011, %v5172
        %v5256 = vadd.f32 %v5012, %v5174
        %v5257 = vadd.f32 %v5013, %v5177
        %v5258 = vadd.f32 %v5014, %v5179
        %v5259 = vadd.f32 %v5015, %v5182
        %v5260 = vadd.f32 %v5016, %v5184
        %v5261 = vadd.f32 %v5017, %v5187
        %v5262 = vadd.f32 %v5018, %v5189
        %v5263 = vadd.f32 %v5019, %v5192
        %v5264 = vadd.f32 %v5020, %v5194
        %v5265 = vadd.f32 %v5021, %v5197
        %v5266 = vadd.f32 %v5022, %v5199
        %v5267 = vadd.f32 %v5023, %v5202
        %v5268 = vadd.f32 %v5024, %v5204
        %v5269 = vlaneseq
        %v5270 = vshrl.u32 %v5269, 7
        %v5271 = vsub.s32 0, %v5270
        %v5272 = vrot.slane %v288, %v5271
        %v5273 = vmul.f32 %v237, %v5272
        %v5274 = vmul.f32 %v238, %v5272
        %v5275 = vmul.f32 %v239, %v5272
        %v5276 = vmul.f32 %v240, %v5272
        %v5277 = vmul.f32 %v241, %v5272
        %v5278 = vmul.f32 %v242, %v5272
        %v5279 = vmul.f32 %v243, %v5272
        %v5280 = vmul.f32 %v244, %v5272
        %v5281 = vmul.f32 %v245, %v5272
        %v5282 = vmul.f32 %v246, %v5272
        %v5283 = vmul.f32 %v247, %v5272
        %v5284 = vmul.f32 %v248, %v5272
        %v5285 = vmul.f32 %v249, %v5272
        %v5286 = vmul.f32 %v250, %v5272
        %v5287 = vmul.f32 %v251, %v5272
        %v5288 = vmul.f32 %v252, %v5272
        %v5289 = vmul.f32 %v253, %v5272
        %v5290 = vmul.f32 %v254, %v5272
        %v5291 = vmul.f32 %v255, %v5272
        %v5292 = vmul.f32 %v256, %v5272
        %v5293 = vmul.f32 %v257, %v5272
        %v5294 = vmul.f32 %v258, %v5272
        %v5295 = vmul.f32 %v259, %v5272
        %v5296 = vmul.f32 %v260, %v5272
        %v5297 = vmul.f32 %v261, %v5272
        %v5298 = vmul.f32 %v262, %v5272
        %v5299 = vmul.f32 %v263, %v5272
        %v5300 = vmul.f32 %v264, %v5272
        %v5301 = vmul.f32 %v265, %v5272
        %v5302 = vmul.f32 %v266, %v5272
        %v5303 = vmul.f32 %v267, %v5272
        %v5304 = vmul.f32 %v268, %v5272
        %v5305 = vmul.f32 %v269, %v5272
        %v5306 = vmul.f32 %v270, %v5272
        %v5307 = vmul.f32 %v271, %v5272
        %v5308 = vmul.f32 %v272, %v5272
        %v5309 = vmul.f32 %v273, %v5272
        %v5310 = vmul.f32 %v274, %v5272
        %v5311 = vmul.f32 %v275, %v5272
        %v5312 = vmul.f32 %v276, %v5272
        %v5313 = vmul.f32 %v277, %v5272
        %v5314 = vmul.f32 %v278, %v5272
        %v5315 = vmul.f32 %v279, %v5272
        %v5316 = vmul.f32 %v280, %v5272
        %v5317 = vmul.f32 %v281, %v5272
        %v5318 = vmul.f32 %v282, %v5272
        %v5319 = vmul.f32 %v283, %v5272
        %v5320 = vmul.f32 %v284, %v5272
        %v5369 = vrot.slane %v5273, 4
        %v5370 = vrot.slane %v5274, 4
        %v5371 = vsel %vm1192, %v5369, %v5370
        %v5372 = vrot.slane %v5275, 4
        %v5373 = vsel %vm1192, %v5370, %v5372
        %v5374 = vrot.slane %v5276, 4
        %v5375 = vrot.slane %v5277, 4
        %v5376 = vsel %vm1192, %v5374, %v5375
        %v5377 = vrot.slane %v5278, 4
        %v5378 = vsel %vm1192, %v5375, %v5377
        %v5379 = vrot.slane %v5279, 4
        %v5380 = vrot.slane %v5280, 4
        %v5381 = vsel %vm1192, %v5379, %v5380
        %v5382 = vrot.slane %v5281, 4
        %v5383 = vsel %vm1192, %v5380, %v5382
        %v5384 = vrot.slane %v5282, 4
        %v5385 = vrot.slane %v5283, 4
        %v5386 = vsel %vm1192, %v5384, %v5385
        %v5387 = vrot.slane %v5284, 4
        %v5388 = vsel %vm1192, %v5385, %v5387
        %v5389 = vrot.slane %v5285, 4
        %v5390 = vrot.slane %v5286, 4
        %v5391 = vsel %vm1192, %v5389, %v5390
        %v5392 = vrot.slane %v5287, 4
        %v5393 = vsel %vm1192, %v5390, %v5392
        %v5394 = vrot.slane %v5288, 4
        %v5395 = vrot.slane %v5289, 4
        %v5396 = vsel %vm1192, %v5394, %v5395
        %v5397 = vrot.slane %v5290, 4
        %v5398 = vsel %vm1192, %v5395, %v5397
        %v5399 = vrot.slane %v5291, 4
        %v5400 = vrot.slane %v5292, 4
        %v5401 = vsel %vm1192, %v5399, %v5400
        %v5402 = vrot.slane %v5293, 4
        %v5403 = vsel %vm1192, %v5400, %v5402
        %v5404 = vrot.slane %v5294, 4
        %v5405 = vrot.slane %v5295, 4
        %v5406 = vsel %vm1192, %v5404, %v5405
        %v5407 = vrot.slane %v5296, 4
        %v5408 = vsel %vm1192, %v5405, %v5407
        %v5409 = vrot.slane %v5297, 4
        %v5410 = vrot.slane %v5298, 4
        %v5411 = vsel %vm1192, %v5409, %v5410
        %v5412 = vrot.slane %v5299, 4
        %v5413 = vsel %vm1192, %v5410, %v5412
        %v5414 = vrot.slane %v5300, 4
        %v5415 = vrot.slane %v5301, 4
        %v5416 = vsel %vm1192, %v5414, %v5415
        %v5417 = vrot.slane %v5302, 4
        %v5418 = vsel %vm1192, %v5415, %v5417
        %v5419 = vrot.slane %v5303, 4
        %v5420 = vrot.slane %v5304, 4
        %v5421 = vsel %vm1192, %v5419, %v5420
        %v5422 = vrot.slane %v5305, 4
        %v5423 = vsel %vm1192, %v5420, %v5422
        %v5424 = vrot.slane %v5306, 4
        %v5425 = vrot.slane %v5307, 4
        %v5426 = vsel %vm1192, %v5424, %v5425
        %v5427 = vrot.slane %v5308, 4
        %v5428 = vsel %vm1192, %v5425, %v5427
        %v5429 = vrot.slane %v5309, 4
        %v5430 = vrot.slane %v5310, 4
        %v5431 = vsel %vm1192, %v5429, %v5430
        %v5432 = vrot.slane %v5311, 4
        %v5433 = vsel %vm1192, %v5430, %v5432
        %v5434 = vrot.slane %v5312, 4
        %v5435 = vrot.slane %v5313, 4
        %v5436 = vsel %vm1192, %v5434, %v5435
        %v5437 = vrot.slane %v5314, 4
        %v5438 = vsel %vm1192, %v5435, %v5437
        %v5439 = vrot.slane %v5315, 4
        %v5440 = vrot.slane %v5316, 4
        %v5441 = vsel %vm1192, %v5439, %v5440
        %v5442 = vrot.slane %v5317, 4
        %v5443 = vsel %vm1192, %v5440, %v5442
        %v5444 = vrot.slane %v5318, 4
        %v5445 = vrot.slane %v5319, 4
        %v5446 = vsel %vm1192, %v5444, %v5445
        %v5447 = vrot.slane %v5320, 4
        %v5448 = vsel %vm1192, %v5445, %v5447
        %v5481 = vadd.f32 %v5237, %v5371
        %v5482 = vadd.f32 %v5238, %v5373
        %v5483 = vadd.f32 %v5239, %v5376
        %v5484 = vadd.f32 %v5240, %v5378
        %v5485 = vadd.f32 %v5241, %v5381
        %v5486 = vadd.f32 %v5242, %v5383
        %v5487 = vadd.f32 %v5243, %v5386
        %v5488 = vadd.f32 %v5244, %v5388
        %v5489 = vadd.f32 %v5245, %v5391
        %v5490 = vadd.f32 %v5246, %v5393
        %v5491 = vadd.f32 %v5247, %v5396
        %v5492 = vadd.f32 %v5248, %v5398
        %v5493 = vadd.f32 %v5249, %v5401
        %v5494 = vadd.f32 %v5250, %v5403
        %v5495 = vadd.f32 %v5251, %v5406
        %v5496 = vadd.f32 %v5252, %v5408
        %v5497 = vadd.f32 %v5253, %v5411
        %v5498 = vadd.f32 %v5254, %v5413
        %v5499 = vadd.f32 %v5255, %v5416
        %v5500 = vadd.f32 %v5256, %v5418
        %v5501 = vadd.f32 %v5257, %v5421
        %v5502 = vadd.f32 %v5258, %v5423
        %v5503 = vadd.f32 %v5259, %v5426
        %v5504 = vadd.f32 %v5260, %v5428
        %v5505 = vadd.f32 %v5261, %v5431
        %v5506 = vadd.f32 %v5262, %v5433
        %v5507 = vadd.f32 %v5263, %v5436
        %v5508 = vadd.f32 %v5264, %v5438
        %v5509 = vadd.f32 %v5265, %v5441
        %v5510 = vadd.f32 %v5266, %v5443
        %v5511 = vadd.f32 %v5267, %v5446
        %v5512 = vadd.f32 %v5268, %v5448
        %v5513 = vld [vmem:[%s224] sm:$0x1]
        %v5515 = vlaneseq
        %v5516 = vshrl.u32 %v5515, 7
        %v5517 = vsub.s32 0, %v5516
        %v5518 = vrot.slane %v5513, %v5517
        %v5520 = vadd.f32 %v5481, %v5518
        %v5521 = vadd.f32 %v5482, %v5518
        %v5522 = vadd.f32 %v5483, %v5518
        %v5523 = vadd.f32 %v5484, %v5518
        %v5524 = vadd.f32 %v5485, %v5518
        %v5525 = vadd.f32 %v5486, %v5518
        %v5526 = vadd.f32 %v5487, %v5518
        %v5527 = vadd.f32 %v5488, %v5518
        %v5528 = vadd.f32 %v5489, %v5518
        %v5529 = vadd.f32 %v5490, %v5518
        %v5530 = vadd.f32 %v5491, %v5518
        %v5531 = vadd.f32 %v5492, %v5518
        %v5532 = vadd.f32 %v5493, %v5518
        %v5533 = vadd.f32 %v5494, %v5518
        %v5534 = vadd.f32 %v5495, %v5518
        %v5535 = vadd.f32 %v5496, %v5518
        %v5536 = vadd.f32 %v5497, %v5518
        %v5537 = vadd.f32 %v5498, %v5518
        %v5538 = vadd.f32 %v5499, %v5518
        %v5539 = vadd.f32 %v5500, %v5518
        %v5540 = vadd.f32 %v5501, %v5518
        %v5541 = vadd.f32 %v5502, %v5518
        %v5542 = vadd.f32 %v5503, %v5518
        %v5543 = vadd.f32 %v5504, %v5518
        %v5544 = vadd.f32 %v5505, %v5518
        %v5545 = vadd.f32 %v5506, %v5518
        %v5546 = vadd.f32 %v5507, %v5518
        %v5547 = vadd.f32 %v5508, %v5518
        %v5548 = vadd.f32 %v5509, %v5518
        %v5549 = vadd.f32 %v5510, %v5518
        %v5550 = vadd.f32 %v5511, %v5518
        %v5551 = vadd.f32 %v5512, %v5518
        %v5552 = vmul.f32 %v5520, 0.5
        %v5553 = vmul.f32 %v5521, 0.5
        %v5554 = vmul.f32 %v5522, 0.5
        %v5555 = vmul.f32 %v5523, 0.5
        %v5556 = vmul.f32 %v5524, 0.5
        %v5557 = vmul.f32 %v5525, 0.5
        %v5558 = vmul.f32 %v5526, 0.5
        %v5559 = vmul.f32 %v5527, 0.5
        %v5560 = vmul.f32 %v5528, 0.5
        %v5561 = vmul.f32 %v5529, 0.5
        %v5562 = vmul.f32 %v5530, 0.5
        %v5563 = vmul.f32 %v5531, 0.5
        %v5564 = vmul.f32 %v5532, 0.5
        %v5565 = vmul.f32 %v5533, 0.5
        %v5566 = vmul.f32 %v5534, 0.5
        %v5567 = vmul.f32 %v5535, 0.5
        %v5568 = vmul.f32 %v5536, 0.5
        %v5569 = vmul.f32 %v5537, 0.5
        %v5570 = vmul.f32 %v5538, 0.5
        %v5571 = vmul.f32 %v5539, 0.5
        %v5572 = vmul.f32 %v5540, 0.5
        %v5573 = vmul.f32 %v5541, 0.5
        %v5574 = vmul.f32 %v5542, 0.5
        %v5575 = vmul.f32 %v5543, 0.5
        %v5576 = vmul.f32 %v5544, 0.5
        %v5577 = vmul.f32 %v5545, 0.5
        %v5578 = vmul.f32 %v5546, 0.5
        %v5579 = vmul.f32 %v5547, 0.5
        %v5580 = vmul.f32 %v5548, 0.5
        %v5581 = vmul.f32 %v5549, 0.5
        %v5582 = vmul.f32 %v5550, 0.5
        %v5583 = vmul.f32 %v5551, 0.5
        %v5584 = vmul.f32 %v5520, 0.70710677
        %v5585 = vmul.f32 %v5521, 0.70710677
        %v5586 = vmul.f32 %v5522, 0.70710677
        %v5587 = vmul.f32 %v5523, 0.70710677
        %v5588 = vmul.f32 %v5524, 0.70710677
        %v5589 = vmul.f32 %v5525, 0.70710677
        %v5590 = vmul.f32 %v5526, 0.70710677
        %v5591 = vmul.f32 %v5527, 0.70710677
        %v5592 = vmul.f32 %v5528, 0.70710677
        %v5593 = vmul.f32 %v5529, 0.70710677
        %v5594 = vmul.f32 %v5530, 0.70710677
        %v5595 = vmul.f32 %v5531, 0.70710677
        %v5596 = vmul.f32 %v5532, 0.70710677
        %v5597 = vmul.f32 %v5533, 0.70710677
        %v5598 = vmul.f32 %v5534, 0.70710677
        %v5599 = vmul.f32 %v5535, 0.70710677
        %v5600 = vmul.f32 %v5536, 0.70710677
        %v5601 = vmul.f32 %v5537, 0.70710677
        %v5602 = vmul.f32 %v5538, 0.70710677
        %v5603 = vmul.f32 %v5539, 0.70710677
        %v5604 = vmul.f32 %v5540, 0.70710677
        %v5605 = vmul.f32 %v5541, 0.70710677
        %v5606 = vmul.f32 %v5542, 0.70710677
        %v5607 = vmul.f32 %v5543, 0.70710677
        %v5608 = vmul.f32 %v5544, 0.70710677
        %v5609 = vmul.f32 %v5545, 0.70710677
        %v5610 = vmul.f32 %v5546, 0.70710677
        %v5611 = vmul.f32 %v5547, 0.70710677
        %v5612 = vmul.f32 %v5548, 0.70710677
        %v5613 = vmul.f32 %v5549, 0.70710677
        %v5614 = vmul.f32 %v5550, 0.70710677
        %v5615 = vmul.f32 %v5551, 0.70710677
        %v5616 = vand.u32 2147483647, %v5584
        %v5617 = vand.u32 2147483647, %v5585
        %v5618 = vand.u32 2147483647, %v5586
        %v5619 = vand.u32 2147483647, %v5587
        %v5620 = vand.u32 2147483647, %v5588
        %v5621 = vand.u32 2147483647, %v5589
        %v5622 = vand.u32 2147483647, %v5590
        %v5623 = vand.u32 2147483647, %v5591
        %v5624 = vand.u32 2147483647, %v5592
        %v5625 = vand.u32 2147483647, %v5593
        %v5626 = vand.u32 2147483647, %v5594
        %v5627 = vand.u32 2147483647, %v5595
        %v5628 = vand.u32 2147483647, %v5596
        %v5629 = vand.u32 2147483647, %v5597
        %v5630 = vand.u32 2147483647, %v5598
        %v5631 = vand.u32 2147483647, %v5599
        %v5632 = vand.u32 2147483647, %v5600
        %v5633 = vand.u32 2147483647, %v5601
        %v5634 = vand.u32 2147483647, %v5602
        %v5635 = vand.u32 2147483647, %v5603
        %v5636 = vand.u32 2147483647, %v5604
        %v5637 = vand.u32 2147483647, %v5605
        %v5638 = vand.u32 2147483647, %v5606
        %v5639 = vand.u32 2147483647, %v5607
        %v5640 = vand.u32 2147483647, %v5608
        %v5641 = vand.u32 2147483647, %v5609
        %v5642 = vand.u32 2147483647, %v5610
        %v5643 = vand.u32 2147483647, %v5611
        %v5644 = vand.u32 2147483647, %v5612
        %v5645 = vand.u32 2147483647, %v5613
        %v5646 = vand.u32 2147483647, %v5614
        %v5647 = vand.u32 2147483647, %v5615
        %v5648 = vmul.f32 %v5616, 0.3275911
        %v5649 = vmul.f32 %v5617, 0.3275911
        %v5650 = vmul.f32 %v5618, 0.3275911
        %v5651 = vmul.f32 %v5619, 0.3275911
        %v5652 = vmul.f32 %v5620, 0.3275911
        %v5653 = vmul.f32 %v5621, 0.3275911
        %v5654 = vmul.f32 %v5622, 0.3275911
        %v5655 = vmul.f32 %v5623, 0.3275911
        %v5656 = vmul.f32 %v5624, 0.3275911
        %v5657 = vmul.f32 %v5625, 0.3275911
        %v5658 = vmul.f32 %v5626, 0.3275911
        %v5659 = vmul.f32 %v5627, 0.3275911
        %v5660 = vmul.f32 %v5628, 0.3275911
        %v5661 = vmul.f32 %v5629, 0.3275911
        %v5662 = vmul.f32 %v5630, 0.3275911
        %v5663 = vmul.f32 %v5631, 0.3275911
        %v5664 = vmul.f32 %v5632, 0.3275911
        %v5665 = vmul.f32 %v5633, 0.3275911
        %v5666 = vmul.f32 %v5634, 0.3275911
        %v5667 = vmul.f32 %v5635, 0.3275911
        %v5668 = vmul.f32 %v5636, 0.3275911
        %v5669 = vmul.f32 %v5637, 0.3275911
        %v5670 = vmul.f32 %v5638, 0.3275911
        %v5671 = vmul.f32 %v5639, 0.3275911
        %v5672 = vmul.f32 %v5640, 0.3275911
        %v5673 = vmul.f32 %v5641, 0.3275911
        %v5674 = vmul.f32 %v5642, 0.3275911
        %v5675 = vmul.f32 %v5643, 0.3275911
        %v5676 = vmul.f32 %v5644, 0.3275911
        %v5677 = vmul.f32 %v5645, 0.3275911
        %v5678 = vmul.f32 %v5646, 0.3275911
        %v5679 = vmul.f32 %v5647, 0.3275911
        %v5680 = vadd.f32 %v5648, 1.0
        %v5681 = vadd.f32 %v5649, 1.0
        %v5682 = vadd.f32 %v5650, 1.0
        %v5683 = vadd.f32 %v5651, 1.0
        %v5684 = vadd.f32 %v5652, 1.0
        %v5685 = vadd.f32 %v5653, 1.0
        %v5686 = vadd.f32 %v5654, 1.0
        %v5687 = vadd.f32 %v5655, 1.0
        %v5688 = vadd.f32 %v5656, 1.0
        %v5689 = vadd.f32 %v5657, 1.0
        %v5690 = vadd.f32 %v5658, 1.0
        %v5691 = vadd.f32 %v5659, 1.0
        %v5692 = vadd.f32 %v5660, 1.0
        %v5693 = vadd.f32 %v5661, 1.0
        %v5694 = vadd.f32 %v5662, 1.0
        %v5695 = vadd.f32 %v5663, 1.0
        %v5696 = vadd.f32 %v5664, 1.0
        %v5697 = vadd.f32 %v5665, 1.0
        %v5698 = vadd.f32 %v5666, 1.0
        %v5699 = vadd.f32 %v5667, 1.0
        %v5700 = vadd.f32 %v5668, 1.0
        %v5701 = vadd.f32 %v5669, 1.0
        %v5702 = vadd.f32 %v5670, 1.0
        %v5703 = vadd.f32 %v5671, 1.0
        %v5704 = vadd.f32 %v5672, 1.0
        %v5705 = vadd.f32 %v5673, 1.0
        %v5706 = vadd.f32 %v5674, 1.0
        %v5707 = vadd.f32 %v5675, 1.0
        %v5708 = vadd.f32 %v5676, 1.0
        %v5709 = vadd.f32 %v5677, 1.0
        %v5710 = vadd.f32 %v5678, 1.0
        %v5711 = vadd.f32 %v5679, 1.0
        %v5712 = vrcp.pop %v5680
        %v5713 = vmul.f32 1.0, %v5712
        %v5714 = vrcp.pop %v5681
        %v5715 = vmul.f32 1.0, %v5714
        %v5716 = vrcp.pop %v5682
        %v5717 = vmul.f32 1.0, %v5716
        %v5718 = vrcp.pop %v5683
        %v5719 = vmul.f32 1.0, %v5718
        %v5720 = vrcp.pop %v5684
        %v5721 = vmul.f32 1.0, %v5720
        %v5722 = vrcp.pop %v5685
        %v5723 = vmul.f32 1.0, %v5722
        %v5724 = vrcp.pop %v5686
        %v5725 = vmul.f32 1.0, %v5724
        %v5726 = vrcp.pop %v5687
        %v5727 = vmul.f32 1.0, %v5726
        %v5728 = vrcp.pop %v5688
        %v5729 = vmul.f32 1.0, %v5728
        %v5730 = vrcp.pop %v5689
        %v5731 = vmul.f32 1.0, %v5730
        %v5732 = vrcp.pop %v5690
        %v5733 = vmul.f32 1.0, %v5732
        %v5734 = vrcp.pop %v5691
        %v5735 = vmul.f32 1.0, %v5734
        %v5736 = vrcp.pop %v5692
        %v5737 = vmul.f32 1.0, %v5736
        %v5738 = vrcp.pop %v5693
        %v5739 = vmul.f32 1.0, %v5738
        %v5740 = vrcp.pop %v5694
        %v5741 = vmul.f32 1.0, %v5740
        %v5742 = vrcp.pop %v5695
        %v5743 = vmul.f32 1.0, %v5742
        %v5744 = vrcp.pop %v5696
        %v5745 = vmul.f32 1.0, %v5744
        %v5746 = vrcp.pop %v5697
        %v5747 = vmul.f32 1.0, %v5746
        %v5748 = vrcp.pop %v5698
        %v5749 = vmul.f32 1.0, %v5748
        %v5750 = vrcp.pop %v5699
        %v5751 = vmul.f32 1.0, %v5750
        %v5752 = vrcp.pop %v5700
        %v5753 = vmul.f32 1.0, %v5752
        %v5754 = vrcp.pop %v5701
        %v5755 = vmul.f32 1.0, %v5754
        %v5756 = vrcp.pop %v5702
        %v5757 = vmul.f32 1.0, %v5756
        %v5758 = vrcp.pop %v5703
        %v5759 = vmul.f32 1.0, %v5758
        %v5760 = vrcp.pop %v5704
        %v5761 = vmul.f32 1.0, %v5760
        %v5762 = vrcp.pop %v5705
        %v5763 = vmul.f32 1.0, %v5762
        %v5764 = vrcp.pop %v5706
        %v5765 = vmul.f32 1.0, %v5764
        %v5766 = vrcp.pop %v5707
        %v5767 = vmul.f32 1.0, %v5766
        %v5768 = vrcp.pop %v5708
        %v5769 = vmul.f32 1.0, %v5768
        %v5770 = vrcp.pop %v5709
        %v5771 = vmul.f32 1.0, %v5770
        %v5772 = vrcp.pop %v5710
        %v5773 = vmul.f32 1.0, %v5772
        %v5774 = vrcp.pop %v5711
        %v5775 = vmul.f32 1.0, %v5774
        %v5776 = vmul.f32 %v5713, 1.0614054
        %v5777 = vmul.f32 %v5715, 1.0614054
        %v5778 = vmul.f32 %v5717, 1.0614054
        %v5779 = vmul.f32 %v5719, 1.0614054
        %v5780 = vmul.f32 %v5721, 1.0614054
        %v5781 = vmul.f32 %v5723, 1.0614054
        %v5782 = vmul.f32 %v5725, 1.0614054
        %v5783 = vmul.f32 %v5727, 1.0614054
        %v5784 = vmul.f32 %v5729, 1.0614054
        %v5785 = vmul.f32 %v5731, 1.0614054
        %v5786 = vmul.f32 %v5733, 1.0614054
        %v5787 = vmul.f32 %v5735, 1.0614054
        %v5788 = vmul.f32 %v5737, 1.0614054
        %v5789 = vmul.f32 %v5739, 1.0614054
        %v5790 = vmul.f32 %v5741, 1.0614054
        %v5791 = vmul.f32 %v5743, 1.0614054
        %v5792 = vmul.f32 %v5745, 1.0614054
        %v5793 = vmul.f32 %v5747, 1.0614054
        %v5794 = vmul.f32 %v5749, 1.0614054
        %v5795 = vmul.f32 %v5751, 1.0614054
        %v5796 = vmul.f32 %v5753, 1.0614054
        %v5797 = vmul.f32 %v5755, 1.0614054
        %v5798 = vmul.f32 %v5757, 1.0614054
        %v5799 = vmul.f32 %v5759, 1.0614054
        %v5800 = vmul.f32 %v5761, 1.0614054
        %v5801 = vmul.f32 %v5763, 1.0614054
        %v5802 = vmul.f32 %v5765, 1.0614054
        %v5803 = vmul.f32 %v5767, 1.0614054
        %v5804 = vmul.f32 %v5769, 1.0614054
        %v5805 = vmul.f32 %v5771, 1.0614054
        %v5806 = vmul.f32 %v5773, 1.0614054
        %v5807 = vmul.f32 %v5775, 1.0614054
        %v5808 = vadd.f32 %v5776, -1.4531521
        %v5809 = vadd.f32 %v5777, -1.4531521
        %v5810 = vadd.f32 %v5778, -1.4531521
        %v5811 = vadd.f32 %v5779, -1.4531521
        %v5812 = vadd.f32 %v5780, -1.4531521
        %v5813 = vadd.f32 %v5781, -1.4531521
        %v5814 = vadd.f32 %v5782, -1.4531521
        %v5815 = vadd.f32 %v5783, -1.4531521
        %v5816 = vadd.f32 %v5784, -1.4531521
        %v5817 = vadd.f32 %v5785, -1.4531521
        %v5818 = vadd.f32 %v5786, -1.4531521
        %v5819 = vadd.f32 %v5787, -1.4531521
        %v5820 = vadd.f32 %v5788, -1.4531521
        %v5821 = vadd.f32 %v5789, -1.4531521
        %v5822 = vadd.f32 %v5790, -1.4531521
        %v5823 = vadd.f32 %v5791, -1.4531521
        %v5824 = vadd.f32 %v5792, -1.4531521
        %v5825 = vadd.f32 %v5793, -1.4531521
        %v5826 = vadd.f32 %v5794, -1.4531521
        %v5827 = vadd.f32 %v5795, -1.4531521
        %v5828 = vadd.f32 %v5796, -1.4531521
        %v5829 = vadd.f32 %v5797, -1.4531521
        %v5830 = vadd.f32 %v5798, -1.4531521
        %v5831 = vadd.f32 %v5799, -1.4531521
        %v5832 = vadd.f32 %v5800, -1.4531521
        %v5833 = vadd.f32 %v5801, -1.4531521
        %v5834 = vadd.f32 %v5802, -1.4531521
        %v5835 = vadd.f32 %v5803, -1.4531521
        %v5836 = vadd.f32 %v5804, -1.4531521
        %v5837 = vadd.f32 %v5805, -1.4531521
        %v5838 = vadd.f32 %v5806, -1.4531521
        %v5839 = vadd.f32 %v5807, -1.4531521
        %v5840 = vmul.f32 %v5808, %v5713
        %v5841 = vmul.f32 %v5809, %v5715
        %v5842 = vmul.f32 %v5810, %v5717
        %v5843 = vmul.f32 %v5811, %v5719
        %v5844 = vmul.f32 %v5812, %v5721
        %v5845 = vmul.f32 %v5813, %v5723
        %v5846 = vmul.f32 %v5814, %v5725
        %v5847 = vmul.f32 %v5815, %v5727
        %v5848 = vmul.f32 %v5816, %v5729
        %v5849 = vmul.f32 %v5817, %v5731
        %v5850 = vmul.f32 %v5818, %v5733
        %v5851 = vmul.f32 %v5819, %v5735
        %v5852 = vmul.f32 %v5820, %v5737
        %v5853 = vmul.f32 %v5821, %v5739
        %v5854 = vmul.f32 %v5822, %v5741
        %v5855 = vmul.f32 %v5823, %v5743
        %v5856 = vmul.f32 %v5824, %v5745
        %v5857 = vmul.f32 %v5825, %v5747
        %v5858 = vmul.f32 %v5826, %v5749
        %v5859 = vmul.f32 %v5827, %v5751
        %v5860 = vmul.f32 %v5828, %v5753
        %v5861 = vmul.f32 %v5829, %v5755
        %v5862 = vmul.f32 %v5830, %v5757
        %v5863 = vmul.f32 %v5831, %v5759
        %v5864 = vmul.f32 %v5832, %v5761
        %v5865 = vmul.f32 %v5833, %v5763
        %v5866 = vmul.f32 %v5834, %v5765
        %v5867 = vmul.f32 %v5835, %v5767
        %v5868 = vmul.f32 %v5836, %v5769
        %v5869 = vmul.f32 %v5837, %v5771
        %v5870 = vmul.f32 %v5838, %v5773
        %v5871 = vmul.f32 %v5839, %v5775
        %v5872 = vadd.f32 %v5840, 1.4214138
        %v5873 = vadd.f32 %v5841, 1.4214138
        %v5874 = vadd.f32 %v5842, 1.4214138
        %v5875 = vadd.f32 %v5843, 1.4214138
        %v5876 = vadd.f32 %v5844, 1.4214138
        %v5877 = vadd.f32 %v5845, 1.4214138
        %v5878 = vadd.f32 %v5846, 1.4214138
        %v5879 = vadd.f32 %v5847, 1.4214138
        %v5880 = vadd.f32 %v5848, 1.4214138
        %v5881 = vadd.f32 %v5849, 1.4214138
        %v5882 = vadd.f32 %v5850, 1.4214138
        %v5883 = vadd.f32 %v5851, 1.4214138
        %v5884 = vadd.f32 %v5852, 1.4214138
        %v5885 = vadd.f32 %v5853, 1.4214138
        %v5886 = vadd.f32 %v5854, 1.4214138
        %v5887 = vadd.f32 %v5855, 1.4214138
        %v5888 = vadd.f32 %v5856, 1.4214138
        %v5889 = vadd.f32 %v5857, 1.4214138
        %v5890 = vadd.f32 %v5858, 1.4214138
        %v5891 = vadd.f32 %v5859, 1.4214138
        %v5892 = vadd.f32 %v5860, 1.4214138
        %v5893 = vadd.f32 %v5861, 1.4214138
        %v5894 = vadd.f32 %v5862, 1.4214138
        %v5895 = vadd.f32 %v5863, 1.4214138
        %v5896 = vadd.f32 %v5864, 1.4214138
        %v5897 = vadd.f32 %v5865, 1.4214138
        %v5898 = vadd.f32 %v5866, 1.4214138
        %v5899 = vadd.f32 %v5867, 1.4214138
        %v5900 = vadd.f32 %v5868, 1.4214138
        %v5901 = vadd.f32 %v5869, 1.4214138
        %v5902 = vadd.f32 %v5870, 1.4214138
        %v5903 = vadd.f32 %v5871, 1.4214138
        %v5904 = vmul.f32 %v5872, %v5713
        %v5905 = vmul.f32 %v5873, %v5715
        %v5906 = vmul.f32 %v5874, %v5717
        %v5907 = vmul.f32 %v5875, %v5719
        %v5908 = vmul.f32 %v5876, %v5721
        %v5909 = vmul.f32 %v5877, %v5723
        %v5910 = vmul.f32 %v5878, %v5725
        %v5911 = vmul.f32 %v5879, %v5727
        %v5912 = vmul.f32 %v5880, %v5729
        %v5913 = vmul.f32 %v5881, %v5731
        %v5914 = vmul.f32 %v5882, %v5733
        %v5915 = vmul.f32 %v5883, %v5735
        %v5916 = vmul.f32 %v5884, %v5737
        %v5917 = vmul.f32 %v5885, %v5739
        %v5918 = vmul.f32 %v5886, %v5741
        %v5919 = vmul.f32 %v5887, %v5743
        %v5920 = vmul.f32 %v5888, %v5745
        %v5921 = vmul.f32 %v5889, %v5747
        %v5922 = vmul.f32 %v5890, %v5749
        %v5923 = vmul.f32 %v5891, %v5751
        %v5924 = vmul.f32 %v5892, %v5753
        %v5925 = vmul.f32 %v5893, %v5755
        %v5926 = vmul.f32 %v5894, %v5757
        %v5927 = vmul.f32 %v5895, %v5759
        %v5928 = vmul.f32 %v5896, %v5761
        %v5929 = vmul.f32 %v5897, %v5763
        %v5930 = vmul.f32 %v5898, %v5765
        %v5931 = vmul.f32 %v5899, %v5767
        %v5932 = vmul.f32 %v5900, %v5769
        %v5933 = vmul.f32 %v5901, %v5771
        %v5934 = vmul.f32 %v5902, %v5773
        %v5935 = vmul.f32 %v5903, %v5775
        %v5936 = vadd.f32 %v5904, -0.28449672
        %v5937 = vadd.f32 %v5905, -0.28449672
        %v5938 = vadd.f32 %v5906, -0.28449672
        %v5939 = vadd.f32 %v5907, -0.28449672
        %v5940 = vadd.f32 %v5908, -0.28449672
        %v5941 = vadd.f32 %v5909, -0.28449672
        %v5942 = vadd.f32 %v5910, -0.28449672
        %v5943 = vadd.f32 %v5911, -0.28449672
        %v5944 = vadd.f32 %v5912, -0.28449672
        %v5945 = vadd.f32 %v5913, -0.28449672
        %v5946 = vadd.f32 %v5914, -0.28449672
        %v5947 = vadd.f32 %v5915, -0.28449672
        %v5948 = vadd.f32 %v5916, -0.28449672
        %v5949 = vadd.f32 %v5917, -0.28449672
        %v5950 = vadd.f32 %v5918, -0.28449672
        %v5951 = vadd.f32 %v5919, -0.28449672
        %v5952 = vadd.f32 %v5920, -0.28449672
        %v5953 = vadd.f32 %v5921, -0.28449672
        %v5954 = vadd.f32 %v5922, -0.28449672
        %v5955 = vadd.f32 %v5923, -0.28449672
        %v5956 = vadd.f32 %v5924, -0.28449672
        %v5957 = vadd.f32 %v5925, -0.28449672
        %v5958 = vadd.f32 %v5926, -0.28449672
        %v5959 = vadd.f32 %v5927, -0.28449672
        %v5960 = vadd.f32 %v5928, -0.28449672
        %v5961 = vadd.f32 %v5929, -0.28449672
        %v5962 = vadd.f32 %v5930, -0.28449672
        %v5963 = vadd.f32 %v5931, -0.28449672
        %v5964 = vadd.f32 %v5932, -0.28449672
        %v5965 = vadd.f32 %v5933, -0.28449672
        %v5966 = vadd.f32 %v5934, -0.28449672
        %v5967 = vadd.f32 %v5935, -0.28449672
        %v5968 = vmul.f32 %v5936, %v5713
        %v5969 = vmul.f32 %v5937, %v5715
        %v5970 = vmul.f32 %v5938, %v5717
        %v5971 = vmul.f32 %v5939, %v5719
        %v5972 = vmul.f32 %v5940, %v5721
        %v5973 = vmul.f32 %v5941, %v5723
        %v5974 = vmul.f32 %v5942, %v5725
        %v5975 = vmul.f32 %v5943, %v5727
        %v5976 = vmul.f32 %v5944, %v5729
        %v5977 = vmul.f32 %v5945, %v5731
        %v5978 = vmul.f32 %v5946, %v5733
        %v5979 = vmul.f32 %v5947, %v5735
        %v5980 = vmul.f32 %v5948, %v5737
        %v5981 = vmul.f32 %v5949, %v5739
        %v5982 = vmul.f32 %v5950, %v5741
        %v5983 = vmul.f32 %v5951, %v5743
        %v5984 = vmul.f32 %v5952, %v5745
        %v5985 = vmul.f32 %v5953, %v5747
        %v5986 = vmul.f32 %v5954, %v5749
        %v5987 = vmul.f32 %v5955, %v5751
        %v5988 = vmul.f32 %v5956, %v5753
        %v5989 = vmul.f32 %v5957, %v5755
        %v5990 = vmul.f32 %v5958, %v5757
        %v5991 = vmul.f32 %v5959, %v5759
        %v5992 = vmul.f32 %v5960, %v5761
        %v5993 = vmul.f32 %v5961, %v5763
        %v5994 = vmul.f32 %v5962, %v5765
        %v5995 = vmul.f32 %v5963, %v5767
        %v5996 = vmul.f32 %v5964, %v5769
        %v5997 = vmul.f32 %v5965, %v5771
        %v5998 = vmul.f32 %v5966, %v5773
        %v5999 = vmul.f32 %v5967, %v5775
        %v6000 = vadd.f32 %v5968, 0.2548296
        %v6001 = vadd.f32 %v5969, 0.2548296
        %v6002 = vadd.f32 %v5970, 0.2548296
        %v6003 = vadd.f32 %v5971, 0.2548296
        %v6004 = vadd.f32 %v5972, 0.2548296
        %v6005 = vadd.f32 %v5973, 0.2548296
        %v6006 = vadd.f32 %v5974, 0.2548296
        %v6007 = vadd.f32 %v5975, 0.2548296
        %v6008 = vadd.f32 %v5976, 0.2548296
        %v6009 = vadd.f32 %v5977, 0.2548296
        %v6010 = vadd.f32 %v5978, 0.2548296
        %v6011 = vadd.f32 %v5979, 0.2548296
        %v6012 = vadd.f32 %v5980, 0.2548296
        %v6013 = vadd.f32 %v5981, 0.2548296
        %v6014 = vadd.f32 %v5982, 0.2548296
        %v6015 = vadd.f32 %v5983, 0.2548296
        %v6016 = vadd.f32 %v5984, 0.2548296
        %v6017 = vadd.f32 %v5985, 0.2548296
        %v6018 = vadd.f32 %v5986, 0.2548296
        %v6019 = vadd.f32 %v5987, 0.2548296
        %v6020 = vadd.f32 %v5988, 0.2548296
        %v6021 = vadd.f32 %v5989, 0.2548296
        %v6022 = vadd.f32 %v5990, 0.2548296
        %v6023 = vadd.f32 %v5991, 0.2548296
        %v6024 = vadd.f32 %v5992, 0.2548296
        %v6025 = vadd.f32 %v5993, 0.2548296
        %v6026 = vadd.f32 %v5994, 0.2548296
        %v6027 = vadd.f32 %v5995, 0.2548296
        %v6028 = vadd.f32 %v5996, 0.2548296
        %v6029 = vadd.f32 %v5997, 0.2548296
        %v6030 = vadd.f32 %v5998, 0.2548296
        %v6031 = vadd.f32 %v5999, 0.2548296
        %v6032 = vmul.f32 %v6000, %v5713
        %v6033 = vmul.f32 %v6001, %v5715
        %v6034 = vmul.f32 %v6002, %v5717
        %v6035 = vmul.f32 %v6003, %v5719
        %v6036 = vmul.f32 %v6004, %v5721
        %v6037 = vmul.f32 %v6005, %v5723
        %v6038 = vmul.f32 %v6006, %v5725
        %v6039 = vmul.f32 %v6007, %v5727
        %v6040 = vmul.f32 %v6008, %v5729
        %v6041 = vmul.f32 %v6009, %v5731
        %v6042 = vmul.f32 %v6010, %v5733
        %v6043 = vmul.f32 %v6011, %v5735
        %v6044 = vmul.f32 %v6012, %v5737
        %v6045 = vmul.f32 %v6013, %v5739
        %v6046 = vmul.f32 %v6014, %v5741
        %v6047 = vmul.f32 %v6015, %v5743
        %v6048 = vmul.f32 %v6016, %v5745
        %v6049 = vmul.f32 %v6017, %v5747
        %v6050 = vmul.f32 %v6018, %v5749
        %v6051 = vmul.f32 %v6019, %v5751
        %v6052 = vmul.f32 %v6020, %v5753
        %v6053 = vmul.f32 %v6021, %v5755
        %v6054 = vmul.f32 %v6022, %v5757
        %v6055 = vmul.f32 %v6023, %v5759
        %v6056 = vmul.f32 %v6024, %v5761
        %v6057 = vmul.f32 %v6025, %v5763
        %v6058 = vmul.f32 %v6026, %v5765
        %v6059 = vmul.f32 %v6027, %v5767
        %v6060 = vmul.f32 %v6028, %v5769
        %v6061 = vmul.f32 %v6029, %v5771
        %v6062 = vmul.f32 %v6030, %v5773
        %v6063 = vmul.f32 %v6031, %v5775
        %v6064 = vmul.f32 %v5616, %v5616
        %v6065 = vmul.f32 %v5617, %v5617
        %v6066 = vmul.f32 %v5618, %v5618
        %v6067 = vmul.f32 %v5619, %v5619
        %v6068 = vmul.f32 %v5620, %v5620
        %v6069 = vmul.f32 %v5621, %v5621
        %v6070 = vmul.f32 %v5622, %v5622
        %v6071 = vmul.f32 %v5623, %v5623
        %v6072 = vmul.f32 %v5624, %v5624
        %v6073 = vmul.f32 %v5625, %v5625
        %v6074 = vmul.f32 %v5626, %v5626
        %v6075 = vmul.f32 %v5627, %v5627
        %v6076 = vmul.f32 %v5628, %v5628
        %v6077 = vmul.f32 %v5629, %v5629
        %v6078 = vmul.f32 %v5630, %v5630
        %v6079 = vmul.f32 %v5631, %v5631
        %v6080 = vmul.f32 %v5632, %v5632
        %v6081 = vmul.f32 %v5633, %v5633
        %v6082 = vmul.f32 %v5634, %v5634
        %v6083 = vmul.f32 %v5635, %v5635
        %v6084 = vmul.f32 %v5636, %v5636
        %v6085 = vmul.f32 %v5637, %v5637
        %v6086 = vmul.f32 %v5638, %v5638
        %v6087 = vmul.f32 %v5639, %v5639
        %v6088 = vmul.f32 %v5640, %v5640
        %v6089 = vmul.f32 %v5641, %v5641
        %v6090 = vmul.f32 %v5642, %v5642
        %v6091 = vmul.f32 %v5643, %v5643
        %v6092 = vmul.f32 %v5644, %v5644
        %v6093 = vmul.f32 %v5645, %v5645
        %v6094 = vmul.f32 %v5646, %v5646
        %v6095 = vmul.f32 %v5647, %v5647
        %v6096 = vsub.f32 0.0, %v6064
        %v6097 = vsub.f32 0.0, %v6065
        %v6098 = vsub.f32 0.0, %v6066
        %v6099 = vsub.f32 0.0, %v6067
        %v6100 = vsub.f32 0.0, %v6068
        %v6101 = vsub.f32 0.0, %v6069
        %v6102 = vsub.f32 0.0, %v6070
        %v6103 = vsub.f32 0.0, %v6071
        %v6104 = vsub.f32 0.0, %v6072
        %v6105 = vsub.f32 0.0, %v6073
        %v6106 = vsub.f32 0.0, %v6074
        %v6107 = vsub.f32 0.0, %v6075
        %v6108 = vsub.f32 0.0, %v6076
        %v6109 = vsub.f32 0.0, %v6077
        %v6110 = vsub.f32 0.0, %v6078
        %v6111 = vsub.f32 0.0, %v6079
        %v6112 = vsub.f32 0.0, %v6080
        %v6113 = vsub.f32 0.0, %v6081
        %v6114 = vsub.f32 0.0, %v6082
        %v6115 = vsub.f32 0.0, %v6083
        %v6116 = vsub.f32 0.0, %v6084
        %v6117 = vsub.f32 0.0, %v6085
        %v6118 = vsub.f32 0.0, %v6086
        %v6119 = vsub.f32 0.0, %v6087
        %v6120 = vsub.f32 0.0, %v6088
        %v6121 = vsub.f32 0.0, %v6089
        %v6122 = vsub.f32 0.0, %v6090
        %v6123 = vsub.f32 0.0, %v6091
        %v6124 = vsub.f32 0.0, %v6092
        %v6125 = vsub.f32 0.0, %v6093
        %v6126 = vsub.f32 0.0, %v6094
        %v6127 = vsub.f32 0.0, %v6095
        %v6128 = vmul.f32 %v6096, 1.442695
        %v6129 = vpow.pop %v6128
        %v6130 = vmul.f32 %v6097, 1.442695
        %v6131 = vpow.pop %v6130
        %v6132 = vmul.f32 %v6098, 1.442695
        %v6133 = vpow.pop %v6132
        %v6134 = vmul.f32 %v6099, 1.442695
        %v6135 = vpow.pop %v6134
        %v6136 = vmul.f32 %v6100, 1.442695
        %v6137 = vpow.pop %v6136
        %v6138 = vmul.f32 %v6101, 1.442695
        %v6139 = vpow.pop %v6138
        %v6140 = vmul.f32 %v6102, 1.442695
        %v6141 = vpow.pop %v6140
        %v6142 = vmul.f32 %v6103, 1.442695
        %v6143 = vpow.pop %v6142
        %v6144 = vmul.f32 %v6104, 1.442695
        %v6145 = vpow.pop %v6144
        %v6146 = vmul.f32 %v6105, 1.442695
        %v6147 = vpow.pop %v6146
        %v6148 = vmul.f32 %v6106, 1.442695
        %v6149 = vpow.pop %v6148
        %v6150 = vmul.f32 %v6107, 1.442695
        %v6151 = vpow.pop %v6150
        %v6152 = vmul.f32 %v6108, 1.442695
        %v6153 = vpow.pop %v6152
        %v6154 = vmul.f32 %v6109, 1.442695
        %v6155 = vpow.pop %v6154
        %v6156 = vmul.f32 %v6110, 1.442695
        %v6157 = vpow.pop %v6156
        %v6158 = vmul.f32 %v6111, 1.442695
        %v6159 = vpow.pop %v6158
        %v6160 = vmul.f32 %v6112, 1.442695
        %v6161 = vpow.pop %v6160
        %v6162 = vmul.f32 %v6113, 1.442695
        %v6163 = vpow.pop %v6162
        %v6164 = vmul.f32 %v6114, 1.442695
        %v6165 = vpow.pop %v6164
        %v6166 = vmul.f32 %v6115, 1.442695
        %v6167 = vpow.pop %v6166
        %v6168 = vmul.f32 %v6116, 1.442695
        %v6169 = vpow.pop %v6168
        %v6170 = vmul.f32 %v6117, 1.442695
        %v6171 = vpow.pop %v6170
        %v6172 = vmul.f32 %v6118, 1.442695
        %v6173 = vpow.pop %v6172
        %v6174 = vmul.f32 %v6119, 1.442695
        %v6175 = vpow.pop %v6174
        %v6176 = vmul.f32 %v6120, 1.442695
        %v6177 = vpow.pop %v6176
        %v6178 = vmul.f32 %v6121, 1.442695
        %v6179 = vpow.pop %v6178
        %v6180 = vmul.f32 %v6122, 1.442695
        %v6181 = vpow.pop %v6180
        %v6182 = vmul.f32 %v6123, 1.442695
        %v6183 = vpow.pop %v6182
        %v6184 = vmul.f32 %v6124, 1.442695
        %v6185 = vpow.pop %v6184
        %v6186 = vmul.f32 %v6125, 1.442695
        %v6187 = vpow.pop %v6186
        %v6188 = vmul.f32 %v6126, 1.442695
        %v6189 = vpow.pop %v6188
        %v6190 = vmul.f32 %v6127, 1.442695
        %v6191 = vpow.pop %v6190
        %v6192 = vmul.f32 %v6032, %v6129
        %v6193 = vmul.f32 %v6033, %v6131
        %v6194 = vmul.f32 %v6034, %v6133
        %v6195 = vmul.f32 %v6035, %v6135
        %v6196 = vmul.f32 %v6036, %v6137
        %v6197 = vmul.f32 %v6037, %v6139
        %v6198 = vmul.f32 %v6038, %v6141
        %v6199 = vmul.f32 %v6039, %v6143
        %v6200 = vmul.f32 %v6040, %v6145
        %v6201 = vmul.f32 %v6041, %v6147
        %v6202 = vmul.f32 %v6042, %v6149
        %v6203 = vmul.f32 %v6043, %v6151
        %v6204 = vmul.f32 %v6044, %v6153
        %v6205 = vmul.f32 %v6045, %v6155
        %v6206 = vmul.f32 %v6046, %v6157
        %v6207 = vmul.f32 %v6047, %v6159
        %v6208 = vmul.f32 %v6048, %v6161
        %v6209 = vmul.f32 %v6049, %v6163
        %v6210 = vmul.f32 %v6050, %v6165
        %v6211 = vmul.f32 %v6051, %v6167
        %v6212 = vmul.f32 %v6052, %v6169
        %v6213 = vmul.f32 %v6053, %v6171
        %v6214 = vmul.f32 %v6054, %v6173
        %v6215 = vmul.f32 %v6055, %v6175
        %v6216 = vmul.f32 %v6056, %v6177
        %v6217 = vmul.f32 %v6057, %v6179
        %v6218 = vmul.f32 %v6058, %v6181
        %v6219 = vmul.f32 %v6059, %v6183
        %v6220 = vmul.f32 %v6060, %v6185
        %v6221 = vmul.f32 %v6061, %v6187
        %v6222 = vmul.f32 %v6062, %v6189
        %v6223 = vmul.f32 %v6063, %v6191
        %v6224 = vsub.f32 1.0, %v6192
        %v6225 = vsub.f32 1.0, %v6193
        %v6226 = vsub.f32 1.0, %v6194
        %v6227 = vsub.f32 1.0, %v6195
        %v6228 = vsub.f32 1.0, %v6196
        %v6229 = vsub.f32 1.0, %v6197
        %v6230 = vsub.f32 1.0, %v6198
        %v6231 = vsub.f32 1.0, %v6199
        %v6232 = vsub.f32 1.0, %v6200
        %v6233 = vsub.f32 1.0, %v6201
        %v6234 = vsub.f32 1.0, %v6202
        %v6235 = vsub.f32 1.0, %v6203
        %v6236 = vsub.f32 1.0, %v6204
        %v6237 = vsub.f32 1.0, %v6205
        %v6238 = vsub.f32 1.0, %v6206
        %v6239 = vsub.f32 1.0, %v6207
        %v6240 = vsub.f32 1.0, %v6208
        %v6241 = vsub.f32 1.0, %v6209
        %v6242 = vsub.f32 1.0, %v6210
        %v6243 = vsub.f32 1.0, %v6211
        %v6244 = vsub.f32 1.0, %v6212
        %v6245 = vsub.f32 1.0, %v6213
        %v6246 = vsub.f32 1.0, %v6214
        %v6247 = vsub.f32 1.0, %v6215
        %v6248 = vsub.f32 1.0, %v6216
        %v6249 = vsub.f32 1.0, %v6217
        %v6250 = vsub.f32 1.0, %v6218
        %v6251 = vsub.f32 1.0, %v6219
        %v6252 = vsub.f32 1.0, %v6220
        %v6253 = vsub.f32 1.0, %v6221
        %v6254 = vsub.f32 1.0, %v6222
        %v6255 = vsub.f32 1.0, %v6223
        %vm6256 = vcmp.lt.f32.partialorder %v5584, 0.0
        %vm6257 = vcmp.lt.f32.partialorder %v5585, 0.0
        %vm6258 = vcmp.lt.f32.partialorder %v5586, 0.0
        %vm6259 = vcmp.lt.f32.partialorder %v5587, 0.0
        %vm6260 = vcmp.lt.f32.partialorder %v5588, 0.0
        %vm6261 = vcmp.lt.f32.partialorder %v5589, 0.0
        %vm6262 = vcmp.lt.f32.partialorder %v5590, 0.0
        %vm6263 = vcmp.lt.f32.partialorder %v5591, 0.0
        %vm6264 = vcmp.lt.f32.partialorder %v5592, 0.0
        %vm6265 = vcmp.lt.f32.partialorder %v5593, 0.0
        %vm6266 = vcmp.lt.f32.partialorder %v5594, 0.0
        %vm6267 = vcmp.lt.f32.partialorder %v5595, 0.0
        %vm6268 = vcmp.lt.f32.partialorder %v5596, 0.0
        %vm6269 = vcmp.lt.f32.partialorder %v5597, 0.0
        %vm6270 = vcmp.lt.f32.partialorder %v5598, 0.0
        %vm6271 = vcmp.lt.f32.partialorder %v5599, 0.0
        %vm6272 = vcmp.lt.f32.partialorder %v5600, 0.0
        %vm6273 = vcmp.lt.f32.partialorder %v5601, 0.0
        %vm6274 = vcmp.lt.f32.partialorder %v5602, 0.0
        %vm6275 = vcmp.lt.f32.partialorder %v5603, 0.0
        %vm6276 = vcmp.lt.f32.partialorder %v5604, 0.0
        %vm6277 = vcmp.lt.f32.partialorder %v5605, 0.0
        %vm6278 = vcmp.lt.f32.partialorder %v5606, 0.0
        %vm6279 = vcmp.lt.f32.partialorder %v5607, 0.0
        %vm6280 = vcmp.lt.f32.partialorder %v5608, 0.0
        %vm6281 = vcmp.lt.f32.partialorder %v5609, 0.0
        %vm6282 = vcmp.lt.f32.partialorder %v5610, 0.0
        %vm6283 = vcmp.lt.f32.partialorder %v5611, 0.0
        %vm6284 = vcmp.lt.f32.partialorder %v5612, 0.0
        %vm6285 = vcmp.lt.f32.partialorder %v5613, 0.0
        %vm6286 = vcmp.lt.f32.partialorder %v5614, 0.0
        %vm6287 = vcmp.lt.f32.partialorder %v5615, 0.0
        %v6288 = vsub.f32 0.0, %v6224
        %v6289 = vsub.f32 0.0, %v6225
        %v6290 = vsub.f32 0.0, %v6226
        %v6291 = vsub.f32 0.0, %v6227
        %v6292 = vsub.f32 0.0, %v6228
        %v6293 = vsub.f32 0.0, %v6229
        %v6294 = vsub.f32 0.0, %v6230
        %v6295 = vsub.f32 0.0, %v6231
        %v6296 = vsub.f32 0.0, %v6232
        %v6297 = vsub.f32 0.0, %v6233
        %v6298 = vsub.f32 0.0, %v6234
        %v6299 = vsub.f32 0.0, %v6235
        %v6300 = vsub.f32 0.0, %v6236
        %v6301 = vsub.f32 0.0, %v6237
        %v6302 = vsub.f32 0.0, %v6238
        %v6303 = vsub.f32 0.0, %v6239
        %v6304 = vsub.f32 0.0, %v6240
        %v6305 = vsub.f32 0.0, %v6241
        %v6306 = vsub.f32 0.0, %v6242
        %v6307 = vsub.f32 0.0, %v6243
        %v6308 = vsub.f32 0.0, %v6244
        %v6309 = vsub.f32 0.0, %v6245
        %v6310 = vsub.f32 0.0, %v6246
        %v6311 = vsub.f32 0.0, %v6247
        %v6312 = vsub.f32 0.0, %v6248
        %v6313 = vsub.f32 0.0, %v6249
        %v6314 = vsub.f32 0.0, %v6250
        %v6315 = vsub.f32 0.0, %v6251
        %v6316 = vsub.f32 0.0, %v6252
        %v6317 = vsub.f32 0.0, %v6253
        %v6318 = vsub.f32 0.0, %v6254
        %v6319 = vsub.f32 0.0, %v6255
        %v6320 = vsel %vm6256, %v6288, %v6224
        %v6321 = vsel %vm6257, %v6289, %v6225
        %v6322 = vsel %vm6258, %v6290, %v6226
        %v6323 = vsel %vm6259, %v6291, %v6227
        %v6324 = vsel %vm6260, %v6292, %v6228
        %v6325 = vsel %vm6261, %v6293, %v6229
        %v6326 = vsel %vm6262, %v6294, %v6230
        %v6327 = vsel %vm6263, %v6295, %v6231
        %v6328 = vsel %vm6264, %v6296, %v6232
        %v6329 = vsel %vm6265, %v6297, %v6233
        %v6330 = vsel %vm6266, %v6298, %v6234
        %v6331 = vsel %vm6267, %v6299, %v6235
        %v6332 = vsel %vm6268, %v6300, %v6236
        %v6333 = vsel %vm6269, %v6301, %v6237
        %v6334 = vsel %vm6270, %v6302, %v6238
        %v6335 = vsel %vm6271, %v6303, %v6239
        %v6336 = vsel %vm6272, %v6304, %v6240
        %v6337 = vsel %vm6273, %v6305, %v6241
        %v6338 = vsel %vm6274, %v6306, %v6242
        %v6339 = vsel %vm6275, %v6307, %v6243
        %v6340 = vsel %vm6276, %v6308, %v6244
        %v6341 = vsel %vm6277, %v6309, %v6245
        %v6342 = vsel %vm6278, %v6310, %v6246
        %v6343 = vsel %vm6279, %v6311, %v6247
        %v6344 = vsel %vm6280, %v6312, %v6248
        %v6345 = vsel %vm6281, %v6313, %v6249
        %v6346 = vsel %vm6282, %v6314, %v6250
        %v6347 = vsel %vm6283, %v6315, %v6251
        %v6348 = vsel %vm6284, %v6316, %v6252
        %v6349 = vsel %vm6285, %v6317, %v6253
        %v6350 = vsel %vm6286, %v6318, %v6254
        %v6351 = vsel %vm6287, %v6319, %v6255
        %v6352 = vadd.f32 %v6320, 1.0
        %v6353 = vadd.f32 %v6321, 1.0
        %v6354 = vadd.f32 %v6322, 1.0
        %v6355 = vadd.f32 %v6323, 1.0
        %v6356 = vadd.f32 %v6324, 1.0
        %v6357 = vadd.f32 %v6325, 1.0
        %v6358 = vadd.f32 %v6326, 1.0
        %v6359 = vadd.f32 %v6327, 1.0
        %v6360 = vadd.f32 %v6328, 1.0
        %v6361 = vadd.f32 %v6329, 1.0
        %v6362 = vadd.f32 %v6330, 1.0
        %v6363 = vadd.f32 %v6331, 1.0
        %v6364 = vadd.f32 %v6332, 1.0
        %v6365 = vadd.f32 %v6333, 1.0
        %v6366 = vadd.f32 %v6334, 1.0
        %v6367 = vadd.f32 %v6335, 1.0
        %v6368 = vadd.f32 %v6336, 1.0
        %v6369 = vadd.f32 %v6337, 1.0
        %v6370 = vadd.f32 %v6338, 1.0
        %v6371 = vadd.f32 %v6339, 1.0
        %v6372 = vadd.f32 %v6340, 1.0
        %v6373 = vadd.f32 %v6341, 1.0
        %v6374 = vadd.f32 %v6342, 1.0
        %v6375 = vadd.f32 %v6343, 1.0
        %v6376 = vadd.f32 %v6344, 1.0
        %v6377 = vadd.f32 %v6345, 1.0
        %v6378 = vadd.f32 %v6346, 1.0
        %v6379 = vadd.f32 %v6347, 1.0
        %v6380 = vadd.f32 %v6348, 1.0
        %v6381 = vadd.f32 %v6349, 1.0
        %v6382 = vadd.f32 %v6350, 1.0
        %v6383 = vadd.f32 %v6351, 1.0
        %v6384 = vmul.f32 %v5552, %v6352
        %v6385 = vmul.f32 %v5553, %v6353
        %v6386 = vmul.f32 %v5554, %v6354
        %v6387 = vmul.f32 %v5555, %v6355
        %v6388 = vmul.f32 %v5556, %v6356
        %v6389 = vmul.f32 %v5557, %v6357
        %v6390 = vmul.f32 %v5558, %v6358
        %v6391 = vmul.f32 %v5559, %v6359
        %v6392 = vmul.f32 %v5560, %v6360
        %v6393 = vmul.f32 %v5561, %v6361
        %v6394 = vmul.f32 %v5562, %v6362
        %v6395 = vmul.f32 %v5563, %v6363
        %v6396 = vmul.f32 %v5564, %v6364
        %v6397 = vmul.f32 %v5565, %v6365
        %v6398 = vmul.f32 %v5566, %v6366
        %v6399 = vmul.f32 %v5567, %v6367
        %v6400 = vmul.f32 %v5568, %v6368
        %v6401 = vmul.f32 %v5569, %v6369
        %v6402 = vmul.f32 %v5570, %v6370
        %v6403 = vmul.f32 %v5571, %v6371
        %v6404 = vmul.f32 %v5572, %v6372
        %v6405 = vmul.f32 %v5573, %v6373
        %v6406 = vmul.f32 %v5574, %v6374
        %v6407 = vmul.f32 %v5575, %v6375
        %v6408 = vmul.f32 %v5576, %v6376
        %v6409 = vmul.f32 %v5577, %v6377
        %v6410 = vmul.f32 %v5578, %v6378
        %v6411 = vmul.f32 %v5579, %v6379
        %v6412 = vmul.f32 %v5580, %v6380
        %v6413 = vmul.f32 %v5581, %v6381
        %v6414 = vmul.f32 %v5582, %v6382
        %v6415 = vmul.f32 %v5583, %v6383
        %vm6416 = vcmask 261120
        %6417 = vst.msk [vmem:[%s209] sm:$0xff] %vm6416, %v6384
        %6418 = vst.msk [vmem:[%s209 + $0x8] sm:$0xff] %vm6416, %v6385
        %6419 = vst.msk [vmem:[%s209 + $0x10] sm:$0xff] %vm6416, %v6386
        %6420 = vst.msk [vmem:[%s209 + $0x18] sm:$0xff] %vm6416, %v6387
        %6421 = vst.msk [vmem:[%s209 + $0x20] sm:$0xff] %vm6416, %v6388
        %6422 = vst.msk [vmem:[%s209 + $0x28] sm:$0xff] %vm6416, %v6389
        %6423 = vst.msk [vmem:[%s209 + $0x30] sm:$0xff] %vm6416, %v6390
        %6424 = vst.msk [vmem:[%s209 + $0x38] sm:$0xff] %vm6416, %v6391
        %6425 = vst.msk [vmem:[%s209 + $0x40] sm:$0xff] %vm6416, %v6392
        %6426 = vst.msk [vmem:[%s209 + $0x48] sm:$0xff] %vm6416, %v6393
        %6427 = vst.msk [vmem:[%s209 + $0x50] sm:$0xff] %vm6416, %v6394
        %6428 = vst.msk [vmem:[%s209 + $0x58] sm:$0xff] %vm6416, %v6395
        %6429 = vst.msk [vmem:[%s209 + $0x60] sm:$0xff] %vm6416, %v6396
        %6430 = vst.msk [vmem:[%s209 + $0x68] sm:$0xff] %vm6416, %v6397
        %6431 = vst.msk [vmem:[%s209 + $0x70] sm:$0xff] %vm6416, %v6398
        %6432 = vst.msk [vmem:[%s209 + $0x78] sm:$0xff] %vm6416, %v6399
        %6433 = vst.msk [vmem:[%s209 + $0x80] sm:$0xff] %vm6416, %v6400
        %6434 = vst.msk [vmem:[%s209 + $0x88] sm:$0xff] %vm6416, %v6401
        %6435 = vst.msk [vmem:[%s209 + $0x90] sm:$0xff] %vm6416, %v6402
        %6436 = vst.msk [vmem:[%s209 + $0x98] sm:$0xff] %vm6416, %v6403
        %6437 = vst.msk [vmem:[%s209 + $0xa0] sm:$0xff] %vm6416, %v6404
        %6438 = vst.msk [vmem:[%s209 + $0xa8] sm:$0xff] %vm6416, %v6405
        %6439 = vst.msk [vmem:[%s209 + $0xb0] sm:$0xff] %vm6416, %v6406
        %6440 = vst.msk [vmem:[%s209 + $0xb8] sm:$0xff] %vm6416, %v6407
        %6441 = vst.msk [vmem:[%s209 + $0xc0] sm:$0xff] %vm6416, %v6408
        %6442 = vst.msk [vmem:[%s209 + $0xc8] sm:$0xff] %vm6416, %v6409
        %6443 = vst.msk [vmem:[%s209 + $0xd0] sm:$0xff] %vm6416, %v6410
        %6444 = vst.msk [vmem:[%s209 + $0xd8] sm:$0xff] %vm6416, %v6411
        %6445 = vst.msk [vmem:[%s209 + $0xe0] sm:$0xff] %vm6416, %v6412
        %6446 = vst.msk [vmem:[%s209 + $0xe8] sm:$0xff] %vm6416, %v6413
        %6447 = vst.msk [vmem:[%s209 + $0xf0] sm:$0xff] %vm6416, %v6414
        %6448 = vst.msk [vmem:[%s209 + $0xf8] sm:$0xff] %vm6416, %v6415
        %s6449 = sand.u32 %s119, 1
        %s6450 = scalar_lea.sflag [#allocation3], %s6449
        %s6451 = sand.u32 %s119, 1
        %s6452 = smul.addr %s6451, 256
        %s6453 = scalar_lea.vmem [#allocation2], %s6452
        // Predicated region
        $region33: #{tpu_custom_call.1} parent=31 // pred_check
          %p6454 = pneg %p129
        $region34: #{tpu_custom_call.1} parent=31 // pred_check_branch
          %6456 = sbr.rel (%p6454) target = $region36
        $region35: #{tpu_custom_call.1} parent=31 // pred_region
          %s6458 = ssub.s32 4096, 4096
          %6459 = vsyncadd %s6450, %s6458
          %s6460 = smul.addr %s21, 32
          %s6461 = sadd.s32 %s22, %s6460
          %s6462 = smul.addr %s6461, 128
          %s6463 = scalar_lea.hbm %s3, %s6462
          %s6464 = sshll.u32 %s6453, 4
          %s6465 = int_to_ptr.vmem [resolvable:$true] %s6464
          %6470 = dma.vmem_to_hbm [thread:$0]  %s6465, 4096, %s6463, %s6450, 128, 128, 8
        $region36: #{tpu_custom_call.1} parent=31 // pred_fallthru
          _
      $region32: #{tpu_custom_call.1} parent=5 // pred_fallthru
        _
      %p6471 = scmp.le.s32.totalorder 2, %s12
      // Predicated region
      $region37: #{tpu_custom_call.1} parent=5 // pred_check
        %p6472 = pneg %p6471
      $region38: #{tpu_custom_call.1} parent=5 // pred_check_branch
        %6474 = sbr.rel (%p6472) target = $region40
      $region39: #{tpu_custom_call.1} parent=5 // pred_region
        %s6475 = ssub.s32 %s12, 2
        // Predicated region
        $region41: #{tpu_custom_call.1} parent=39 // pred_check
          %p6476 = pneg %p135
        $region42: #{tpu_custom_call.1} parent=39 // pred_check_branch
          %6478 = sbr.rel (%p6476) target = $region44
        $region43: #{tpu_custom_call.1} parent=39 // pred_region
          %s6479 = sand.u32 %s120, 1
          %s6480 = scalar_lea.sflag [#allocation3], %s6479
          %s6481 = sand.u32 %s120, 1
          %s6482 = smul.addr %s6481, 256
          %s6483 = scalar_lea.vmem [#allocation2], %s6482
          %6484 = dma.done %s6480, 4096
        $region44: #{tpu_custom_call.1} parent=39 // pred_fallthru
          _
      $region40: #{tpu_custom_call.1} parent=5 // pred_fallthru
        _
    $region6: #{tpu_custom_call.1} parent=1 // loop_footer
      %s16 = sadd.s32 1, %s12
    $region7: #{tpu_custom_call.1} parent=1 // loop_footer_branch
      %11 = sbr.rel target = $region3
    $region8: #{tpu_custom_call.1} parent=1 // loop_exit
      _
    %6485 = vsyncpa [#allocation3], 1
    %s6486 = scalar_lea.sflag [#allocation3], 1
    %6487 = vsyncpa %s6486, 1

</llo_original>
